<compile_context>
chip_gen: v5e
topology: v5e:2x2
jax: 0.10.0
libtpu: 0.0.40
codegen_flags: <defaults>
</compile_context>

<pallas_src>
import jax
import jax.numpy as jnp
from jax import lax
from jax.experimental import pallas as pl
from jax.experimental.pallas import tpu as pltpu


# ----------------------------- Pallas kernels ------------------------------

def _conv_pool_kernel(xs_ref, w_ref, b_ref, o_ref):
    """Fused conv3x3(pad=1) + bias + ReLU + 2x2 maxpool, channel-first.

    xs_ref: (4, K, tm) bf16  -- im2col^T for the 4 positions of each 2x2 pool
                                window; K = 9*Cin, tm = tile of M = Ho*Wo*B.
    w_ref : (Cout, K)  bf16  -- conv weight, K ordered (ky, kx, cin).
    b_ref : (Cout, 1)  f32
    o_ref : (Cout, tm) f32   -- relu(maxpool(conv)) for this tile (lane-dense).
    """
    w = w_ref[...]
    acc = jnp.dot(w, xs_ref[0], preferred_element_type=jnp.float32)
    for p in range(1, 4):  # static unroll over the 4 pool-window positions
        acc = jnp.maximum(acc, jnp.dot(w, xs_ref[p],
                                       preferred_element_type=jnp.float32))
    # relu(max_p(y_p) + b) == max_p(relu(y_p + b))  (bias const across p, relu monotone)
    o_ref[...] = jnp.maximum(acc + b_ref[...], 0.0)


def _mlp_kernel(x_ref, w3_ref, b3_ref, w4_ref, b4_ref, o_ref):
    """Fused fc1 + ReLU + fc2 in transposed (features, batch) layout.

    x_ref: (4096, B) bf16; w3_ref: (128, 4096) bf16; b3_ref: (128, 1) f32;
    w4_ref: (10, 128) bf16; b4_ref: (10, 1) f32; o_ref: (10, B) f32.
    """
    h = jnp.dot(w3_ref[...], x_ref[...], preferred_element_type=jnp.float32)
    h = jnp.maximum(h + b3_ref[...], 0.0).astype(jnp.bfloat16)          # (128, B)
    o_ref[...] = jnp.dot(w4_ref[...], h,
                         preferred_element_type=jnp.float32) + b4_ref[...]


# --------------------------- pallas wrappers ---------------------------

def _pick_tile_m(M):
    """Largest lane-dense (multiple-of-128) tile of M giving >=2 grid steps."""
    for t in (512, 256, 128):
        if M % t == 0 and M // t >= 2:
            return t
    return M  # small problem: single block


def conv3x3_relu_pool(x, w_t, b_col):
    """x: (Cin, H, W, B) f32; w_t: (Cout, 9*Cin) bf16; b_col: (Cout, 1) f32.

    Returns relu(maxpool2x2(conv3x3_pad1(x) + b)) as (Cout, H//2, W//2, B) f32.
    """
    Cin, H, W, B = x.shape
    Cout, K = w_t.shape
    Ho, Wo = H // 2, W // 2
    M = Ho * Wo * B

    # im2col^T, built with static strided slices (XLA glue, no gathers).
    xp = jnp.pad(x, ((0, 0), (1, 1), (1, 1), (0, 0)))        # (Cin, H+2, W+2, B)
    planes = []
    for py in (0, 1):
        for px in (0, 1):
            taps = [xp[:, py + ky: py + ky + H: 2, px + kx: px + kx + W: 2, :]
                    for ky in range(3) for kx in range(3)]    # each (Cin,Ho,Wo,B)
            planes.append(jnp.stack(taps, axis=0).reshape(K, M))
    xs = jnp.stack(planes, axis=0).astype(jnp.bfloat16)       # (4, K, M)

    tm = _pick_tile_m(M)
    out = pl.pallas_call(
        _conv_pool_kernel,
        out_shape=jax.ShapeDtypeStruct((Cout, M), jnp.float32),
        grid_spec=pltpu.PrefetchScalarGridSpec(
            num_scalar_prefetch=0,
            grid=(M // tm,),
            in_specs=[pl.BlockSpec((4, K, tm), lambda i: (0, 0, i)),
                      pl.BlockSpec((Cout, K), lambda i: (0, 0)),
                      pl.BlockSpec((Cout, 1), lambda i: (0, 0))],
            out_specs=pl.BlockSpec((Cout, tm), lambda i: (0, i))),
        compiler_params=pltpu.CompilerParams(
            dimension_semantics=("parallel",),
            vmem_limit_bytes=32 * 1024 * 1024),
    )(xs, w_t, b_col)
    return out.reshape(Cout, Ho, Wo, B)


def mlp_head(x_t, w3, b3, w4, b4):
    """x_t: (4096, B) f32 (features ordered c,h,w to match torch .view(B,-1))."""
    B = x_t.shape[1]
    vmem = lambda: pl.BlockSpec(memory_space=pltpu.MemorySpace.VMEM)
    return pl.pallas_call(
        _mlp_kernel,
        out_shape=jax.ShapeDtypeStruct((w4.shape[0], B), jnp.float32),
        in_specs=[vmem() for _ in range(5)],
        out_specs=vmem(),
        compiler_params=pltpu.CompilerParams(
            vmem_limit_bytes=32 * 1024 * 1024),
    )(x_t.astype(jnp.bfloat16), w3, b3, w4, b4)


# ------------------------------ parameters -------------------------------

def init_params():
    """Deterministic params in PyTorch layouts (conv: OIHW, linear: (out, in))."""
    ks = jax.random.split(jax.random.PRNGKey(42), 8)
    return {
        "w1": jax.random.normal(ks[0], (32, 3, 3, 3), jnp.float32) * 0.05,
        "b1": jax.random.normal(ks[1], (32,), jnp.float32) * 0.05,
        "w2": jax.random.normal(ks[2], (64, 32, 3, 3), jnp.float32) * 0.05,
        "b2": jax.random.normal(ks[3], (64,), jnp.float32) * 0.05,
        "w3": jax.random.normal(ks[4], (128, 64 * 8 * 8), jnp.float32) * 0.02,
        "b3": jax.random.normal(ks[5], (128,), jnp.float32) * 0.02,
        "w4": jax.random.normal(ks[6], (10, 128), jnp.float32) * 0.02,
        "b4": jax.random.normal(ks[7], (10,), jnp.float32) * 0.02,
    }


def convert_params(p):
    """One-time (outside jit) conversion to kernel layouts + bf16 MXU inputs."""
    return {
        # conv: OIHW -> (Cout, 9*Cin) with K ordered (ky, kx, cin)
        "w1": jnp.transpose(p["w1"], (0, 2, 3, 1)).reshape(32, 27).astype(jnp.bfloat16),
        "b1": p["b1"].reshape(32, 1).astype(jnp.float32),
        "w2": jnp.transpose(p["w2"], (0, 2, 3, 1)).reshape(64, 288).astype(jnp.bfloat16),
        "b2": p["b2"].reshape(64, 1).astype(jnp.float32),
        # fc runs as W @ x^T, so torch's (out, in) layout is used as-is.
        "w3": p["w3"].astype(jnp.bfloat16),
        "b3": p["b3"].reshape(128, 1).astype(jnp.float32),
        "w4": p["w4"].astype(jnp.bfloat16),
        "b4": p["b4"].reshape(10, 1).astype(jnp.float32),
    }


# ------------------------------ model forward -------------------------------

def simple_cnn_forward(x_nchw, kp):
    # Boundary conversion: NCHW -> (C, H, W, B).  Keeping batch innermost makes
    # every later layout change (incl. torch's .view(B,-1) C,H,W flatten) a free
    # reshape — no per-forward activation transposes.
    x = jnp.transpose(x_nchw, (1, 2, 3, 0)).astype(jnp.float32)       # (3,32,32,B)
    B = x.shape[-1]
    y1 = conv3x3_relu_pool(x, kp["w1"], kp["b1"])                     # (32,16,16,B)
    y2 = conv3x3_relu_pool(y1, kp["w2"], kp["b2"])                    # (64, 8, 8,B)
    xt = y2.reshape(64 * 8 * 8, B)                                    # (4096,B) free
    out_t = mlp_head(xt, kp["w3"], kp["b3"], kp["w4"], kp["b4"])      # (10,B)
    return out_t.T                                                    # (B,10)


# --------------------------- pure-XLA reference ------------------------------

def _maxpool2_ref(y):  # y: (B, C, H, W)
    B, C, H, W = y.shape
    return y.reshape(B, C, H // 2, 2, W // 2, 2).max(axis=(3, 5))


def reference_forward(x_nchw, p):
    y = lax.conv_general_dilated(x_nchw, p["w1"], (1, 1), "SAME",
                                 dimension_numbers=("NCHW", "OIHW", "NCHW"))
    y = jnp.maximum(y + p["b1"][None, :, None, None], 0.0)
    y = _maxpool2_ref(y)
    y = lax.conv_general_dilated(y, p["w2"], (1, 1), "SAME",
                                 dimension_numbers=("NCHW", "OIHW", "NCHW"))
    y = jnp.maximum(y + p["b2"][None, :, None, None], 0.0)
    y = _maxpool2_ref(y)
    y = y.reshape(y.shape[0], -1)                                     # (B, 4096) C,H,W order
    y = jnp.maximum(y @ p["w3"].T + p["b3"], 0.0)
    return y @ p["w4"].T + p["b4"]


# ----------------------------------- main ------------------------------------

if __name__ == "__main__":
    key = jax.random.PRNGKey(0)
    # Spatial size implied by fc1 = Linear(64*8*8, 128): (B, 3, 32, 32) NCHW.
    x = jax.random.normal(key, (2, 3, 32, 32), dtype=jnp.float32)

    tparams = init_params()            # torch-layout params
    kparams = convert_params(tparams)  # kernel-layout params (converted once)

    fwd = jax.jit(simple_cnn_forward)
    logits = fwd(x, kparams)
    jax.block_until_ready(logits)

    assert logits.shape == (2, 10) and logits.dtype == jnp.float32

    # Correctness check against a pure-XLA f32 reference (bf16 MXU inputs in the
    # Pallas path => small tolerance-level drift expected).
    ref = jax.jit(reference_forward)(x, tparams)
    jax.block_until_ready(ref)
    rel_err = float(jnp.max(jnp.abs(logits - ref)) / (jnp.max(jnp.abs(ref)) + 1e-6))
    assert rel_err < 0.05, f"mismatch vs XLA reference: rel-max err {rel_err}"

    print("KERNEL_OK")
</pallas_src>

<mosaic_0001>
module attributes {stable_mosaic.version = 11 : i64} {
  func.func @_conv_pool_kernel(%arg0: i32, %arg1: memref<4x27x256xbf16, #tpu.memory_space<vmem>>, %arg2: memref<32x27xbf16, #tpu.memory_space<vmem>>, %arg3: memref<32x1xf32, #tpu.memory_space<vmem>>, %arg4: memref<32x256xf32, #tpu.memory_space<vmem>>) attributes {dimension_semantics = [#tpu.dimension_semantics<parallel>], iteration_bounds = array<i64: 2>, scalar_prefetch = 0 : i64, scratch_operands = 0 : i64, tpu.core_type = #tpu.core_type<tc>, window_params = [{transform_indices = @transform_0, window_bounds = array<i64: 4, 27, 256>}, {pipeline_mode = #tpu.pipeline_mode<synchronous>, transform_indices = @transform_1, window_bounds = array<i64: 32, 27>}, {pipeline_mode = #tpu.pipeline_mode<synchronous>, transform_indices = @transform_2, window_bounds = array<i64: 32, 1>}, {transform_indices = @transform_3, window_bounds = array<i64: 32, 256>}]} {
    %c0 = arith.constant 0 : index
    %c0_0 = arith.constant 0 : index
    %0 = vector.load %arg2[%c0, %c0_0] : memref<32x27xbf16, #tpu.memory_space<vmem>>, vector<32x27xbf16>
    %c0_1 = arith.constant 0 : index
    %c0_2 = arith.constant 0 : index
    %c0_3 = arith.constant 0 : index
    %1 = vector.load %arg1[%c0_1, %c0_2, %c0_3] : memref<4x27x256xbf16, #tpu.memory_space<vmem>>, vector<1x27x256xbf16>
    %2 = vector.shape_cast %1 : vector<1x27x256xbf16> to vector<27x256xbf16>
    %cst = arith.constant dense<0.000000e+00> : vector<32x256xf32>
    %3 = tpu.matmul %0, %2, %cst {dimension_numbers = #tpu.dot_dimension_numbers<[1], [0], [0], [1], [0, 0, 1, 1], [], []>} : vector<32x27xbf16>, vector<27x256xbf16>, vector<32x256xf32> -> vector<32x256xf32>
    %c1 = arith.constant 1 : index
    %c0_4 = arith.constant 0 : index
    %c0_5 = arith.constant 0 : index
    %4 = vector.load %arg1[%c1, %c0_4, %c0_5] : memref<4x27x256xbf16, #tpu.memory_space<vmem>>, vector<1x27x256xbf16>
    %5 = vector.shape_cast %4 : vector<1x27x256xbf16> to vector<27x256xbf16>
    %cst_6 = arith.constant dense<0.000000e+00> : vector<32x256xf32>
    %6 = tpu.matmul %0, %5, %cst_6 {dimension_numbers = #tpu.dot_dimension_numbers<[1], [0], [0], [1], [0, 0, 1, 1], [], []>} : vector<32x27xbf16>, vector<27x256xbf16>, vector<32x256xf32> -> vector<32x256xf32>
    %7 = arith.maximumf %3, %6 : vector<32x256xf32>
    %c2 = arith.constant 2 : index
    %c0_7 = arith.constant 0 : index
    %c0_8 = arith.constant 0 : index
    %8 = vector.load %arg1[%c2, %c0_7, %c0_8] : memref<4x27x256xbf16, #tpu.memory_space<vmem>>, vector<1x27x256xbf16>
    %9 = vector.shape_cast %8 : vector<1x27x256xbf16> to vector<27x256xbf16>
    %cst_9 = arith.constant dense<0.000000e+00> : vector<32x256xf32>
    %10 = tpu.matmul %0, %9, %cst_9 {dimension_numbers = #tpu.dot_dimension_numbers<[1], [0], [0], [1], [0, 0, 1, 1], [], []>} : vector<32x27xbf16>, vector<27x256xbf16>, vector<32x256xf32> -> vector<32x256xf32>
    %11 = arith.maximumf %7, %10 : vector<32x256xf32>
    %c3 = arith.constant 3 : index
    %c0_10 = arith.constant 0 : index
    %c0_11 = arith.constant 0 : index
    %12 = vector.load %arg1[%c3, %c0_10, %c0_11] : memref<4x27x256xbf16, #tpu.memory_space<vmem>>, vector<1x27x256xbf16>
    %13 = vector.shape_cast %12 : vector<1x27x256xbf16> to vector<27x256xbf16>
    %cst_12 = arith.constant dense<0.000000e+00> : vector<32x256xf32>
    %14 = tpu.matmul %0, %13, %cst_12 {dimension_numbers = #tpu.dot_dimension_numbers<[1], [0], [0], [1], [0, 0, 1, 1], [], []>} : vector<32x27xbf16>, vector<27x256xbf16>, vector<32x256xf32> -> vector<32x256xf32>
    %15 = arith.maximumf %11, %14 : vector<32x256xf32>
    %c0_13 = arith.constant 0 : index
    %c0_14 = arith.constant 0 : index
    %16 = vector.load %arg3[%c0_13, %c0_14] : memref<32x1xf32, #tpu.memory_space<vmem>>, vector<32x1xf32>
    %17 = vector.broadcast %16 : vector<32x1xf32> to vector<32x256xf32>
    %18 = arith.addf %15, %17 : vector<32x256xf32>
    %cst_15 = arith.constant 0.000000e+00 : f32
    %19 = vector.broadcast %cst_15 : f32 to vector<32x256xf32>
    %20 = arith.maximumf %18, %19 : vector<32x256xf32>
    %c0_16 = arith.constant 0 : index
    %c0_17 = arith.constant 0 : index
    %21 = vector.load %arg4[%c0_16, %c0_17] : memref<32x256xf32, #tpu.memory_space<vmem>>, vector<32x256xf32>
    tpu.vector_store %arg4[%c0_16, %c0_17], %20 {strides = array<i32>} : memref<32x256xf32, #tpu.memory_space<vmem>>, vector<32x256xf32>,
    return
  }
  func.func @transform_0(%arg0: i32) -> (i32, i32, i32) {
    %c0_i32 = arith.constant 0 : i32
    %c0_i32_0 = arith.constant 0 : i32
    %c0_i32_1 = arith.constant 0 : i32
    return %c0_i32, %c0_i32_0, %arg0 : i32, i32, i32
  }
  func.func @transform_1(%arg0: i32) -> (i32, i32) {
    %c0_i32 = arith.constant 0 : i32
    %c0_i32_0 = arith.constant 0 : i32
    %c0_i32_1 = arith.constant 0 : i32
    return %c0_i32, %c0_i32_0 : i32, i32
  }
  func.func @transform_2(%arg0: i32) -> (i32, i32) {
    %c0_i32 = arith.constant 0 : i32
    %c0_i32_0 = arith.constant 0 : i32
    %c0_i32_1 = arith.constant 0 : i32
    return %c0_i32, %c0_i32_0 : i32, i32
  }
  func.func @transform_3(%arg0: i32) -> (i32, i32) {
    %c0_i32 = arith.constant 0 : i32
    %c0_i32_0 = arith.constant 0 : i32
    return %c0_i32, %arg0 : i32, i32
  }
}

module attributes {stable_mosaic.version = 11 : i64} {
  func.func @_conv_pool_kernel(%arg0: i32, %arg1: memref<4x288x128xbf16, #tpu.memory_space<vmem>>, %arg2: memref<64x288xbf16, #tpu.memory_space<vmem>>, %arg3: memref<64x1xf32, #tpu.memory_space<vmem>>, %arg4: memref<64x128xf32, #tpu.memory_space<vmem>>) attributes {dimension_semantics = [#tpu.dimension_semantics<parallel>], iteration_bounds = array<i64: 1>, scalar_prefetch = 0 : i64, scratch_operands = 0 : i64, tpu.core_type = #tpu.core_type<tc>, window_params = [{transform_indices = @transform_0, window_bounds = array<i64: 4, 288, 128>}, {pipeline_mode = #tpu.pipeline_mode<synchronous>, transform_indices = @transform_1, window_bounds = array<i64: 64, 288>}, {pipeline_mode = #tpu.pipeline_mode<synchronous>, transform_indices = @transform_2, window_bounds = array<i64: 64, 1>}, {transform_indices = @transform_3, window_bounds = array<i64: 64, 128>}]} {
    %c0 = arith.constant 0 : index
    %c0_0 = arith.constant 0 : index
    %0 = vector.load %arg2[%c0, %c0_0] : memref<64x288xbf16, #tpu.memory_space<vmem>>, vector<64x288xbf16>
    %c0_1 = arith.constant 0 : index
    %c0_2 = arith.constant 0 : index
    %c0_3 = arith.constant 0 : index
    %1 = vector.load %arg1[%c0_1, %c0_2, %c0_3] : memref<4x288x128xbf16, #tpu.memory_space<vmem>>, vector<1x288x128xbf16>
    %2 = vector.shape_cast %1 : vector<1x288x128xbf16> to vector<288x128xbf16>
    %cst = arith.constant dense<0.000000e+00> : vector<64x128xf32>
    %3 = tpu.matmul %0, %2, %cst {dimension_numbers = #tpu.dot_dimension_numbers<[1], [0], [0], [1], [0, 0, 1, 1], [], []>} : vector<64x288xbf16>, vector<288x128xbf16>, vector<64x128xf32> -> vector<64x128xf32>
    %c1 = arith.constant 1 : index
    %c0_4 = arith.constant 0 : index
    %c0_5 = arith.constant 0 : index
    %4 = vector.load %arg1[%c1, %c0_4, %c0_5] : memref<4x288x128xbf16, #tpu.memory_space<vmem>>, vector<1x288x128xbf16>
    %5 = vector.shape_cast %4 : vector<1x288x128xbf16> to vector<288x128xbf16>
    %cst_6 = arith.constant dense<0.000000e+00> : vector<64x128xf32>
    %6 = tpu.matmul %0, %5, %cst_6 {dimension_numbers = #tpu.dot_dimension_numbers<[1], [0], [0], [1], [0, 0, 1, 1], [], []>} : vector<64x288xbf16>, vector<288x128xbf16>, vector<64x128xf32> -> vector<64x128xf32>
    %7 = arith.maximumf %3, %6 : vector<64x128xf32>
    %c2 = arith.constant 2 : index
    %c0_7 = arith.constant 0 : index
    %c0_8 = arith.constant 0 : index
    %8 = vector.load %arg1[%c2, %c0_7, %c0_8] : memref<4x288x128xbf16, #tpu.memory_space<vmem>>, vector<1x288x128xbf16>
    %9 = vector.shape_cast %8 : vector<1x288x128xbf16> to vector<288x128xbf16>
    %cst_9 = arith.constant dense<0.000000e+00> : vector<64x128xf32>
    %10 = tpu.matmul %0, %9, %cst_9 {dimension_numbers = #tpu.dot_dimension_numbers<[1], [0], [0], [1], [0, 0, 1, 1], [], []>} : vector<64x288xbf16>, vector<288x128xbf16>, vector<64x128xf32> -> vector<64x128xf32>
    %11 = arith.maximumf %7, %10 : vector<64x128xf32>
    %c3 = arith.constant 3 : index
    %c0_10 = arith.constant 0 : index
    %c0_11 = arith.constant 0 : index
    %12 = vector.load %arg1[%c3, %c0_10, %c0_11] : memref<4x288x128xbf16, #tpu.memory_space<vmem>>, vector<1x288x128xbf16>
    %13 = vector.shape_cast %12 : vector<1x288x128xbf16> to vector<288x128xbf16>
    %cst_12 = arith.constant dense<0.000000e+00> : vector<64x128xf32>
    %14 = tpu.matmul %0, %13, %cst_12 {dimension_numbers = #tpu.dot_dimension_numbers<[1], [0], [0], [1], [0, 0, 1, 1], [], []>} : vector<64x288xbf16>, vector<288x128xbf16>, vector<64x128xf32> -> vector<64x128xf32>
    %15 = arith.maximumf %11, %14 : vector<64x128xf32>
    %c0_13 = arith.constant 0 : index
    %c0_14 = arith.constant 0 : index
    %16 = vector.load %arg3[%c0_13, %c0_14] : memref<64x1xf32, #tpu.memory_space<vmem>>, vector<64x1xf32>
    %17 = vector.broadcast %16 : vector<64x1xf32> to vector<64x128xf32>
    %18 = arith.addf %15, %17 : vector<64x128xf32>
    %cst_15 = arith.constant 0.000000e+00 : f32
    %19 = vector.broadcast %cst_15 : f32 to vector<64x128xf32>
    %20 = arith.maximumf %18, %19 : vector<64x128xf32>
    %c0_16 = arith.constant 0 : index
    %c0_17 = arith.constant 0 : index
    %21 = vector.load %arg4[%c0_16, %c0_17] : memref<64x128xf32, #tpu.memory_space<vmem>>, vector<64x128xf32>
    tpu.vector_store %arg4[%c0_16, %c0_17], %20 {strides = array<i32>} : memref<64x128xf32, #tpu.memory_space<vmem>>, vector<64x128xf32>,
    return
  }
  func.func @transform_0(%arg0: i32) -> (i32, i32, i32) {
    %c0_i32 = arith.constant 0 : i32
    %c0_i32_0 = arith.constant 0 : i32
    %c0_i32_1 = arith.constant 0 : i32
    return %c0_i32, %c0_i32_0, %arg0 : i32, i32, i32
  }
  func.func @transform_1(%arg0: i32) -> (i32, i32) {
    %c0_i32 = arith.constant 0 : i32
    %c0_i32_0 = arith.constant 0 : i32
    %c0_i32_1 = arith.constant 0 : i32
    return %c0_i32, %c0_i32_0 : i32, i32
  }
  func.func @transform_2(%arg0: i32) -> (i32, i32) {
    %c0_i32 = arith.constant 0 : i32
    %c0_i32_0 = arith.constant 0 : i32
    %c0_i32_1 = arith.constant 0 : i32
    return %c0_i32, %c0_i32_0 : i32, i32
  }
  func.func @transform_3(%arg0: i32) -> (i32, i32) {
    %c0_i32 = arith.constant 0 : i32
    %c0_i32_0 = arith.constant 0 : i32
    return %c0_i32, %arg0 : i32, i32
  }
}

module attributes {stable_mosaic.version = 11 : i64} {
  func.func @_mlp_kernel(%arg0: memref<4096x2xbf16, #tpu.memory_space<vmem>>, %arg1: memref<128x4096xbf16, #tpu.memory_space<vmem>>, %arg2: memref<128x1xf32, #tpu.memory_space<vmem>>, %arg3: memref<10x128xbf16, #tpu.memory_space<vmem>>, %arg4: memref<10x1xf32, #tpu.memory_space<vmem>>, %arg5: memref<10x2xf32, #tpu.memory_space<vmem>>) attributes {dimension_semantics = [], scalar_prefetch = 0 : i64, scratch_operands = 0 : i64, tpu.core_type = #tpu.core_type<tc>} {
    %c0 = arith.constant 0 : index
    %c0_0 = arith.constant 0 : index
    %0 = vector.load %arg1[%c0, %c0_0] : memref<128x4096xbf16, #tpu.memory_space<vmem>>, vector<128x4096xbf16>
    %c0_1 = arith.constant 0 : index
    %c0_2 = arith.constant 0 : index
    %1 = vector.load %arg0[%c0_1, %c0_2] : memref<4096x2xbf16, #tpu.memory_space<vmem>>, vector<4096x2xbf16>
    %cst = arith.constant dense<0.000000e+00> : vector<128x2xf32>
    %2 = tpu.matmul %0, %1, %cst {dimension_numbers = #tpu.dot_dimension_numbers<[1], [0], [0], [1], [0, 0, 1, 1], [], []>} : vector<128x4096xbf16>, vector<4096x2xbf16>, vector<128x2xf32> -> vector<128x2xf32>
    %c0_3 = arith.constant 0 : index
    %c0_4 = arith.constant 0 : index
    %3 = vector.load %arg2[%c0_3, %c0_4] : memref<128x1xf32, #tpu.memory_space<vmem>>, vector<128x1xf32>
    %4 = vector.broadcast %3 : vector<128x1xf32> to vector<128x2xf32>
    %5 = arith.addf %2, %4 : vector<128x2xf32>
    %cst_5 = arith.constant 0.000000e+00 : f32
    %6 = vector.broadcast %cst_5 : f32 to vector<128x2xf32>
    %7 = arith.maximumf %5, %6 : vector<128x2xf32>
    %8 = arith.truncf %7 : vector<128x2xf32> to vector<128x2xbf16>
    %c0_6 = arith.constant 0 : index
    %c0_7 = arith.constant 0 : index
    %9 = vector.load %arg3[%c0_6, %c0_7] : memref<10x128xbf16, #tpu.memory_space<vmem>>, vector<10x128xbf16>
    %cst_8 = arith.constant dense<0.000000e+00> : vector<10x2xf32>
    %10 = tpu.matmul %9, %8, %cst_8 {dimension_numbers = #tpu.dot_dimension_numbers<[1], [0], [0], [1], [0, 0, 1, 1], [], []>} : vector<10x128xbf16>, vector<128x2xbf16>, vector<10x2xf32> -> vector<10x2xf32>
    %c0_9 = arith.constant 0 : index
    %c0_10 = arith.constant 0 : index
    %11 = vector.load %arg4[%c0_9, %c0_10] : memref<10x1xf32, #tpu.memory_space<vmem>>, vector<10x1xf32>
    %12 = vector.broadcast %11 : vector<10x1xf32> to vector<10x2xf32>
    %13 = arith.addf %10, %12 : vector<10x2xf32>
    %c0_11 = arith.constant 0 : index
    %c0_12 = arith.constant 0 : index
    %14 = vector.load %arg5[%c0_11, %c0_12] : memref<10x2xf32, #tpu.memory_space<vmem>>, vector<10x2xf32>
    tpu.vector_store %arg5[%c0_11, %c0_12], %13 {strides = array<i32>} : memref<10x2xf32, #tpu.memory_space<vmem>>, vector<10x2xf32>,
    return
  }
}

</mosaic_0001>

<llo_original>
// kernel: simple_cnn_forward.3
$region0: #{simple_cnn_forward.3}
  #allocation0 [shape = 'u32[]', space=smem, size = 0x4, offset = 0x4, fixed_abs, tag = 'smem constant byte address 0x4 - core index']
  #allocation1 [shape = 'u32[72,128]{1,0:T(1,128)}', space=vmem, size = 0x9000, scoped, tag = 'internal scratch']
  %s0 = inlined_call_operand.vmem [shape: bf16[4,27,512], index: 0, kind: input, shape index: {}]
  %s1 = inlined_call_operand.vmem [shape: bf16[32,27], index: 1, kind: input, shape index: {}]
  %s2 = inlined_call_operand.vmem [shape: f32[32,1], index: 2, kind: input, shape index: {}]
  %s3 = inlined_call_operand.vmem [shape: f32[32,512], index: 3, kind: output, shape index: {}]
  %s4 = sld [smem:[#allocation0]]
  $region102: #{simple_cnn_forward.3} parent=0
    _
  %s6 = ssub.s32 1, %s4
  %s7 = scalar_select 0, %s6, %s4
  $region1: #{simple_cnn_forward.3} parent=0
    #allocation2 [shape = 'u8[131072]{0}', space=vmem, size = 0x20000, scoped, tag = 'input window, operand 0']
    #allocation3 [shape = 'u8[65536]{0}', space=vmem, size = 0x10000, scoped, tag = 'output window, operand 0']
    loop: start=0, step=1, limit=4
    $region2: #{simple_cnn_forward.3} parent=1 // loop_pre_header
      _
    $region3: #{simple_cnn_forward.3} parent=1 // loop_header
      %s9 = sphi 0, %s13
      %p10 = scmp.ge.s32.totalorder %s9, 4
      %s19 = sphi 0, %s21
      %s22 = sphi 0, %s19
      %s23 = sphi 0, %s22
      %s39 = sphi 0, %s23
      %s43 = sphi 0, %s43
      %s45 = sphi 0, %s43
      %s46 = sphi 0, %s45
      %s60 = sphi 0, %s46
      %s64 = sphi 0, %s64
      %s66 = sphi 0, %s64
      %s67 = sphi 0, %s66
      %s81 = sphi 0, %s67
      %s87 = sphi 0, %s89
      %s90 = sphi 0, %s87
      %s91 = sphi 0, %s90
      %s107 = sphi 0, %s91
    $region4: #{simple_cnn_forward.3} parent=1 // loop_header_branch
      %12 = sbr.rel (%p10) target = $region8
    $region5: #{simple_cnn_forward.3} parent=1 // loop_body
      %s14 = ssub.s32 %s9, 1
      %s15 = ssub.s32 %s9, 2
      %s16 = sadd.s32 %s9, 1
      %s17 = ssub.s32 %s9, %s16
      %p18 = scmp.eq.s32.totalorder %s17, 0
      %s20 = sadd.s32 %s19, 1
      %s21 = scalar_select %p18, %s19, %s20
      %p24 = pneg %p18
      %p25 = scmp.eq.s32.totalorder %s9, 1
      %p26 = por %p24, %p25
      %p27 = scmp.ne.s32.totalorder %s19, %s22
      %p28 = scmp.eq.s32.totalorder %s9, 0
      %p29 = por %p27, %p28
      %p30 = scmp.ne.s32.totalorder %s19, %s22
      %p31 = scmp.eq.s32.totalorder %s14, 1
      %p32 = por %p30, %p31
      %p33 = scmp.ne.s32.totalorder %s22, %s23
      %p34 = scmp.eq.s32.totalorder %s14, 0
      %p35 = por %p33, %p34
      %p36 = scmp.ne.s32.totalorder %s22, %s23
      %p37 = scmp.eq.s32.totalorder %s15, 1
      %p38 = por %p36, %p37
      %p40 = scmp.ne.s32.totalorder %s23, %s39
      %p41 = scmp.eq.s32.totalorder %s15, 0
      %p42 = por %p40, %p41
      %s44 = sadd.s32 %s43, 1
      %p47 = scmp.eq.s32.totalorder %s9, 1
      %p48 = scmp.ne.s32.totalorder %s43, %s45
      %p49 = scmp.eq.s32.totalorder %s9, 0
      %p50 = por %p48, %p49
      %p51 = scmp.ne.s32.totalorder %s43, %s45
      %p52 = scmp.eq.s32.totalorder %s14, 1
      %p53 = por %p51, %p52
      %p54 = scmp.ne.s32.totalorder %s45, %s46
      %p55 = scmp.eq.s32.totalorder %s14, 0
      %p56 = por %p54, %p55
      %p57 = scmp.ne.s32.totalorder %s45, %s46
      %p58 = scmp.eq.s32.totalorder %s15, 1
      %p59 = por %p57, %p58
      %p61 = scmp.ne.s32.totalorder %s46, %s60
      %p62 = scmp.eq.s32.totalorder %s15, 0
      %p63 = por %p61, %p62
      %s65 = sadd.s32 %s64, 1
      %p68 = scmp.eq.s32.totalorder %s9, 1
      %p69 = scmp.ne.s32.totalorder %s64, %s66
      %p70 = scmp.eq.s32.totalorder %s9, 0
      %p71 = por %p69, %p70
      %p72 = scmp.ne.s32.totalorder %s64, %s66
      %p73 = scmp.eq.s32.totalorder %s14, 1
      %p74 = por %p72, %p73
      %p75 = scmp.ne.s32.totalorder %s66, %s67
      %p76 = scmp.eq.s32.totalorder %s14, 0
      %p77 = por %p75, %p76
      %p78 = scmp.ne.s32.totalorder %s66, %s67
      %p79 = scmp.eq.s32.totalorder %s15, 1
      %p80 = por %p78, %p79
      %p82 = scmp.ne.s32.totalorder %s67, %s81
      %p83 = scmp.eq.s32.totalorder %s15, 0
      %p84 = por %p82, %p83
      %s85 = ssub.s32 %s9, %s16
      %p86 = scmp.eq.s32.totalorder %s85, 0
      %s88 = sadd.s32 %s87, 1
      %s89 = scalar_select %p86, %s87, %s88
      %p92 = pneg %p86
      %p93 = scmp.eq.s32.totalorder %s9, 1
      %p94 = por %p92, %p93
      %p95 = scmp.ne.s32.totalorder %s87, %s90
      %p96 = scmp.eq.s32.totalorder %s9, 0
      %p97 = por %p95, %p96
      %p98 = scmp.ne.s32.totalorder %s87, %s90
      %p99 = scmp.eq.s32.totalorder %s14, 1
      %p100 = por %p98, %p99
      %p101 = scmp.ne.s32.totalorder %s90, %s91
      %p102 = scmp.eq.s32.totalorder %s14, 0
      %p103 = por %p101, %p102
      %p104 = scmp.ne.s32.totalorder %s90, %s91
      %p105 = scmp.eq.s32.totalorder %s15, 1
      %p106 = por %p104, %p105
      %p108 = scmp.ne.s32.totalorder %s91, %s107
      %p109 = scmp.eq.s32.totalorder %s15, 0
      %p110 = por %p108, %p109
      %p111 = scmp.le.s32.totalorder 1, %s9
      %p112 = scmp.lt.s32.totalorder %s9, 3
      %p113 = pnand %p111, %p112
      %p114 = pneg %p113
      // Predicated region
      $region9: #{simple_cnn_forward.3} parent=5 // pred_check
        _
      $region10: #{simple_cnn_forward.3} parent=5 // pred_check_branch
        %116 = sbr.rel (%p113) target = $region12
      $region11: #{simple_cnn_forward.3} parent=5 // pred_region
        %s117 = ssub.s32 %s9, 1
        // Predicated region
        $region13: #{simple_cnn_forward.3} parent=11 // pred_check
          %p118 = pneg %p56
        $region14: #{simple_cnn_forward.3} parent=11 // pred_check_branch
          %120 = sbr.rel (%p118) target = $region16
        $region15: #{simple_cnn_forward.3} parent=11 // pred_region
          _
        $region16: #{simple_cnn_forward.3} parent=11 // pred_fallthru
          _
        // Predicated region
        $region17: #{simple_cnn_forward.3} parent=11 // pred_check
          %p121 = pneg %p77
        $region18: #{simple_cnn_forward.3} parent=11 // pred_check_branch
          %123 = sbr.rel (%p121) target = $region20
        $region19: #{simple_cnn_forward.3} parent=11 // pred_region
          _
        $region20: #{simple_cnn_forward.3} parent=11 // pred_fallthru
          _
      $region12: #{simple_cnn_forward.3} parent=5 // pred_fallthru
        _
      %p124 = scmp.lt.s32.totalorder %s9, 2
      // Predicated region
      $region21: #{simple_cnn_forward.3} parent=5 // pred_check
        %p125 = pneg %p124
      $region22: #{simple_cnn_forward.3} parent=5 // pred_check_branch
        %127 = sbr.rel (%p125) target = $region24
      $region23: #{simple_cnn_forward.3} parent=5 // pred_region
        // Predicated region
        $region25: #{simple_cnn_forward.3} parent=23 // pred_check
          %p128 = pneg %p29
        $region26: #{simple_cnn_forward.3} parent=23 // pred_check_branch
          %130 = sbr.rel (%p128) target = $region28
        $region27: #{simple_cnn_forward.3} parent=23 // pred_region
          %s131 = sand.u32 %s19, 1
          %s132 = sand.u32 %s19, 1
          %s133 = smul.addr %s132, 128
          %s134 = scalar_lea.vmem [#allocation2], %s133
          %s135 = smul.u32 2, %s9
          %s136 = smul.addr %s135, 4
          %s137 = scalar_lea.vmem %s0, %s136
          // Predicated region
          $region29: #{simple_cnn_forward.3} parent=27 // pred_check
            _
          $region30: #{simple_cnn_forward.3} parent=27 // pred_check_branch
            %139 = sbr.rel (0) target = $region32
          $region31: #{simple_cnn_forward.3} parent=27 // pred_region
            // Predicated region
            $region33: #{simple_cnn_forward.3} parent=31 // pred_check
              _
            $region34: #{simple_cnn_forward.3} parent=31 // pred_check_branch
              %141 = sbr.rel (0) target = $region36
            $region35: #{simple_cnn_forward.3} parent=31 // pred_region
              // Predicated region
              $region48: #{simple_cnn_forward.3} parent=35 // pred_check
                _
              $region49: #{simple_cnn_forward.3} parent=35 // pred_check_branch
                %187 = sbr.rel (0) target = $region51
              $region50: #{simple_cnn_forward.3} parent=35 // pred_region
                loop: start=0, step=1, limit=1
                $region52: #{simple_cnn_forward.3} parent=50 // loop_pre_header
                  _
                $region53: #{simple_cnn_forward.3} parent=50 // loop_header
                  %s189 = sphi 0, %s193
                  %p190 = scmp.ge.s32.totalorder %s189, 1
                  %s194 = sphi %s137, %s137
                  %s195 = sphi %s134, %s134
                $region54: #{simple_cnn_forward.3} parent=50 // loop_header_branch
                  %192 = sbr.rel (%p190) target = $region58
                $region55: #{simple_cnn_forward.3} parent=50 // loop_body
                  %v196 = vld [vmem:[%s194] sm:$0xff]
                  %197 = vst [vmem:[%s195] sm:$0xff] %v196
                  %v198 = vld [vmem:[%s194 + $0x10] sm:$0xff]
                  %199 = vst [vmem:[%s195 + $0x8] sm:$0xff] %v198
                  %v200 = vld [vmem:[%s194 + $0x20] sm:$0xff]
                  %201 = vst [vmem:[%s195 + $0x10] sm:$0xff] %v200
                  %v202 = vld [vmem:[%s194 + $0x30] sm:$0xff]
                  %203 = vst [vmem:[%s195 + $0x18] sm:$0xff] %v202
                  %v204 = vld [vmem:[%s194 + $0x40] sm:$0xff]
                  %205 = vst [vmem:[%s195 + $0x20] sm:$0xff] %v204
                  %v206 = vld [vmem:[%s194 + $0x50] sm:$0xff]
                  %207 = vst [vmem:[%s195 + $0x28] sm:$0xff] %v206
                  %v208 = vld [vmem:[%s194 + $0x60] sm:$0xff]
                  %209 = vst [vmem:[%s195 + $0x30] sm:$0xff] %v208
                  %v210 = vld [vmem:[%s194 + $0x70] sm:$0xff]
                  %211 = vst [vmem:[%s195 + $0x38] sm:$0xff] %v210
                  %v212 = vld [vmem:[%s194 + $0x80] sm:$0xff]
                  %213 = vst [vmem:[%s195 + $0x40] sm:$0xff] %v212
                  %v214 = vld [vmem:[%s194 + $0x90] sm:$0xff]
                  %215 = vst [vmem:[%s195 + $0x48] sm:$0xff] %v214
                  %v216 = vld [vmem:[%s194 + $0xa0] sm:$0xff]
                  %217 = vst [vmem:[%s195 + $0x50] sm:$0xff] %v216
                  %v218 = vld [vmem:[%s194 + $0xb0] sm:$0xff]
                  %219 = vst [vmem:[%s195 + $0x58] sm:$0xff] %v218
                  %v220 = vld [vmem:[%s194 + $0xc0] sm:$0xff]
                  %221 = vst [vmem:[%s195 + $0x60] sm:$0xff] %v220
                  %v222 = vld [vmem:[%s194 + $0xd0] sm:$0xff]
                  %223 = vst [vmem:[%s195 + $0x68] sm:$0xff] %v222
                  %v224 = vld [vmem:[%s194 + $0xe0] sm:$0xff]
                  %225 = vst [vmem:[%s195 + $0x70] sm:$0xff] %v224
                  %v226 = vld [vmem:[%s194 + $0xf0] sm:$0xff]
                  %227 = vst [vmem:[%s195 + $0x78] sm:$0xff] %v226
                $region56: #{simple_cnn_forward.3} parent=50 // loop_footer
                  %s193 = sadd.s32 1, %s189
                $region57: #{simple_cnn_forward.3} parent=50 // loop_footer_branch
                  %188 = sbr.rel target = $region53
                $region58: #{simple_cnn_forward.3} parent=50 // loop_exit
                  _
              $region51: #{simple_cnn_forward.3} parent=35 // pred_fallthru
                _
              // Predicated region
              $region59: #{simple_cnn_forward.3} parent=35 // pred_check
                _
              $region60: #{simple_cnn_forward.3} parent=35 // pred_check_branch
                %229 = sbr.rel target = $region62
              $region61: #{simple_cnn_forward.3} parent=35 // pred_region
                _
              $region62: #{simple_cnn_forward.3} parent=35 // pred_fallthru
                _
            $region36: #{simple_cnn_forward.3} parent=31 // pred_fallthru
              _
            // Predicated region
            $region37: #{simple_cnn_forward.3} parent=31 // pred_check
              _
            $region38: #{simple_cnn_forward.3} parent=31 // pred_check_branch
              %143 = sbr.rel target = $region40
            $region39: #{simple_cnn_forward.3} parent=31 // pred_region
              %s145 = ssub.s32 256, 1
              loop: start=0, step=1, limit=1
              $region41: #{simple_cnn_forward.3} parent=39 // loop_pre_header
                _
              $region42: #{simple_cnn_forward.3} parent=39 // loop_header
                %s147 = sphi 0, %s151
                %p148 = scmp.ge.s32.totalorder %s147, 1
                %s152 = sphi %s137, %s137
                %s153 = sphi %s134, %s134
              $region43: #{simple_cnn_forward.3} parent=39 // loop_header_branch
                %150 = sbr.rel (%p148) target = $region47
              $region44: #{simple_cnn_forward.3} parent=39 // loop_body
                %v154 = vld [vmem:[%s152] sm:%s145]
                %155 = vst [vmem:[%s153] sm:%s145] %v154
                %v156 = vld [vmem:[%s152 + $0x10] sm:%s145]
                %157 = vst [vmem:[%s153 + $0x8] sm:%s145] %v156
                %v158 = vld [vmem:[%s152 + $0x20] sm:%s145]
                %159 = vst [vmem:[%s153 + $0x10] sm:%s145] %v158
                %v160 = vld [vmem:[%s152 + $0x30] sm:%s145]
                %161 = vst [vmem:[%s153 + $0x18] sm:%s145] %v160
                %v162 = vld [vmem:[%s152 + $0x40] sm:%s145]
                %163 = vst [vmem:[%s153 + $0x20] sm:%s145] %v162
                %v164 = vld [vmem:[%s152 + $0x50] sm:%s145]
                %165 = vst [vmem:[%s153 + $0x28] sm:%s145] %v164
                %v166 = vld [vmem:[%s152 + $0x60] sm:%s145]
                %167 = vst [vmem:[%s153 + $0x30] sm:%s145] %v166
                %v168 = vld [vmem:[%s152 + $0x70] sm:%s145]
                %169 = vst [vmem:[%s153 + $0x38] sm:%s145] %v168
                %v170 = vld [vmem:[%s152 + $0x80] sm:%s145]
                %171 = vst [vmem:[%s153 + $0x40] sm:%s145] %v170
                %v172 = vld [vmem:[%s152 + $0x90] sm:%s145]
                %173 = vst [vmem:[%s153 + $0x48] sm:%s145] %v172
                %v174 = vld [vmem:[%s152 + $0xa0] sm:%s145]
                %175 = vst [vmem:[%s153 + $0x50] sm:%s145] %v174
                %v176 = vld [vmem:[%s152 + $0xb0] sm:%s145]
                %177 = vst [vmem:[%s153 + $0x58] sm:%s145] %v176
                %v178 = vld [vmem:[%s152 + $0xc0] sm:%s145]
                %179 = vst [vmem:[%s153 + $0x60] sm:%s145] %v178
                %v180 = vld [vmem:[%s152 + $0xd0] sm:%s145]
                %181 = vst [vmem:[%s153 + $0x68] sm:%s145] %v180
                %v182 = vld [vmem:[%s152 + $0xe0] sm:%s145]
                %183 = vst [vmem:[%s153 + $0x70] sm:%s145] %v182
                %v184 = vld [vmem:[%s152 + $0xf0] sm:%s145]
                %185 = vst [vmem:[%s153 + $0x78] sm:%s145] %v184
              $region45: #{simple_cnn_forward.3} parent=39 // loop_footer
                %s151 = sadd.s32 1, %s147
              $region46: #{simple_cnn_forward.3} parent=39 // loop_footer_branch
                %146 = sbr.rel target = $region42
              $region47: #{simple_cnn_forward.3} parent=39 // loop_exit
                _
            $region40: #{simple_cnn_forward.3} parent=31 // pred_fallthru
              _
          $region32: #{simple_cnn_forward.3} parent=27 // pred_fallthru
            _
          %230 = vnop
        $region28: #{simple_cnn_forward.3} parent=23 // pred_fallthru
          _
      $region24: #{simple_cnn_forward.3} parent=5 // pred_fallthru
        _
      %p231 = scmp.le.s32.totalorder 1, %s9
      %p232 = scmp.lt.s32.totalorder %s9, 3
      %p233 = pnand %p231, %p232
      %p234 = pneg %p233
      // Predicated region
      $region63: #{simple_cnn_forward.3} parent=5 // pred_check
        _
      $region64: #{simple_cnn_forward.3} parent=5 // pred_check_branch
        %236 = sbr.rel (%p233) target = $region66
      $region65: #{simple_cnn_forward.3} parent=5 // pred_region
        %s237 = ssub.s32 %s9, 1
        %s238 = sand.u32 %s22, 1
        %s239 = sand.u32 %s22, 1
        %s240 = smul.addr %s239, 128
        %s241 = scalar_lea.vmem [#allocation2], %s240
        // Predicated region
        $region67: #{simple_cnn_forward.3} parent=65 // pred_check
          %p242 = pneg %p35
        $region68: #{simple_cnn_forward.3} parent=65 // pred_check_branch
          %244 = sbr.rel (%p242) target = $region70
        $region69: #{simple_cnn_forward.3} parent=65 // pred_region
          _
        $region70: #{simple_cnn_forward.3} parent=65 // pred_fallthru
          _
        %s245 = sand.u32 %s22, 1
        %s246 = sand.u32 %s22, 1
        %s247 = smul.addr %s246, 128
        %s248 = scalar_lea.vmem [#allocation2], %s247
        %p249 = pneg %p35
        %p250 = pneg %p32
        %p251 = pneg %p56
        %p252 = pneg %p53
        %p253 = pneg %p77
        %p254 = pneg %p74
        %p255 = pneg %p103
        %p256 = pneg %p100
        %s257 = sand.u32 %s90, 1
        %s258 = sand.u32 %s90, 1
        %s259 = smul.addr %s258, 64
        %s260 = scalar_lea.vmem [#allocation3], %s259
        %s261 = smul.u32 2, %s14
        %s262 = smul.u32 2, %s14
        %v264 = vld [vmem:[%s1] sm:$0xf]
        %v265 = vld [vmem:[%s1 + $0x4] sm:$0xf]
        %v266 = vld [vmem:[%s1 + $0x8] sm:$0xf]
        %v267 = vld [vmem:[%s1 + $0xc] sm:$0xf]
        %v268 = vld [vmem:[%s241] sm:$0xff]
        %v269 = vld [vmem:[%s241 + $0x8] sm:$0xff]
        %v270 = vld [vmem:[%s241 + $0x10] sm:$0xff]
        %v271 = vld [vmem:[%s241 + $0x18] sm:$0x33]
        %v276 = vunpack.c.l.b16 %v264
        %v277 = vunpack.c.l.b16 %v265
        %v278 = vunpack.c.l.b16 %v266
        %v279 = vunpack.c.l.b16 %v267
        %v280 = vpack.c.b16 %v277, %v276
        %v281 = vpack.c.b16 %v279, %v278
        %v286 = vunpack.c.l.b16 %v268
        %v287 = vunpack.c.h.b16 %v268
        %v288 = vunpack.c.l.b16 %v269
        %v289 = vunpack.c.h.b16 %v269
        %v290 = vunpack.c.l.b16 %v270
        %v291 = vunpack.c.h.b16 %v270
        %v292 = vunpack.c.l.b16 %v271
        %v293 = vunpack.c.h.b16 %v271
        %v294 = vpack.c.b16 %v288, %v286
        %v295 = vpack.c.b16 %v289, %v287
        %v296 = vpack.c.b16 %v292, %v290
        %v297 = vpack.c.b16 %v293, %v291
        %vm300 = vcmask 220160
        %v302 = vsel %vm300, %v280, 0
        %v305 = vsel %vm300, %v281, 0
        %vm307 = vcmask 1044480
        %vm308 = vcmask 1045504
        %v309 = vsel %vm307, 4294967295, 65535
        %v310 = vsel %vm308, %v309, 0
        %v312 = vand.u32 %v296, %v310
        %v315 = vand.u32 %v297, %v310
        %317 = vmatpush.bf16.msra.mxu0 0
        %318 = vmatpush.bf16.msra.mxu0 0
        %319 = vmatpush.bf16.msra.mxu0 0
        %320 = vmatpush.bf16.msra.mxu0 0
        %321 = vmatpush.bf16.msra.mxu0 0
        %322 = vmatpush.bf16.msra.mxu0 0
        %323 = vmatpush.bf16.msra.mxu0 %v312
        %324 = vmatpush.bf16.msra.mxu0 %v294
        %325 = vmatmul.bf16.gmra.mxu0 %v302
        %v326 = vpop.f32.mrf.mxu0
        %v327 = vadd.f32 0.0, %v326
        %v328 = vpop.f32.mrf.mxu0
        %v329 = vadd.f32 0.0, %v328
        %330 = vmatmul.bf16.gmra.mxu0 %v305
        %v331 = vpop.f32.mrf.mxu0
        %v332 = vadd.f32 0.0, %v331
        %v333 = vpop.f32.mrf.mxu0
        %v334 = vadd.f32 0.0, %v333
        %335 = vdwg.mxu0
        %336 = vmatpush.bf16.msra.mxu0 0
        %337 = vmatpush.bf16.msra.mxu0 0
        %338 = vmatpush.bf16.msra.mxu0 0
        %339 = vmatpush.bf16.msra.mxu0 0
        %340 = vmatpush.bf16.msra.mxu0 0
        %341 = vmatpush.bf16.msra.mxu0 0
        %342 = vmatpush.bf16.msra.mxu0 %v315
        %343 = vmatpush.bf16.msra.mxu0 %v295
        %344 = vmatmul.bf16.gmra.mxu0 %v302
        %v345 = vpop.f32.mrf.mxu0
        %v346 = vadd.f32 0.0, %v345
        %v347 = vpop.f32.mrf.mxu0
        %v348 = vadd.f32 0.0, %v347
        %349 = vmatmul.bf16.gmra.mxu0 %v305
        %v350 = vpop.f32.mrf.mxu0
        %v351 = vadd.f32 0.0, %v350
        %v352 = vpop.f32.mrf.mxu0
        %v353 = vadd.f32 0.0, %v352
        %354 = vdwg.mxu0
        %s355 = scalar_lea.vmem %s241, 32 [#allocation2]
        %v356 = vld [vmem:[%s355] sm:$0xff]
        %v357 = vld [vmem:[%s355 + $0x8] sm:$0xff]
        %v358 = vld [vmem:[%s355 + $0x10] sm:$0xff]
        %v359 = vld [vmem:[%s355 + $0x18] sm:$0x33]
        %v364 = vunpack.c.l.b16 %v356
        %v365 = vunpack.c.h.b16 %v356
        %v366 = vunpack.c.l.b16 %v357
        %v367 = vunpack.c.h.b16 %v357
        %v368 = vunpack.c.l.b16 %v358
        %v369 = vunpack.c.h.b16 %v358
        %v370 = vunpack.c.l.b16 %v359
        %v371 = vunpack.c.h.b16 %v359
        %v372 = vpack.c.b16 %v366, %v364
        %v373 = vpack.c.b16 %v367, %v365
        %v374 = vpack.c.b16 %v370, %v368
        %v375 = vpack.c.b16 %v371, %v369
        %v379 = vand.u32 %v374, %v310
        %v382 = vand.u32 %v375, %v310
        %384 = vmatpush.bf16.msra.mxu0 0
        %385 = vmatpush.bf16.msra.mxu0 0
        %386 = vmatpush.bf16.msra.mxu0 0
        %387 = vmatpush.bf16.msra.mxu0 0
        %388 = vmatpush.bf16.msra.mxu0 0
        %389 = vmatpush.bf16.msra.mxu0 0
        %390 = vmatpush.bf16.msra.mxu0 %v379
        %391 = vmatpush.bf16.msra.mxu0 %v372
        %392 = vmatmul.bf16.gmra.mxu0 %v302
        %v393 = vpop.f32.mrf.mxu0
        %v394 = vadd.f32 0.0, %v393
        %v395 = vpop.f32.mrf.mxu0
        %v396 = vadd.f32 0.0, %v395
        %397 = vmatmul.bf16.gmra.mxu0 %v305
        %v398 = vpop.f32.mrf.mxu0
        %v399 = vadd.f32 0.0, %v398
        %v400 = vpop.f32.mrf.mxu0
        %v401 = vadd.f32 0.0, %v400
        %402 = vdwg.mxu0
        %403 = vmatpush.bf16.msra.mxu0 0
        %404 = vmatpush.bf16.msra.mxu0 0
        %405 = vmatpush.bf16.msra.mxu0 0
        %406 = vmatpush.bf16.msra.mxu0 0
        %407 = vmatpush.bf16.msra.mxu0 0
        %408 = vmatpush.bf16.msra.mxu0 0
        %409 = vmatpush.bf16.msra.mxu0 %v382
        %410 = vmatpush.bf16.msra.mxu0 %v373
        %411 = vmatmul.bf16.gmra.mxu0 %v302
        %v412 = vpop.f32.mrf.mxu0
        %v413 = vadd.f32 0.0, %v412
        %v414 = vpop.f32.mrf.mxu0
        %v415 = vadd.f32 0.0, %v414
        %416 = vmatmul.bf16.gmra.mxu0 %v305
        %v417 = vpop.f32.mrf.mxu0
        %v418 = vadd.f32 0.0, %v417
        %v419 = vpop.f32.mrf.mxu0
        %v420 = vadd.f32 0.0, %v419
        %421 = vdwg.mxu0
        %v422 = vmax.f32 %v327, %v394
        %v423 = vmax.f32 %v346, %v413
        %v424 = vmax.f32 %v329, %v396
        %v425 = vmax.f32 %v348, %v415
        %v426 = vmax.f32 %v332, %v399
        %v427 = vmax.f32 %v351, %v418
        %v428 = vmax.f32 %v334, %v401
        %v429 = vmax.f32 %v353, %v420
        %s430 = scalar_lea.vmem %s241, 64 [#allocation2]
        %v431 = vld [vmem:[%s430] sm:$0xff]
        %v432 = vld [vmem:[%s430 + $0x8] sm:$0xff]
        %v433 = vld [vmem:[%s430 + $0x10] sm:$0xff]
        %v434 = vld [vmem:[%s430 + $0x18] sm:$0x33]
        %v439 = vunpack.c.l.b16 %v431
        %v440 = vunpack.c.h.b16 %v431
        %v441 = vunpack.c.l.b16 %v432
        %v442 = vunpack.c.h.b16 %v432
        %v443 = vunpack.c.l.b16 %v433
        %v444 = vunpack.c.h.b16 %v433
        %v445 = vunpack.c.l.b16 %v434
        %v446 = vunpack.c.h.b16 %v434
        %v447 = vpack.c.b16 %v441, %v439
        %v448 = vpack.c.b16 %v442, %v440
        %v449 = vpack.c.b16 %v445, %v443
        %v450 = vpack.c.b16 %v446, %v444
        %v454 = vand.u32 %v449, %v310
        %v457 = vand.u32 %v450, %v310
        %459 = vmatpush.bf16.msra.mxu0 0
        %460 = vmatpush.bf16.msra.mxu0 0
        %461 = vmatpush.bf16.msra.mxu0 0
        %462 = vmatpush.bf16.msra.mxu0 0
        %463 = vmatpush.bf16.msra.mxu0 0
        %464 = vmatpush.bf16.msra.mxu0 0
        %465 = vmatpush.bf16.msra.mxu0 %v454
        %466 = vmatpush.bf16.msra.mxu0 %v447
        %467 = vmatmul.bf16.gmra.mxu0 %v302
        %v468 = vpop.f32.mrf.mxu0
        %v469 = vadd.f32 0.0, %v468
        %v470 = vpop.f32.mrf.mxu0
        %v471 = vadd.f32 0.0, %v470
        %472 = vmatmul.bf16.gmra.mxu0 %v305
        %v473 = vpop.f32.mrf.mxu0
        %v474 = vadd.f32 0.0, %v473
        %v475 = vpop.f32.mrf.mxu0
        %v476 = vadd.f32 0.0, %v475
        %477 = vdwg.mxu0
        %478 = vmatpush.bf16.msra.mxu0 0
        %479 = vmatpush.bf16.msra.mxu0 0
        %480 = vmatpush.bf16.msra.mxu0 0
        %481 = vmatpush.bf16.msra.mxu0 0
        %482 = vmatpush.bf16.msra.mxu0 0
        %483 = vmatpush.bf16.msra.mxu0 0
        %484 = vmatpush.bf16.msra.mxu0 %v457
        %485 = vmatpush.bf16.msra.mxu0 %v448
        %486 = vmatmul.bf16.gmra.mxu0 %v302
        %v487 = vpop.f32.mrf.mxu0
        %v488 = vadd.f32 0.0, %v487
        %v489 = vpop.f32.mrf.mxu0
        %v490 = vadd.f32 0.0, %v489
        %491 = vmatmul.bf16.gmra.mxu0 %v305
        %v492 = vpop.f32.mrf.mxu0
        %v493 = vadd.f32 0.0, %v492
        %v494 = vpop.f32.mrf.mxu0
        %v495 = vadd.f32 0.0, %v494
        %496 = vdwg.mxu0
        %v497 = vmax.f32 %v422, %v469
        %v498 = vmax.f32 %v423, %v488
        %v499 = vmax.f32 %v424, %v471
        %v500 = vmax.f32 %v425, %v490
        %v501 = vmax.f32 %v426, %v474
        %v502 = vmax.f32 %v427, %v493
        %v503 = vmax.f32 %v428, %v476
        %v504 = vmax.f32 %v429, %v495
        %s505 = scalar_lea.vmem %s241, 96 [#allocation2]
        %v506 = vld [vmem:[%s505] sm:$0xff]
        %v507 = vld [vmem:[%s505 + $0x8] sm:$0xff]
        %v508 = vld [vmem:[%s505 + $0x10] sm:$0xff]
        %v509 = vld [vmem:[%s505 + $0x18] sm:$0x33]
        %v514 = vunpack.c.l.b16 %v506
        %v515 = vunpack.c.h.b16 %v506
        %v516 = vunpack.c.l.b16 %v507
        %v517 = vunpack.c.h.b16 %v507
        %v518 = vunpack.c.l.b16 %v508
        %v519 = vunpack.c.h.b16 %v508
        %v520 = vunpack.c.l.b16 %v509
        %v521 = vunpack.c.h.b16 %v509
        %v522 = vpack.c.b16 %v516, %v514
        %v523 = vpack.c.b16 %v517, %v515
        %v524 = vpack.c.b16 %v520, %v518
        %v525 = vpack.c.b16 %v521, %v519
        %v529 = vand.u32 %v524, %v310
        %v532 = vand.u32 %v525, %v310
        %534 = vmatpush.bf16.msra.mxu0 0
        %535 = vmatpush.bf16.msra.mxu0 0
        %536 = vmatpush.bf16.msra.mxu0 0
        %537 = vmatpush.bf16.msra.mxu0 0
        %538 = vmatpush.bf16.msra.mxu0 0
        %539 = vmatpush.bf16.msra.mxu0 0
        %540 = vmatpush.bf16.msra.mxu0 %v529
        %541 = vmatpush.bf16.msra.mxu0 %v522
        %542 = vmatmul.bf16.gmra.mxu0 %v302
        %v543 = vpop.f32.mrf.mxu0
        %v544 = vadd.f32 0.0, %v543
        %v545 = vpop.f32.mrf.mxu0
        %v546 = vadd.f32 0.0, %v545
        %547 = vmatmul.bf16.gmra.mxu0 %v305
        %v548 = vpop.f32.mrf.mxu0
        %v549 = vadd.f32 0.0, %v548
        %v550 = vpop.f32.mrf.mxu0
        %v551 = vadd.f32 0.0, %v550
        %552 = vdwg.mxu0
        %553 = vmatpush.bf16.msra.mxu0 0
        %554 = vmatpush.bf16.msra.mxu0 0
        %555 = vmatpush.bf16.msra.mxu0 0
        %556 = vmatpush.bf16.msra.mxu0 0
        %557 = vmatpush.bf16.msra.mxu0 0
        %558 = vmatpush.bf16.msra.mxu0 0
        %559 = vmatpush.bf16.msra.mxu0 %v532
        %560 = vmatpush.bf16.msra.mxu0 %v523
        %561 = vmatmul.bf16.gmra.mxu0 %v302
        %v562 = vpop.f32.mrf.mxu0
        %v563 = vadd.f32 0.0, %v562
        %v564 = vpop.f32.mrf.mxu0
        %v565 = vadd.f32 0.0, %v564
        %566 = vmatmul.bf16.gmra.mxu0 %v305
        %v567 = vpop.f32.mrf.mxu0
        %v568 = vadd.f32 0.0, %v567
        %v569 = vpop.f32.mrf.mxu0
        %v570 = vadd.f32 0.0, %v569
        %571 = vdwg.mxu0
        %v572 = vmax.f32 %v497, %v544
        %v573 = vmax.f32 %v498, %v563
        %v574 = vmax.f32 %v499, %v546
        %v575 = vmax.f32 %v500, %v565
        %v576 = vmax.f32 %v501, %v549
        %v577 = vmax.f32 %v502, %v568
        %v578 = vmax.f32 %v503, %v551
        %v579 = vmax.f32 %v504, %v570
        %v580 = vld [vmem:[%s2] sm:$0xff]
        %v581 = vld [vmem:[%s2 + $0x8] sm:$0xff]
        %v582 = vld [vmem:[%s2 + $0x10] sm:$0xff]
        %v583 = vld [vmem:[%s2 + $0x18] sm:$0xff]
        %585 = vset.pattern.permute.xlu0 0
        %586 = vperm.xlu0 %585, %v580
        %v587 = vpop.permute.xlu0 %586
        %590 = vset.pattern.permute.xlu0 0
        %591 = vperm.xlu0 %590, %v581
        %v592 = vpop.permute.xlu0 %591
        %595 = vset.pattern.permute.xlu0 0
        %596 = vperm.xlu0 %595, %v582
        %v597 = vpop.permute.xlu0 %596
        %600 = vset.pattern.permute.xlu0 0
        %601 = vperm.xlu0 %600, %v583
        %v602 = vpop.permute.xlu0 %601
        %v604 = vadd.f32 %v572, %v587
        %v605 = vadd.f32 %v573, %v587
        %v606 = vadd.f32 %v574, %v592
        %v607 = vadd.f32 %v575, %v592
        %v608 = vadd.f32 %v576, %v597
        %v609 = vadd.f32 %v577, %v597
        %v610 = vadd.f32 %v578, %v602
        %v611 = vadd.f32 %v579, %v602
        %v612 = vmax.f32 %v604, 0.0
        %v613 = vmax.f32 %v605, 0.0
        %v614 = vmax.f32 %v606, 0.0
        %v615 = vmax.f32 %v607, 0.0
        %v616 = vmax.f32 %v608, 0.0
        %v617 = vmax.f32 %v609, 0.0
        %v618 = vmax.f32 %v610, 0.0
        %v619 = vmax.f32 %v611, 0.0
        %620 = vst [vmem:[%s260] sm:$0xff] %v612
        %621 = vst [vmem:[%s260 + $0x8] sm:$0xff] %v613
        %622 = vst [vmem:[%s260 + $0x10] sm:$0xff] %v614
        %623 = vst [vmem:[%s260 + $0x18] sm:$0xff] %v615
        %624 = vst [vmem:[%s260 + $0x20] sm:$0xff] %v616
        %625 = vst [vmem:[%s260 + $0x28] sm:$0xff] %v617
        %626 = vst [vmem:[%s260 + $0x30] sm:$0xff] %v618
        %627 = vst [vmem:[%s260 + $0x38] sm:$0xff] %v619
        %s628 = sand.u32 %s90, 1
        %s629 = sand.u32 %s90, 1
        %s630 = smul.addr %s629, 64
        %s631 = scalar_lea.vmem [#allocation3], %s630
        // Predicated region
        $region71: #{simple_cnn_forward.3} parent=65 // pred_check
          %p632 = pneg %p100
        $region72: #{simple_cnn_forward.3} parent=65 // pred_check_branch
          %634 = sbr.rel (%p632) target = $region74
        $region73: #{simple_cnn_forward.3} parent=65 // pred_region
          %s635 = smul.u32 2, %s14
          %s636 = smul.addr %s635, 8
          %s637 = scalar_lea.vmem %s3, %s636
          // Predicated region
          $region75: #{simple_cnn_forward.3} parent=73 // pred_check
            _
          $region76: #{simple_cnn_forward.3} parent=73 // pred_check_branch
            %639 = sbr.rel (0) target = $region78
          $region77: #{simple_cnn_forward.3} parent=73 // pred_region
            // Predicated region
            $region79: #{simple_cnn_forward.3} parent=77 // pred_check
              _
            $region80: #{simple_cnn_forward.3} parent=77 // pred_check_branch
              %641 = sbr.rel (0) target = $region82
            $region81: #{simple_cnn_forward.3} parent=77 // pred_region
              loop: start=0, step=1, limit=1
              $region83: #{simple_cnn_forward.3} parent=81 // loop_pre_header
                _
              $region84: #{simple_cnn_forward.3} parent=81 // loop_header
                %s643 = sphi 0, %s647
                %p644 = scmp.ge.s32.totalorder %s643, 1
                %s648 = sphi %s631, %s631
                %s649 = sphi %s637, %s637
              $region85: #{simple_cnn_forward.3} parent=81 // loop_header_branch
                %646 = sbr.rel (%p644) target = $region89
              $region86: #{simple_cnn_forward.3} parent=81 // loop_body
                %v650 = vld [vmem:[%s648] sm:$0xff]
                %651 = vst [vmem:[%s649] sm:$0xff] %v650
                %v652 = vld [vmem:[%s648 + $0x8] sm:$0xff]
                %653 = vst [vmem:[%s649 + $0x8] sm:$0xff] %v652
                %v654 = vld [vmem:[%s648 + $0x10] sm:$0xff]
                %655 = vst [vmem:[%s649 + $0x20] sm:$0xff] %v654
                %v656 = vld [vmem:[%s648 + $0x18] sm:$0xff]
                %657 = vst [vmem:[%s649 + $0x28] sm:$0xff] %v656
                %v658 = vld [vmem:[%s648 + $0x20] sm:$0xff]
                %659 = vst [vmem:[%s649 + $0x40] sm:$0xff] %v658
                %v660 = vld [vmem:[%s648 + $0x28] sm:$0xff]
                %661 = vst [vmem:[%s649 + $0x48] sm:$0xff] %v660
                %v662 = vld [vmem:[%s648 + $0x30] sm:$0xff]
                %663 = vst [vmem:[%s649 + $0x60] sm:$0xff] %v662
                %v664 = vld [vmem:[%s648 + $0x38] sm:$0xff]
                %665 = vst [vmem:[%s649 + $0x68] sm:$0xff] %v664
              $region87: #{simple_cnn_forward.3} parent=81 // loop_footer
                %s647 = sadd.s32 1, %s643
              $region88: #{simple_cnn_forward.3} parent=81 // loop_footer_branch
                %642 = sbr.rel target = $region84
              $region89: #{simple_cnn_forward.3} parent=81 // loop_exit
                _
            $region82: #{simple_cnn_forward.3} parent=77 // pred_fallthru
              _
            // Predicated region
            $region90: #{simple_cnn_forward.3} parent=77 // pred_check
              _
            $region91: #{simple_cnn_forward.3} parent=77 // pred_check_branch
              %667 = sbr.rel target = $region93
            $region92: #{simple_cnn_forward.3} parent=77 // pred_region
              _
            $region93: #{simple_cnn_forward.3} parent=77 // pred_fallthru
              _
          $region78: #{simple_cnn_forward.3} parent=73 // pred_fallthru
            _
          %668 = vnop
        $region74: #{simple_cnn_forward.3} parent=65 // pred_fallthru
          _
      $region66: #{simple_cnn_forward.3} parent=5 // pred_fallthru
        _
      %p669 = scmp.le.s32.totalorder 2, %s9
      // Predicated region
      $region94: #{simple_cnn_forward.3} parent=5 // pred_check
        %p670 = pneg %p669
      $region95: #{simple_cnn_forward.3} parent=5 // pred_check_branch
        %672 = sbr.rel (%p670) target = $region97
      $region96: #{simple_cnn_forward.3} parent=5 // pred_region
        %s673 = ssub.s32 %s9, 2
        // Predicated region
        $region98: #{simple_cnn_forward.3} parent=96 // pred_check
          %p674 = pneg %p106
        $region99: #{simple_cnn_forward.3} parent=96 // pred_check_branch
          %676 = sbr.rel (%p674) target = $region101
        $region100: #{simple_cnn_forward.3} parent=96 // pred_region
          %s677 = sand.u32 %s91, 1
          %s678 = sand.u32 %s91, 1
          %s679 = smul.addr %s678, 64
          %s680 = scalar_lea.vmem [#allocation3], %s679
        $region101: #{simple_cnn_forward.3} parent=96 // pred_fallthru
          _
      $region97: #{simple_cnn_forward.3} parent=5 // pred_fallthru
        _
    $region6: #{simple_cnn_forward.3} parent=1 // loop_footer
      %s13 = sadd.s32 1, %s9
    $region7: #{simple_cnn_forward.3} parent=1 // loop_footer_branch
      %8 = sbr.rel target = $region3
    $region8: #{simple_cnn_forward.3} parent=1 // loop_exit
      _

// kernel: simple_cnn_forward.4
$region0: #{simple_cnn_forward.4}
  #allocation0 [shape = 'u32[]', space=smem, size = 0x4, offset = 0x4, fixed_abs, tag = 'smem constant byte address 0x4 - core index']
  #allocation1 [shape = 'u32[72,128]{1,0:T(1,128)}', space=vmem, size = 0x9000, scoped, tag = 'internal scratch']
  %s0 = inlined_call_operand.vmem [shape: bf16[4,288,128], index: 0, kind: input, shape index: {}]
  %s1 = inlined_call_operand.vmem [shape: bf16[64,288], index: 1, kind: input, shape index: {}]
  %s2 = inlined_call_operand.vmem [shape: f32[64,1], index: 2, kind: input, shape index: {}]
  %s3 = inlined_call_operand.vmem [shape: f32[64,128], index: 3, kind: output, shape index: {}]
  %s4 = sld [smem:[#allocation0]]
  $region22: #{simple_cnn_forward.4} parent=0
    _
  %s6 = ssub.s32 1, %s4
  %s7 = scalar_select 0, %s6, %s4
  // Predicated region
  $region2: #{simple_cnn_forward.4} parent=0 // pred_check
    _
  $region3: #{simple_cnn_forward.4} parent=0 // pred_check_branch
    %9 = sbr.rel (0) target = $region5
  $region4: #{simple_cnn_forward.4} parent=0 // pred_region
    _
  $region5: #{simple_cnn_forward.4} parent=0 // pred_fallthru
    _
  // Predicated region
  $region6: #{simple_cnn_forward.4} parent=0 // pred_check
    _
  $region7: #{simple_cnn_forward.4} parent=0 // pred_check_branch
    %11 = sbr.rel (0) target = $region9
  $region8: #{simple_cnn_forward.4} parent=0 // pred_region
    _
  $region9: #{simple_cnn_forward.4} parent=0 // pred_fallthru
    _
  // Predicated region
  $region10: #{simple_cnn_forward.4} parent=0 // pred_check
    _
  $region11: #{simple_cnn_forward.4} parent=0 // pred_check_branch
    %13 = sbr.rel (0) target = $region13
  $region12: #{simple_cnn_forward.4} parent=0 // pred_region
    _
  $region13: #{simple_cnn_forward.4} parent=0 // pred_fallthru
    _
  %v15 = vld [vmem:[%s1] sm:$0xff]
  %v16 = vld [vmem:[%s1 + $0x8] sm:$0xf]
  %v17 = vld [vmem:[%s1 + $0xc] sm:$0xff]
  %v18 = vld [vmem:[%s1 + $0x14] sm:$0xf]
  %v19 = vld [vmem:[%s1 + $0x18] sm:$0xff]
  %v20 = vld [vmem:[%s1 + $0x20] sm:$0xf]
  %v21 = vld [vmem:[%s1 + $0x24] sm:$0xff]
  %v22 = vld [vmem:[%s1 + $0x2c] sm:$0xf]
  %v23 = vld [vmem:[%s1 + $0x30] sm:$0xff]
  %v24 = vld [vmem:[%s1 + $0x38] sm:$0xf]
  %v25 = vld [vmem:[%s1 + $0x3c] sm:$0xff]
  %v26 = vld [vmem:[%s1 + $0x44] sm:$0xf]
  %v27 = vld [vmem:[%s1 + $0x48] sm:$0xff]
  %v28 = vld [vmem:[%s1 + $0x50] sm:$0xf]
  %v29 = vld [vmem:[%s1 + $0x54] sm:$0xff]
  %v30 = vld [vmem:[%s1 + $0x5c] sm:$0xf]
  %v31 = vld [vmem:[%s0] sm:$0xf]
  %v32 = vld [vmem:[%s0 + $0x4] sm:$0xf]
  %v33 = vld [vmem:[%s0 + $0x8] sm:$0xf]
  %v34 = vld [vmem:[%s0 + $0xc] sm:$0xf]
  %v35 = vld [vmem:[%s0 + $0x10] sm:$0xf]
  %v36 = vld [vmem:[%s0 + $0x14] sm:$0xf]
  %v37 = vld [vmem:[%s0 + $0x18] sm:$0xf]
  %v38 = vld [vmem:[%s0 + $0x1c] sm:$0xf]
  %v39 = vld [vmem:[%s0 + $0x20] sm:$0xf]
  %v40 = vld [vmem:[%s0 + $0x24] sm:$0xf]
  %v41 = vld [vmem:[%s0 + $0x28] sm:$0xf]
  %v42 = vld [vmem:[%s0 + $0x2c] sm:$0xf]
  %v43 = vld [vmem:[%s0 + $0x30] sm:$0xf]
  %v44 = vld [vmem:[%s0 + $0x34] sm:$0xf]
  %v45 = vld [vmem:[%s0 + $0x38] sm:$0xf]
  %v46 = vld [vmem:[%s0 + $0x3c] sm:$0xf]
  %v47 = vld [vmem:[%s0 + $0x40] sm:$0xf]
  %v48 = vld [vmem:[%s0 + $0x44] sm:$0xf]
  %v49 = vld [vmem:[%s0 + $0x48] sm:$0xf]
  %v50 = vld [vmem:[%s0 + $0x4c] sm:$0xf]
  %v51 = vld [vmem:[%s0 + $0x50] sm:$0xf]
  %v52 = vld [vmem:[%s0 + $0x54] sm:$0xf]
  %v53 = vld [vmem:[%s0 + $0x58] sm:$0xf]
  %v54 = vld [vmem:[%s0 + $0x5c] sm:$0xf]
  %v55 = vld [vmem:[%s0 + $0x60] sm:$0xf]
  %v56 = vld [vmem:[%s0 + $0x64] sm:$0xf]
  %v57 = vld [vmem:[%s0 + $0x68] sm:$0xf]
  %v58 = vld [vmem:[%s0 + $0x6c] sm:$0xf]
  %v59 = vld [vmem:[%s0 + $0x70] sm:$0xf]
  %v60 = vld [vmem:[%s0 + $0x74] sm:$0xf]
  %v61 = vld [vmem:[%s0 + $0x78] sm:$0xf]
  %v62 = vld [vmem:[%s0 + $0x7c] sm:$0xf]
  %v63 = vld [vmem:[%s0 + $0x80] sm:$0xf]
  %v64 = vld [vmem:[%s0 + $0x84] sm:$0xf]
  %v65 = vld [vmem:[%s0 + $0x88] sm:$0xf]
  %v66 = vld [vmem:[%s0 + $0x8c] sm:$0xf]
  %v83 = vunpack.c.l.b16 %v15
  %v84 = vunpack.c.h.b16 %v15
  %v85 = vunpack.c.l.b16 %v16
  %v86 = vunpack.c.l.b16 %v17
  %v87 = vunpack.c.h.b16 %v17
  %v88 = vunpack.c.l.b16 %v18
  %v89 = vunpack.c.l.b16 %v19
  %v90 = vunpack.c.h.b16 %v19
  %v91 = vunpack.c.l.b16 %v20
  %v92 = vunpack.c.l.b16 %v21
  %v93 = vunpack.c.h.b16 %v21
  %v94 = vunpack.c.l.b16 %v22
  %v95 = vunpack.c.l.b16 %v23
  %v96 = vunpack.c.h.b16 %v23
  %v97 = vunpack.c.l.b16 %v24
  %v98 = vunpack.c.l.b16 %v25
  %v99 = vunpack.c.h.b16 %v25
  %v100 = vunpack.c.l.b16 %v26
  %v101 = vunpack.c.l.b16 %v27
  %v102 = vunpack.c.h.b16 %v27
  %v103 = vunpack.c.l.b16 %v28
  %v104 = vunpack.c.l.b16 %v29
  %v105 = vunpack.c.h.b16 %v29
  %v106 = vunpack.c.l.b16 %v30
  %v107 = vpack.c.b16 %v86, %v83
  %v108 = vpack.c.b16 %v87, %v84
  %v109 = vpack.c.b16 %v88, %v85
  %v110 = vpack.c.b16 %v92, %v89
  %v111 = vpack.c.b16 %v93, %v90
  %v112 = vpack.c.b16 %v94, %v91
  %v113 = vpack.c.b16 %v98, %v95
  %v114 = vpack.c.b16 %v99, %v96
  %v115 = vpack.c.b16 %v100, %v97
  %v116 = vpack.c.b16 %v104, %v101
  %v117 = vpack.c.b16 %v105, %v102
  %v118 = vpack.c.b16 %v106, %v103
  %v163 = vunpack.c.l.b16 %v31
  %v164 = vunpack.c.l.b16 %v32
  %v165 = vunpack.c.l.b16 %v33
  %v166 = vunpack.c.l.b16 %v34
  %v167 = vunpack.c.l.b16 %v35
  %v168 = vunpack.c.l.b16 %v36
  %v169 = vunpack.c.l.b16 %v37
  %v170 = vunpack.c.l.b16 %v38
  %v171 = vunpack.c.l.b16 %v39
  %v172 = vunpack.c.l.b16 %v40
  %v173 = vunpack.c.l.b16 %v41
  %v174 = vunpack.c.l.b16 %v42
  %v175 = vunpack.c.l.b16 %v43
  %v176 = vunpack.c.l.b16 %v44
  %v177 = vunpack.c.l.b16 %v45
  %v178 = vunpack.c.l.b16 %v46
  %v179 = vunpack.c.l.b16 %v47
  %v180 = vunpack.c.l.b16 %v48
  %v181 = vunpack.c.l.b16 %v49
  %v182 = vunpack.c.l.b16 %v50
  %v183 = vunpack.c.l.b16 %v51
  %v184 = vunpack.c.l.b16 %v52
  %v185 = vunpack.c.l.b16 %v53
  %v186 = vunpack.c.l.b16 %v54
  %v187 = vunpack.c.l.b16 %v55
  %v188 = vunpack.c.l.b16 %v56
  %v189 = vunpack.c.l.b16 %v57
  %v190 = vunpack.c.l.b16 %v58
  %v191 = vunpack.c.l.b16 %v59
  %v192 = vunpack.c.l.b16 %v60
  %v193 = vunpack.c.l.b16 %v61
  %v194 = vunpack.c.l.b16 %v62
  %v195 = vunpack.c.l.b16 %v63
  %v196 = vunpack.c.l.b16 %v64
  %v197 = vunpack.c.l.b16 %v65
  %v198 = vunpack.c.l.b16 %v66
  %v199 = vpack.c.b16 %v164, %v163
  %v200 = vpack.c.b16 %v166, %v165
  %v201 = vpack.c.b16 %v168, %v167
  %v202 = vpack.c.b16 %v170, %v169
  %v203 = vpack.c.b16 %v172, %v171
  %v204 = vpack.c.b16 %v174, %v173
  %v205 = vpack.c.b16 %v176, %v175
  %v206 = vpack.c.b16 %v178, %v177
  %v207 = vpack.c.b16 %v180, %v179
  %v208 = vpack.c.b16 %v182, %v181
  %v209 = vpack.c.b16 %v184, %v183
  %v210 = vpack.c.b16 %v186, %v185
  %v211 = vpack.c.b16 %v188, %v187
  %v212 = vpack.c.b16 %v190, %v189
  %v213 = vpack.c.b16 %v192, %v191
  %v214 = vpack.c.b16 %v194, %v193
  %v215 = vpack.c.b16 %v196, %v195
  %v216 = vpack.c.b16 %v198, %v197
  %vm235 = vcmask 261120
  %v237 = vsel %vm235, %v109, 0
  %v240 = vsel %vm235, %v112, 0
  %v243 = vsel %vm235, %v115, 0
  %v246 = vsel %vm235, %v118, 0
  %248 = vmatpush.bf16.msra.mxu0 %v206
  %249 = vmatpush.bf16.msra.mxu0 %v205
  %250 = vmatpush.bf16.msra.mxu0 %v204
  %251 = vmatpush.bf16.msra.mxu0 %v203
  %252 = vmatpush.bf16.msra.mxu0 %v202
  %253 = vmatpush.bf16.msra.mxu0 %v201
  %254 = vmatpush.bf16.msra.mxu0 %v200
  %255 = vmatpush.bf16.msra.mxu0 %v199
  %256 = vmatmul.bf16.gmra.mxu0 %v107
  %v257 = vpop.f32.mrf.mxu0
  %v258 = vadd.f32 0.0, %v257
  %v259 = vpop.f32.mrf.mxu0
  %v260 = vadd.f32 0.0, %v259
  %261 = vmatmul.bf16.gmra.mxu0 %v110
  %v262 = vpop.f32.mrf.mxu0
  %v263 = vadd.f32 0.0, %v262
  %v264 = vpop.f32.mrf.mxu0
  %v265 = vadd.f32 0.0, %v264
  %266 = vmatmul.bf16.gmra.mxu0 %v113
  %v267 = vpop.f32.mrf.mxu0
  %v268 = vadd.f32 0.0, %v267
  %v269 = vpop.f32.mrf.mxu0
  %v270 = vadd.f32 0.0, %v269
  %271 = vmatmul.bf16.gmra.mxu0 %v116
  %v272 = vpop.f32.mrf.mxu0
  %v273 = vadd.f32 0.0, %v272
  %v274 = vpop.f32.mrf.mxu0
  %v275 = vadd.f32 0.0, %v274
  %276 = vdwg.mxu0
  %277 = vmatpush.bf16.msra.mxu0 %v214
  %278 = vmatpush.bf16.msra.mxu0 %v213
  %279 = vmatpush.bf16.msra.mxu0 %v212
  %280 = vmatpush.bf16.msra.mxu0 %v211
  %281 = vmatpush.bf16.msra.mxu0 %v210
  %282 = vmatpush.bf16.msra.mxu0 %v209
  %283 = vmatpush.bf16.msra.mxu0 %v208
  %284 = vmatpush.bf16.msra.mxu0 %v207
  %285 = vmatmul.bf16.gmra.mxu0 %v108
  %v286 = vpop.f32.mrf.mxu0
  %v287 = vadd.f32 %v258, %v286
  %v288 = vpop.f32.mrf.mxu0
  %v289 = vadd.f32 %v260, %v288
  %290 = vmatmul.bf16.gmra.mxu0 %v111
  %v291 = vpop.f32.mrf.mxu0
  %v292 = vadd.f32 %v263, %v291
  %v293 = vpop.f32.mrf.mxu0
  %v294 = vadd.f32 %v265, %v293
  %295 = vmatmul.bf16.gmra.mxu0 %v114
  %v296 = vpop.f32.mrf.mxu0
  %v297 = vadd.f32 %v268, %v296
  %v298 = vpop.f32.mrf.mxu0
  %v299 = vadd.f32 %v270, %v298
  %300 = vmatmul.bf16.gmra.mxu0 %v117
  %v301 = vpop.f32.mrf.mxu0
  %v302 = vadd.f32 %v273, %v301
  %v303 = vpop.f32.mrf.mxu0
  %v304 = vadd.f32 %v275, %v303
  %305 = vdwg.mxu0
  %306 = vmatpush.bf16.msra.mxu0 0
  %307 = vmatpush.bf16.msra.mxu0 0
  %308 = vmatpush.bf16.msra.mxu0 0
  %309 = vmatpush.bf16.msra.mxu0 0
  %310 = vmatpush.bf16.msra.mxu0 0
  %311 = vmatpush.bf16.msra.mxu0 0
  %312 = vmatpush.bf16.msra.mxu0 %v216
  %313 = vmatpush.bf16.msra.mxu0 %v215
  %314 = vmatmul.bf16.gmra.mxu0 %v237
  %v315 = vpop.f32.mrf.mxu0
  %v316 = vadd.f32 %v287, %v315
  %v317 = vpop.f32.mrf.mxu0
  %v318 = vadd.f32 %v289, %v317
  %319 = vmatmul.bf16.gmra.mxu0 %v240
  %v320 = vpop.f32.mrf.mxu0
  %v321 = vadd.f32 %v292, %v320
  %v322 = vpop.f32.mrf.mxu0
  %v323 = vadd.f32 %v294, %v322
  %324 = vmatmul.bf16.gmra.mxu0 %v243
  %v325 = vpop.f32.mrf.mxu0
  %v326 = vadd.f32 %v297, %v325
  %v327 = vpop.f32.mrf.mxu0
  %v328 = vadd.f32 %v299, %v327
  %329 = vmatmul.bf16.gmra.mxu0 %v246
  %v330 = vpop.f32.mrf.mxu0
  %v331 = vadd.f32 %v302, %v330
  %v332 = vpop.f32.mrf.mxu0
  %v333 = vadd.f32 %v304, %v332
  %334 = vdwg.mxu0
  %s335 = scalar_lea.vmem %s0, 144
  %v336 = vld [vmem:[%s335] sm:$0xf]
  %v337 = vld [vmem:[%s335 + $0x4] sm:$0xf]
  %v338 = vld [vmem:[%s335 + $0x8] sm:$0xf]
  %v339 = vld [vmem:[%s335 + $0xc] sm:$0xf]
  %v340 = vld [vmem:[%s335 + $0x10] sm:$0xf]
  %v341 = vld [vmem:[%s335 + $0x14] sm:$0xf]
  %v342 = vld [vmem:[%s335 + $0x18] sm:$0xf]
  %v343 = vld [vmem:[%s335 + $0x1c] sm:$0xf]
  %v344 = vld [vmem:[%s335 + $0x20] sm:$0xf]
  %v345 = vld [vmem:[%s335 + $0x24] sm:$0xf]
  %v346 = vld [vmem:[%s335 + $0x28] sm:$0xf]
  %v347 = vld [vmem:[%s335 + $0x2c] sm:$0xf]
  %v348 = vld [vmem:[%s335 + $0x30] sm:$0xf]
  %v349 = vld [vmem:[%s335 + $0x34] sm:$0xf]
  %v350 = vld [vmem:[%s335 + $0x38] sm:$0xf]
  %v351 = vld [vmem:[%s335 + $0x3c] sm:$0xf]
  %v352 = vld [vmem:[%s335 + $0x40] sm:$0xf]
  %v353 = vld [vmem:[%s335 + $0x44] sm:$0xf]
  %v354 = vld [vmem:[%s335 + $0x48] sm:$0xf]
  %v355 = vld [vmem:[%s335 + $0x4c] sm:$0xf]
  %v356 = vld [vmem:[%s335 + $0x50] sm:$0xf]
  %v357 = vld [vmem:[%s335 + $0x54] sm:$0xf]
  %v358 = vld [vmem:[%s335 + $0x58] sm:$0xf]
  %v359 = vld [vmem:[%s335 + $0x5c] sm:$0xf]
  %v360 = vld [vmem:[%s335 + $0x60] sm:$0xf]
  %v361 = vld [vmem:[%s335 + $0x64] sm:$0xf]
  %v362 = vld [vmem:[%s335 + $0x68] sm:$0xf]
  %v363 = vld [vmem:[%s335 + $0x6c] sm:$0xf]
  %v364 = vld [vmem:[%s335 + $0x70] sm:$0xf]
  %v365 = vld [vmem:[%s335 + $0x74] sm:$0xf]
  %v366 = vld [vmem:[%s335 + $0x78] sm:$0xf]
  %v367 = vld [vmem:[%s335 + $0x7c] sm:$0xf]
  %v368 = vld [vmem:[%s335 + $0x80] sm:$0xf]
  %v369 = vld [vmem:[%s335 + $0x84] sm:$0xf]
  %v370 = vld [vmem:[%s335 + $0x88] sm:$0xf]
  %v371 = vld [vmem:[%s335 + $0x8c] sm:$0xf]
  %v408 = vunpack.c.l.b16 %v336
  %v409 = vunpack.c.l.b16 %v337
  %v410 = vunpack.c.l.b16 %v338
  %v411 = vunpack.c.l.b16 %v339
  %v412 = vunpack.c.l.b16 %v340
  %v413 = vunpack.c.l.b16 %v341
  %v414 = vunpack.c.l.b16 %v342
  %v415 = vunpack.c.l.b16 %v343
  %v416 = vunpack.c.l.b16 %v344
  %v417 = vunpack.c.l.b16 %v345
  %v418 = vunpack.c.l.b16 %v346
  %v419 = vunpack.c.l.b16 %v347
  %v420 = vunpack.c.l.b16 %v348
  %v421 = vunpack.c.l.b16 %v349
  %v422 = vunpack.c.l.b16 %v350
  %v423 = vunpack.c.l.b16 %v351
  %v424 = vunpack.c.l.b16 %v352
  %v425 = vunpack.c.l.b16 %v353
  %v426 = vunpack.c.l.b16 %v354
  %v427 = vunpack.c.l.b16 %v355
  %v428 = vunpack.c.l.b16 %v356
  %v429 = vunpack.c.l.b16 %v357
  %v430 = vunpack.c.l.b16 %v358
  %v431 = vunpack.c.l.b16 %v359
  %v432 = vunpack.c.l.b16 %v360
  %v433 = vunpack.c.l.b16 %v361
  %v434 = vunpack.c.l.b16 %v362
  %v435 = vunpack.c.l.b16 %v363
  %v436 = vunpack.c.l.b16 %v364
  %v437 = vunpack.c.l.b16 %v365
  %v438 = vunpack.c.l.b16 %v366
  %v439 = vunpack.c.l.b16 %v367
  %v440 = vunpack.c.l.b16 %v368
  %v441 = vunpack.c.l.b16 %v369
  %v442 = vunpack.c.l.b16 %v370
  %v443 = vunpack.c.l.b16 %v371
  %v444 = vpack.c.b16 %v409, %v408
  %v445 = vpack.c.b16 %v411, %v410
  %v446 = vpack.c.b16 %v413, %v412
  %v447 = vpack.c.b16 %v415, %v414
  %v448 = vpack.c.b16 %v417, %v416
  %v449 = vpack.c.b16 %v419, %v418
  %v450 = vpack.c.b16 %v421, %v420
  %v451 = vpack.c.b16 %v423, %v422
  %v452 = vpack.c.b16 %v425, %v424
  %v453 = vpack.c.b16 %v427, %v426
  %v454 = vpack.c.b16 %v429, %v428
  %v455 = vpack.c.b16 %v431, %v430
  %v456 = vpack.c.b16 %v433, %v432
  %v457 = vpack.c.b16 %v435, %v434
  %v458 = vpack.c.b16 %v437, %v436
  %v459 = vpack.c.b16 %v439, %v438
  %v460 = vpack.c.b16 %v441, %v440
  %v461 = vpack.c.b16 %v443, %v442
  %480 = vmatpush.bf16.msra.mxu0 %v451
  %481 = vmatpush.bf16.msra.mxu0 %v450
  %482 = vmatpush.bf16.msra.mxu0 %v449
  %483 = vmatpush.bf16.msra.mxu0 %v448
  %484 = vmatpush.bf16.msra.mxu0 %v447
  %485 = vmatpush.bf16.msra.mxu0 %v446
  %486 = vmatpush.bf16.msra.mxu0 %v445
  %487 = vmatpush.bf16.msra.mxu0 %v444
  %488 = vmatmul.bf16.gmra.mxu0 %v107
  %v489 = vpop.f32.mrf.mxu0
  %v490 = vadd.f32 0.0, %v489
  %v491 = vpop.f32.mrf.mxu0
  %v492 = vadd.f32 0.0, %v491
  %493 = vmatmul.bf16.gmra.mxu0 %v110
  %v494 = vpop.f32.mrf.mxu0
  %v495 = vadd.f32 0.0, %v494
  %v496 = vpop.f32.mrf.mxu0
  %v497 = vadd.f32 0.0, %v496
  %498 = vmatmul.bf16.gmra.mxu0 %v113
  %v499 = vpop.f32.mrf.mxu0
  %v500 = vadd.f32 0.0, %v499
  %v501 = vpop.f32.mrf.mxu0
  %v502 = vadd.f32 0.0, %v501
  %503 = vmatmul.bf16.gmra.mxu0 %v116
  %v504 = vpop.f32.mrf.mxu0
  %v505 = vadd.f32 0.0, %v504
  %v506 = vpop.f32.mrf.mxu0
  %v507 = vadd.f32 0.0, %v506
  %508 = vdwg.mxu0
  %509 = vmatpush.bf16.msra.mxu0 %v459
  %510 = vmatpush.bf16.msra.mxu0 %v458
  %511 = vmatpush.bf16.msra.mxu0 %v457
  %512 = vmatpush.bf16.msra.mxu0 %v456
  %513 = vmatpush.bf16.msra.mxu0 %v455
  %514 = vmatpush.bf16.msra.mxu0 %v454
  %515 = vmatpush.bf16.msra.mxu0 %v453
  %516 = vmatpush.bf16.msra.mxu0 %v452
  %517 = vmatmul.bf16.gmra.mxu0 %v108
  %v518 = vpop.f32.mrf.mxu0
  %v519 = vadd.f32 %v490, %v518
  %v520 = vpop.f32.mrf.mxu0
  %v521 = vadd.f32 %v492, %v520
  %522 = vmatmul.bf16.gmra.mxu0 %v111
  %v523 = vpop.f32.mrf.mxu0
  %v524 = vadd.f32 %v495, %v523
  %v525 = vpop.f32.mrf.mxu0
  %v526 = vadd.f32 %v497, %v525
  %527 = vmatmul.bf16.gmra.mxu0 %v114
  %v528 = vpop.f32.mrf.mxu0
  %v529 = vadd.f32 %v500, %v528
  %v530 = vpop.f32.mrf.mxu0
  %v531 = vadd.f32 %v502, %v530
  %532 = vmatmul.bf16.gmra.mxu0 %v117
  %v533 = vpop.f32.mrf.mxu0
  %v534 = vadd.f32 %v505, %v533
  %v535 = vpop.f32.mrf.mxu0
  %v536 = vadd.f32 %v507, %v535
  %537 = vdwg.mxu0
  %538 = vmatpush.bf16.msra.mxu0 0
  %539 = vmatpush.bf16.msra.mxu0 0
  %540 = vmatpush.bf16.msra.mxu0 0
  %541 = vmatpush.bf16.msra.mxu0 0
  %542 = vmatpush.bf16.msra.mxu0 0
  %543 = vmatpush.bf16.msra.mxu0 0
  %544 = vmatpush.bf16.msra.mxu0 %v461
  %545 = vmatpush.bf16.msra.mxu0 %v460
  %546 = vmatmul.bf16.gmra.mxu0 %v237
  %v547 = vpop.f32.mrf.mxu0
  %v548 = vadd.f32 %v519, %v547
  %v549 = vpop.f32.mrf.mxu0
  %v550 = vadd.f32 %v521, %v549
  %551 = vmatmul.bf16.gmra.mxu0 %v240
  %v552 = vpop.f32.mrf.mxu0
  %v553 = vadd.f32 %v524, %v552
  %v554 = vpop.f32.mrf.mxu0
  %v555 = vadd.f32 %v526, %v554
  %556 = vmatmul.bf16.gmra.mxu0 %v243
  %v557 = vpop.f32.mrf.mxu0
  %v558 = vadd.f32 %v529, %v557
  %v559 = vpop.f32.mrf.mxu0
  %v560 = vadd.f32 %v531, %v559
  %561 = vmatmul.bf16.gmra.mxu0 %v246
  %v562 = vpop.f32.mrf.mxu0
  %v563 = vadd.f32 %v534, %v562
  %v564 = vpop.f32.mrf.mxu0
  %v565 = vadd.f32 %v536, %v564
  %566 = vdwg.mxu0
  %v567 = vmax.f32 %v316, %v548
  %v568 = vmax.f32 %v318, %v550
  %v569 = vmax.f32 %v321, %v553
  %v570 = vmax.f32 %v323, %v555
  %v571 = vmax.f32 %v326, %v558
  %v572 = vmax.f32 %v328, %v560
  %v573 = vmax.f32 %v331, %v563
  %v574 = vmax.f32 %v333, %v565
  %s575 = scalar_lea.vmem %s0, 288
  %v576 = vld [vmem:[%s575] sm:$0xf]
  %v577 = vld [vmem:[%s575 + $0x4] sm:$0xf]
  %v578 = vld [vmem:[%s575 + $0x8] sm:$0xf]
  %v579 = vld [vmem:[%s575 + $0xc] sm:$0xf]
  %v580 = vld [vmem:[%s575 + $0x10] sm:$0xf]
  %v581 = vld [vmem:[%s575 + $0x14] sm:$0xf]
  %v582 = vld [vmem:[%s575 + $0x18] sm:$0xf]
  %v583 = vld [vmem:[%s575 + $0x1c] sm:$0xf]
  %v584 = vld [vmem:[%s575 + $0x20] sm:$0xf]
  %v585 = vld [vmem:[%s575 + $0x24] sm:$0xf]
  %v586 = vld [vmem:[%s575 + $0x28] sm:$0xf]
  %v587 = vld [vmem:[%s575 + $0x2c] sm:$0xf]
  %v588 = vld [vmem:[%s575 + $0x30] sm:$0xf]
  %v589 = vld [vmem:[%s575 + $0x34] sm:$0xf]
  %v590 = vld [vmem:[%s575 + $0x38] sm:$0xf]
  %v591 = vld [vmem:[%s575 + $0x3c] sm:$0xf]
  %v592 = vld [vmem:[%s575 + $0x40] sm:$0xf]
  %v593 = vld [vmem:[%s575 + $0x44] sm:$0xf]
  %v594 = vld [vmem:[%s575 + $0x48] sm:$0xf]
  %v595 = vld [vmem:[%s575 + $0x4c] sm:$0xf]
  %v596 = vld [vmem:[%s575 + $0x50] sm:$0xf]
  %v597 = vld [vmem:[%s575 + $0x54] sm:$0xf]
  %v598 = vld [vmem:[%s575 + $0x58] sm:$0xf]
  %v599 = vld [vmem:[%s575 + $0x5c] sm:$0xf]
  %v600 = vld [vmem:[%s575 + $0x60] sm:$0xf]
  %v601 = vld [vmem:[%s575 + $0x64] sm:$0xf]
  %v602 = vld [vmem:[%s575 + $0x68] sm:$0xf]
  %v603 = vld [vmem:[%s575 + $0x6c] sm:$0xf]
  %v604 = vld [vmem:[%s575 + $0x70] sm:$0xf]
  %v605 = vld [vmem:[%s575 + $0x74] sm:$0xf]
  %v606 = vld [vmem:[%s575 + $0x78] sm:$0xf]
  %v607 = vld [vmem:[%s575 + $0x7c] sm:$0xf]
  %v608 = vld [vmem:[%s575 + $0x80] sm:$0xf]
  %v609 = vld [vmem:[%s575 + $0x84] sm:$0xf]
  %v610 = vld [vmem:[%s575 + $0x88] sm:$0xf]
  %v611 = vld [vmem:[%s575 + $0x8c] sm:$0xf]
  %v648 = vunpack.c.l.b16 %v576
  %v649 = vunpack.c.l.b16 %v577
  %v650 = vunpack.c.l.b16 %v578
  %v651 = vunpack.c.l.b16 %v579
  %v652 = vunpack.c.l.b16 %v580
  %v653 = vunpack.c.l.b16 %v581
  %v654 = vunpack.c.l.b16 %v582
  %v655 = vunpack.c.l.b16 %v583
  %v656 = vunpack.c.l.b16 %v584
  %v657 = vunpack.c.l.b16 %v585
  %v658 = vunpack.c.l.b16 %v586
  %v659 = vunpack.c.l.b16 %v587
  %v660 = vunpack.c.l.b16 %v588
  %v661 = vunpack.c.l.b16 %v589
  %v662 = vunpack.c.l.b16 %v590
  %v663 = vunpack.c.l.b16 %v591
  %v664 = vunpack.c.l.b16 %v592
  %v665 = vunpack.c.l.b16 %v593
  %v666 = vunpack.c.l.b16 %v594
  %v667 = vunpack.c.l.b16 %v595
  %v668 = vunpack.c.l.b16 %v596
  %v669 = vunpack.c.l.b16 %v597
  %v670 = vunpack.c.l.b16 %v598
  %v671 = vunpack.c.l.b16 %v599
  %v672 = vunpack.c.l.b16 %v600
  %v673 = vunpack.c.l.b16 %v601
  %v674 = vunpack.c.l.b16 %v602
  %v675 = vunpack.c.l.b16 %v603
  %v676 = vunpack.c.l.b16 %v604
  %v677 = vunpack.c.l.b16 %v605
  %v678 = vunpack.c.l.b16 %v606
  %v679 = vunpack.c.l.b16 %v607
  %v680 = vunpack.c.l.b16 %v608
  %v681 = vunpack.c.l.b16 %v609
  %v682 = vunpack.c.l.b16 %v610
  %v683 = vunpack.c.l.b16 %v611
  %v684 = vpack.c.b16 %v649, %v648
  %v685 = vpack.c.b16 %v651, %v650
  %v686 = vpack.c.b16 %v653, %v652
  %v687 = vpack.c.b16 %v655, %v654
  %v688 = vpack.c.b16 %v657, %v656
  %v689 = vpack.c.b16 %v659, %v658
  %v690 = vpack.c.b16 %v661, %v660
  %v691 = vpack.c.b16 %v663, %v662
  %v692 = vpack.c.b16 %v665, %v664
  %v693 = vpack.c.b16 %v667, %v666
  %v694 = vpack.c.b16 %v669, %v668
  %v695 = vpack.c.b16 %v671, %v670
  %v696 = vpack.c.b16 %v673, %v672
  %v697 = vpack.c.b16 %v675, %v674
  %v698 = vpack.c.b16 %v677, %v676
  %v699 = vpack.c.b16 %v679, %v678
  %v700 = vpack.c.b16 %v681, %v680
  %v701 = vpack.c.b16 %v683, %v682
  %720 = vmatpush.bf16.msra.mxu0 %v691
  %721 = vmatpush.bf16.msra.mxu0 %v690
  %722 = vmatpush.bf16.msra.mxu0 %v689
  %723 = vmatpush.bf16.msra.mxu0 %v688
  %724 = vmatpush.bf16.msra.mxu0 %v687
  %725 = vmatpush.bf16.msra.mxu0 %v686
  %726 = vmatpush.bf16.msra.mxu0 %v685
  %727 = vmatpush.bf16.msra.mxu0 %v684
  %728 = vmatmul.bf16.gmra.mxu0 %v107
  %v729 = vpop.f32.mrf.mxu0
  %v730 = vadd.f32 0.0, %v729
  %v731 = vpop.f32.mrf.mxu0
  %v732 = vadd.f32 0.0, %v731
  %733 = vmatmul.bf16.gmra.mxu0 %v110
  %v734 = vpop.f32.mrf.mxu0
  %v735 = vadd.f32 0.0, %v734
  %v736 = vpop.f32.mrf.mxu0
  %v737 = vadd.f32 0.0, %v736
  %738 = vmatmul.bf16.gmra.mxu0 %v113
  %v739 = vpop.f32.mrf.mxu0
  %v740 = vadd.f32 0.0, %v739
  %v741 = vpop.f32.mrf.mxu0
  %v742 = vadd.f32 0.0, %v741
  %743 = vmatmul.bf16.gmra.mxu0 %v116
  %v744 = vpop.f32.mrf.mxu0
  %v745 = vadd.f32 0.0, %v744
  %v746 = vpop.f32.mrf.mxu0
  %v747 = vadd.f32 0.0, %v746
  %748 = vdwg.mxu0
  %749 = vmatpush.bf16.msra.mxu0 %v699
  %750 = vmatpush.bf16.msra.mxu0 %v698
  %751 = vmatpush.bf16.msra.mxu0 %v697
  %752 = vmatpush.bf16.msra.mxu0 %v696
  %753 = vmatpush.bf16.msra.mxu0 %v695
  %754 = vmatpush.bf16.msra.mxu0 %v694
  %755 = vmatpush.bf16.msra.mxu0 %v693
  %756 = vmatpush.bf16.msra.mxu0 %v692
  %757 = vmatmul.bf16.gmra.mxu0 %v108
  %v758 = vpop.f32.mrf.mxu0
  %v759 = vadd.f32 %v730, %v758
  %v760 = vpop.f32.mrf.mxu0
  %v761 = vadd.f32 %v732, %v760
  %762 = vmatmul.bf16.gmra.mxu0 %v111
  %v763 = vpop.f32.mrf.mxu0
  %v764 = vadd.f32 %v735, %v763
  %v765 = vpop.f32.mrf.mxu0
  %v766 = vadd.f32 %v737, %v765
  %767 = vmatmul.bf16.gmra.mxu0 %v114
  %v768 = vpop.f32.mrf.mxu0
  %v769 = vadd.f32 %v740, %v768
  %v770 = vpop.f32.mrf.mxu0
  %v771 = vadd.f32 %v742, %v770
  %772 = vmatmul.bf16.gmra.mxu0 %v117
  %v773 = vpop.f32.mrf.mxu0
  %v774 = vadd.f32 %v745, %v773
  %v775 = vpop.f32.mrf.mxu0
  %v776 = vadd.f32 %v747, %v775
  %777 = vdwg.mxu0
  %778 = vmatpush.bf16.msra.mxu0 0
  %779 = vmatpush.bf16.msra.mxu0 0
  %780 = vmatpush.bf16.msra.mxu0 0
  %781 = vmatpush.bf16.msra.mxu0 0
  %782 = vmatpush.bf16.msra.mxu0 0
  %783 = vmatpush.bf16.msra.mxu0 0
  %784 = vmatpush.bf16.msra.mxu0 %v701
  %785 = vmatpush.bf16.msra.mxu0 %v700
  %786 = vmatmul.bf16.gmra.mxu0 %v237
  %v787 = vpop.f32.mrf.mxu0
  %v788 = vadd.f32 %v759, %v787
  %v789 = vpop.f32.mrf.mxu0
  %v790 = vadd.f32 %v761, %v789
  %791 = vmatmul.bf16.gmra.mxu0 %v240
  %v792 = vpop.f32.mrf.mxu0
  %v793 = vadd.f32 %v764, %v792
  %v794 = vpop.f32.mrf.mxu0
  %v795 = vadd.f32 %v766, %v794
  %796 = vmatmul.bf16.gmra.mxu0 %v243
  %v797 = vpop.f32.mrf.mxu0
  %v798 = vadd.f32 %v769, %v797
  %v799 = vpop.f32.mrf.mxu0
  %v800 = vadd.f32 %v771, %v799
  %801 = vmatmul.bf16.gmra.mxu0 %v246
  %v802 = vpop.f32.mrf.mxu0
  %v803 = vadd.f32 %v774, %v802
  %v804 = vpop.f32.mrf.mxu0
  %v805 = vadd.f32 %v776, %v804
  %806 = vdwg.mxu0
  %v807 = vmax.f32 %v567, %v788
  %v808 = vmax.f32 %v568, %v790
  %v809 = vmax.f32 %v569, %v793
  %v810 = vmax.f32 %v570, %v795
  %v811 = vmax.f32 %v571, %v798
  %v812 = vmax.f32 %v572, %v800
  %v813 = vmax.f32 %v573, %v803
  %v814 = vmax.f32 %v574, %v805
  %s815 = scalar_lea.vmem %s0, 432
  %v816 = vld [vmem:[%s815] sm:$0xf]
  %v817 = vld [vmem:[%s815 + $0x4] sm:$0xf]
  %v818 = vld [vmem:[%s815 + $0x8] sm:$0xf]
  %v819 = vld [vmem:[%s815 + $0xc] sm:$0xf]
  %v820 = vld [vmem:[%s815 + $0x10] sm:$0xf]
  %v821 = vld [vmem:[%s815 + $0x14] sm:$0xf]
  %v822 = vld [vmem:[%s815 + $0x18] sm:$0xf]
  %v823 = vld [vmem:[%s815 + $0x1c] sm:$0xf]
  %v824 = vld [vmem:[%s815 + $0x20] sm:$0xf]
  %v825 = vld [vmem:[%s815 + $0x24] sm:$0xf]
  %v826 = vld [vmem:[%s815 + $0x28] sm:$0xf]
  %v827 = vld [vmem:[%s815 + $0x2c] sm:$0xf]
  %v828 = vld [vmem:[%s815 + $0x30] sm:$0xf]
  %v829 = vld [vmem:[%s815 + $0x34] sm:$0xf]
  %v830 = vld [vmem:[%s815 + $0x38] sm:$0xf]
  %v831 = vld [vmem:[%s815 + $0x3c] sm:$0xf]
  %v832 = vld [vmem:[%s815 + $0x40] sm:$0xf]
  %v833 = vld [vmem:[%s815 + $0x44] sm:$0xf]
  %v834 = vld [vmem:[%s815 + $0x48] sm:$0xf]
  %v835 = vld [vmem:[%s815 + $0x4c] sm:$0xf]
  %v836 = vld [vmem:[%s815 + $0x50] sm:$0xf]
  %v837 = vld [vmem:[%s815 + $0x54] sm:$0xf]
  %v838 = vld [vmem:[%s815 + $0x58] sm:$0xf]
  %v839 = vld [vmem:[%s815 + $0x5c] sm:$0xf]
  %v840 = vld [vmem:[%s815 + $0x60] sm:$0xf]
  %v841 = vld [vmem:[%s815 + $0x64] sm:$0xf]
  %v842 = vld [vmem:[%s815 + $0x68] sm:$0xf]
  %v843 = vld [vmem:[%s815 + $0x6c] sm:$0xf]
  %v844 = vld [vmem:[%s815 + $0x70] sm:$0xf]
  %v845 = vld [vmem:[%s815 + $0x74] sm:$0xf]
  %v846 = vld [vmem:[%s815 + $0x78] sm:$0xf]
  %v847 = vld [vmem:[%s815 + $0x7c] sm:$0xf]
  %v848 = vld [vmem:[%s815 + $0x80] sm:$0xf]
  %v849 = vld [vmem:[%s815 + $0x84] sm:$0xf]
  %v850 = vld [vmem:[%s815 + $0x88] sm:$0xf]
  %v851 = vld [vmem:[%s815 + $0x8c] sm:$0xf]
  %v888 = vunpack.c.l.b16 %v816
  %v889 = vunpack.c.l.b16 %v817
  %v890 = vunpack.c.l.b16 %v818
  %v891 = vunpack.c.l.b16 %v819
  %v892 = vunpack.c.l.b16 %v820
  %v893 = vunpack.c.l.b16 %v821
  %v894 = vunpack.c.l.b16 %v822
  %v895 = vunpack.c.l.b16 %v823
  %v896 = vunpack.c.l.b16 %v824
  %v897 = vunpack.c.l.b16 %v825
  %v898 = vunpack.c.l.b16 %v826
  %v899 = vunpack.c.l.b16 %v827
  %v900 = vunpack.c.l.b16 %v828
  %v901 = vunpack.c.l.b16 %v829
  %v902 = vunpack.c.l.b16 %v830
  %v903 = vunpack.c.l.b16 %v831
  %v904 = vunpack.c.l.b16 %v832
  %v905 = vunpack.c.l.b16 %v833
  %v906 = vunpack.c.l.b16 %v834
  %v907 = vunpack.c.l.b16 %v835
  %v908 = vunpack.c.l.b16 %v836
  %v909 = vunpack.c.l.b16 %v837
  %v910 = vunpack.c.l.b16 %v838
  %v911 = vunpack.c.l.b16 %v839
  %v912 = vunpack.c.l.b16 %v840
  %v913 = vunpack.c.l.b16 %v841
  %v914 = vunpack.c.l.b16 %v842
  %v915 = vunpack.c.l.b16 %v843
  %v916 = vunpack.c.l.b16 %v844
  %v917 = vunpack.c.l.b16 %v845
  %v918 = vunpack.c.l.b16 %v846
  %v919 = vunpack.c.l.b16 %v847
  %v920 = vunpack.c.l.b16 %v848
  %v921 = vunpack.c.l.b16 %v849
  %v922 = vunpack.c.l.b16 %v850
  %v923 = vunpack.c.l.b16 %v851
  %v924 = vpack.c.b16 %v889, %v888
  %v925 = vpack.c.b16 %v891, %v890
  %v926 = vpack.c.b16 %v893, %v892
  %v927 = vpack.c.b16 %v895, %v894
  %v928 = vpack.c.b16 %v897, %v896
  %v929 = vpack.c.b16 %v899, %v898
  %v930 = vpack.c.b16 %v901, %v900
  %v931 = vpack.c.b16 %v903, %v902
  %v932 = vpack.c.b16 %v905, %v904
  %v933 = vpack.c.b16 %v907, %v906
  %v934 = vpack.c.b16 %v909, %v908
  %v935 = vpack.c.b16 %v911, %v910
  %v936 = vpack.c.b16 %v913, %v912
  %v937 = vpack.c.b16 %v915, %v914
  %v938 = vpack.c.b16 %v917, %v916
  %v939 = vpack.c.b16 %v919, %v918
  %v940 = vpack.c.b16 %v921, %v920
  %v941 = vpack.c.b16 %v923, %v922
  %960 = vmatpush.bf16.msra.mxu0 %v931
  %961 = vmatpush.bf16.msra.mxu0 %v930
  %962 = vmatpush.bf16.msra.mxu0 %v929
  %963 = vmatpush.bf16.msra.mxu0 %v928
  %964 = vmatpush.bf16.msra.mxu0 %v927
  %965 = vmatpush.bf16.msra.mxu0 %v926
  %966 = vmatpush.bf16.msra.mxu0 %v925
  %967 = vmatpush.bf16.msra.mxu0 %v924
  %968 = vmatmul.bf16.gmra.mxu0 %v107
  %v969 = vpop.f32.mrf.mxu0
  %v970 = vadd.f32 0.0, %v969
  %v971 = vpop.f32.mrf.mxu0
  %v972 = vadd.f32 0.0, %v971
  %973 = vmatmul.bf16.gmra.mxu0 %v110
  %v974 = vpop.f32.mrf.mxu0
  %v975 = vadd.f32 0.0, %v974
  %v976 = vpop.f32.mrf.mxu0
  %v977 = vadd.f32 0.0, %v976
  %978 = vmatmul.bf16.gmra.mxu0 %v113
  %v979 = vpop.f32.mrf.mxu0
  %v980 = vadd.f32 0.0, %v979
  %v981 = vpop.f32.mrf.mxu0
  %v982 = vadd.f32 0.0, %v981
  %983 = vmatmul.bf16.gmra.mxu0 %v116
  %v984 = vpop.f32.mrf.mxu0
  %v985 = vadd.f32 0.0, %v984
  %v986 = vpop.f32.mrf.mxu0
  %v987 = vadd.f32 0.0, %v986
  %988 = vdwg.mxu0
  %989 = vmatpush.bf16.msra.mxu0 %v939
  %990 = vmatpush.bf16.msra.mxu0 %v938
  %991 = vmatpush.bf16.msra.mxu0 %v937
  %992 = vmatpush.bf16.msra.mxu0 %v936
  %993 = vmatpush.bf16.msra.mxu0 %v935
  %994 = vmatpush.bf16.msra.mxu0 %v934
  %995 = vmatpush.bf16.msra.mxu0 %v933
  %996 = vmatpush.bf16.msra.mxu0 %v932
  %997 = vmatmul.bf16.gmra.mxu0 %v108
  %v998 = vpop.f32.mrf.mxu0
  %v999 = vadd.f32 %v970, %v998
  %v1000 = vpop.f32.mrf.mxu0
  %v1001 = vadd.f32 %v972, %v1000
  %1002 = vmatmul.bf16.gmra.mxu0 %v111
  %v1003 = vpop.f32.mrf.mxu0
  %v1004 = vadd.f32 %v975, %v1003
  %v1005 = vpop.f32.mrf.mxu0
  %v1006 = vadd.f32 %v977, %v1005
  %1007 = vmatmul.bf16.gmra.mxu0 %v114
  %v1008 = vpop.f32.mrf.mxu0
  %v1009 = vadd.f32 %v980, %v1008
  %v1010 = vpop.f32.mrf.mxu0
  %v1011 = vadd.f32 %v982, %v1010
  %1012 = vmatmul.bf16.gmra.mxu0 %v117
  %v1013 = vpop.f32.mrf.mxu0
  %v1014 = vadd.f32 %v985, %v1013
  %v1015 = vpop.f32.mrf.mxu0
  %v1016 = vadd.f32 %v987, %v1015
  %1017 = vdwg.mxu0
  %1018 = vmatpush.bf16.msra.mxu0 0
  %1019 = vmatpush.bf16.msra.mxu0 0
  %1020 = vmatpush.bf16.msra.mxu0 0
  %1021 = vmatpush.bf16.msra.mxu0 0
  %1022 = vmatpush.bf16.msra.mxu0 0
  %1023 = vmatpush.bf16.msra.mxu0 0
  %1024 = vmatpush.bf16.msra.mxu0 %v941
  %1025 = vmatpush.bf16.msra.mxu0 %v940
  %1026 = vmatmul.bf16.gmra.mxu0 %v237
  %v1027 = vpop.f32.mrf.mxu0
  %v1028 = vadd.f32 %v999, %v1027
  %v1029 = vpop.f32.mrf.mxu0
  %v1030 = vadd.f32 %v1001, %v1029
  %1031 = vmatmul.bf16.gmra.mxu0 %v240
  %v1032 = vpop.f32.mrf.mxu0
  %v1033 = vadd.f32 %v1004, %v1032
  %v1034 = vpop.f32.mrf.mxu0
  %v1035 = vadd.f32 %v1006, %v1034
  %1036 = vmatmul.bf16.gmra.mxu0 %v243
  %v1037 = vpop.f32.mrf.mxu0
  %v1038 = vadd.f32 %v1009, %v1037
  %v1039 = vpop.f32.mrf.mxu0
  %v1040 = vadd.f32 %v1011, %v1039
  %1041 = vmatmul.bf16.gmra.mxu0 %v246
  %v1042 = vpop.f32.mrf.mxu0
  %v1043 = vadd.f32 %v1014, %v1042
  %v1044 = vpop.f32.mrf.mxu0
  %v1045 = vadd.f32 %v1016, %v1044
  %1046 = vdwg.mxu0
  %v1047 = vmax.f32 %v807, %v1028
  %v1048 = vmax.f32 %v808, %v1030
  %v1049 = vmax.f32 %v809, %v1033
  %v1050 = vmax.f32 %v810, %v1035
  %v1051 = vmax.f32 %v811, %v1038
  %v1052 = vmax.f32 %v812, %v1040
  %v1053 = vmax.f32 %v813, %v1043
  %v1054 = vmax.f32 %v814, %v1045
  %v1055 = vld [vmem:[%s2] sm:$0xff]
  %v1056 = vld [vmem:[%s2 + $0x8] sm:$0xff]
  %v1057 = vld [vmem:[%s2 + $0x10] sm:$0xff]
  %v1058 = vld [vmem:[%s2 + $0x18] sm:$0xff]
  %v1059 = vld [vmem:[%s2 + $0x20] sm:$0xff]
  %v1060 = vld [vmem:[%s2 + $0x28] sm:$0xff]
  %v1061 = vld [vmem:[%s2 + $0x30] sm:$0xff]
  %v1062 = vld [vmem:[%s2 + $0x38] sm:$0xff]
  %1064 = vset.pattern.permute.xlu0 0
  %1065 = vperm.xlu0 %1064, %v1055
  %v1066 = vpop.permute.xlu0 %1065
  %1069 = vset.pattern.permute.xlu0 0
  %1070 = vperm.xlu0 %1069, %v1056
  %v1071 = vpop.permute.xlu0 %1070
  %1074 = vset.pattern.permute.xlu0 0
  %1075 = vperm.xlu0 %1074, %v1057
  %v1076 = vpop.permute.xlu0 %1075
  %1079 = vset.pattern.permute.xlu0 0
  %1080 = vperm.xlu0 %1079, %v1058
  %v1081 = vpop.permute.xlu0 %1080
  %1084 = vset.pattern.permute.xlu0 0
  %1085 = vperm.xlu0 %1084, %v1059
  %v1086 = vpop.permute.xlu0 %1085
  %1089 = vset.pattern.permute.xlu0 0
  %1090 = vperm.xlu0 %1089, %v1060
  %v1091 = vpop.permute.xlu0 %1090
  %1094 = vset.pattern.permute.xlu0 0
  %1095 = vperm.xlu0 %1094, %v1061
  %v1096 = vpop.permute.xlu0 %1095
  %1099 = vset.pattern.permute.xlu0 0
  %1100 = vperm.xlu0 %1099, %v1062
  %v1101 = vpop.permute.xlu0 %1100
  %v1103 = vadd.f32 %v1047, %v1066
  %v1104 = vadd.f32 %v1048, %v1071
  %v1105 = vadd.f32 %v1049, %v1076
  %v1106 = vadd.f32 %v1050, %v1081
  %v1107 = vadd.f32 %v1051, %v1086
  %v1108 = vadd.f32 %v1052, %v1091
  %v1109 = vadd.f32 %v1053, %v1096
  %v1110 = vadd.f32 %v1054, %v1101
  %v1111 = vmax.f32 %v1103, 0.0
  %v1112 = vmax.f32 %v1104, 0.0
  %v1113 = vmax.f32 %v1105, 0.0
  %v1114 = vmax.f32 %v1106, 0.0
  %v1115 = vmax.f32 %v1107, 0.0
  %v1116 = vmax.f32 %v1108, 0.0
  %v1117 = vmax.f32 %v1109, 0.0
  %v1118 = vmax.f32 %v1110, 0.0
  %1119 = vst [vmem:[%s3] sm:$0xff] %v1111
  %1120 = vst [vmem:[%s3 + $0x8] sm:$0xff] %v1112
  %1121 = vst [vmem:[%s3 + $0x10] sm:$0xff] %v1113
  %1122 = vst [vmem:[%s3 + $0x18] sm:$0xff] %v1114
  %1123 = vst [vmem:[%s3 + $0x20] sm:$0xff] %v1115
  %1124 = vst [vmem:[%s3 + $0x28] sm:$0xff] %v1116
  %1125 = vst [vmem:[%s3 + $0x30] sm:$0xff] %v1117
  %1126 = vst [vmem:[%s3 + $0x38] sm:$0xff] %v1118
  // Predicated region
  $region14: #{simple_cnn_forward.4} parent=0 // pred_check
    _
  $region15: #{simple_cnn_forward.4} parent=0 // pred_check_branch
    %1128 = sbr.rel (0) target = $region17
  $region16: #{simple_cnn_forward.4} parent=0 // pred_region
    _
  $region17: #{simple_cnn_forward.4} parent=0 // pred_fallthru
    _
  // Predicated region
  $region18: #{simple_cnn_forward.4} parent=0 // pred_check
    _
  $region19: #{simple_cnn_forward.4} parent=0 // pred_check_branch
    %1130 = sbr.rel (0) target = $region21
  $region20: #{simple_cnn_forward.4} parent=0 // pred_region
    _
  $region21: #{simple_cnn_forward.4} parent=0 // pred_fallthru
    _

// kernel: simple_cnn_forward.5
$region0: #{simple_cnn_forward.5}
  #allocation0 [shape = 'u32[]', space=smem, size = 0x4, offset = 0x4, fixed_abs, tag = 'smem constant byte address 0x4 - core index']
  #allocation1 [shape = 'u32[72,128]{1,0:T(1,128)}', space=vmem, size = 0x9000, scoped, tag = 'internal scratch']
  %s0 = inlined_call_operand.vmem [shape: bf16[4096,2], index: 0, kind: input, shape index: {}]
  %s1 = inlined_call_operand.vmem [shape: bf16[128,4096], index: 1, kind: input, shape index: {}]
  %s2 = inlined_call_operand.vmem [shape: f32[128,1], index: 2, kind: input, shape index: {}]
  %s3 = inlined_call_operand.vmem [shape: bf16[10,128], index: 3, kind: input, shape index: {}]
  %s4 = inlined_call_operand.vmem [shape: f32[10,1], index: 4, kind: input, shape index: {}]
  %s5 = inlined_call_operand.vmem [shape: f32[10,2], index: 5, kind: output, shape index: {}]
  %s6 = sld [smem:[#allocation0]]
  $region30: #{simple_cnn_forward.5} parent=0
    _
  %s8 = ssub.s32 1, %s6
  %s9 = scalar_select 0, %s8, %s6
  // Predicated region
  $region2: #{simple_cnn_forward.5} parent=0 // pred_check
    _
  $region3: #{simple_cnn_forward.5} parent=0 // pred_check_branch
    %11 = sbr.rel (0) target = $region5
  $region4: #{simple_cnn_forward.5} parent=0 // pred_region
    _
  $region5: #{simple_cnn_forward.5} parent=0 // pred_fallthru
    _
  // Predicated region
  $region6: #{simple_cnn_forward.5} parent=0 // pred_check
    _
  $region7: #{simple_cnn_forward.5} parent=0 // pred_check_branch
    %13 = sbr.rel (0) target = $region9
  $region8: #{simple_cnn_forward.5} parent=0 // pred_region
    _
  $region9: #{simple_cnn_forward.5} parent=0 // pred_fallthru
    _
  // Predicated region
  $region10: #{simple_cnn_forward.5} parent=0 // pred_check
    _
  $region11: #{simple_cnn_forward.5} parent=0 // pred_check_branch
    %15 = sbr.rel (0) target = $region13
  $region12: #{simple_cnn_forward.5} parent=0 // pred_region
    _
  $region13: #{simple_cnn_forward.5} parent=0 // pred_fallthru
    _
  // Predicated region
  $region14: #{simple_cnn_forward.5} parent=0 // pred_check
    _
  $region15: #{simple_cnn_forward.5} parent=0 // pred_check_branch
    %17 = sbr.rel (0) target = $region17
  $region16: #{simple_cnn_forward.5} parent=0 // pred_region
    _
  $region17: #{simple_cnn_forward.5} parent=0 // pred_fallthru
    _
  // Predicated region
  $region18: #{simple_cnn_forward.5} parent=0 // pred_check
    _
  $region19: #{simple_cnn_forward.5} parent=0 // pred_check_branch
    %19 = sbr.rel (0) target = $region21
  $region20: #{simple_cnn_forward.5} parent=0 // pred_region
    _
  $region21: #{simple_cnn_forward.5} parent=0 // pred_fallthru
    _
  %v20 = vld [vmem:[%s1] sm:$0xff]
  %v21 = vld [vmem:[%s1 + $0x8] sm:$0xff]
  %v22 = vld [vmem:[%s1 + $0x10] sm:$0xff]
  %v23 = vld [vmem:[%s1 + $0x18] sm:$0xff]
  %v24 = vld [vmem:[%s1 + $0x20] sm:$0xff]
  %v25 = vld [vmem:[%s1 + $0x28] sm:$0xff]
  %v26 = vld [vmem:[%s1 + $0x30] sm:$0xff]
  %v27 = vld [vmem:[%s1 + $0x38] sm:$0xff]
  %v28 = vld [vmem:[%s1 + $0x40] sm:$0xff]
  %v29 = vld [vmem:[%s1 + $0x48] sm:$0xff]
  %v30 = vld [vmem:[%s1 + $0x50] sm:$0xff]
  %v31 = vld [vmem:[%s1 + $0x58] sm:$0xff]
  %v32 = vld [vmem:[%s1 + $0x60] sm:$0xff]
  %v33 = vld [vmem:[%s1 + $0x68] sm:$0xff]
  %v34 = vld [vmem:[%s1 + $0x70] sm:$0xff]
  %v35 = vld [vmem:[%s1 + $0x78] sm:$0xff]
  %v36 = vld [vmem:[%s1 + $0x80] sm:$0xff]
  %v37 = vld [vmem:[%s1 + $0x88] sm:$0xff]
  %v38 = vld [vmem:[%s1 + $0x90] sm:$0xff]
  %v39 = vld [vmem:[%s1 + $0x98] sm:$0xff]
  %v40 = vld [vmem:[%s1 + $0xa0] sm:$0xff]
  %v41 = vld [vmem:[%s1 + $0xa8] sm:$0xff]
  %v42 = vld [vmem:[%s1 + $0xb0] sm:$0xff]
  %v43 = vld [vmem:[%s1 + $0xb8] sm:$0xff]
  %v44 = vld [vmem:[%s1 + $0xc0] sm:$0xff]
  %v45 = vld [vmem:[%s1 + $0xc8] sm:$0xff]
  %v46 = vld [vmem:[%s1 + $0xd0] sm:$0xff]
  %v47 = vld [vmem:[%s1 + $0xd8] sm:$0xff]
  %v48 = vld [vmem:[%s1 + $0xe0] sm:$0xff]
  %v49 = vld [vmem:[%s1 + $0xe8] sm:$0xff]
  %v50 = vld [vmem:[%s1 + $0xf0] sm:$0xff]
  %v51 = vld [vmem:[%s1 + $0xf8] sm:$0xff]
  %v52 = vld [vmem:[%s1 + $0x100] sm:$0xff]
  %v53 = vld [vmem:[%s1 + $0x108] sm:$0xff]
  %v54 = vld [vmem:[%s1 + $0x110] sm:$0xff]
  %v55 = vld [vmem:[%s1 + $0x118] sm:$0xff]
  %v56 = vld [vmem:[%s1 + $0x120] sm:$0xff]
  %v57 = vld [vmem:[%s1 + $0x128] sm:$0xff]
  %v58 = vld [vmem:[%s1 + $0x130] sm:$0xff]
  %v59 = vld [vmem:[%s1 + $0x138] sm:$0xff]
  %v60 = vld [vmem:[%s1 + $0x140] sm:$0xff]
  %v61 = vld [vmem:[%s1 + $0x148] sm:$0xff]
  %v62 = vld [vmem:[%s1 + $0x150] sm:$0xff]
  %v63 = vld [vmem:[%s1 + $0x158] sm:$0xff]
  %v64 = vld [vmem:[%s1 + $0x160] sm:$0xff]
  %v65 = vld [vmem:[%s1 + $0x168] sm:$0xff]
  %v66 = vld [vmem:[%s1 + $0x170] sm:$0xff]
  %v67 = vld [vmem:[%s1 + $0x178] sm:$0xff]
  %v68 = vld [vmem:[%s1 + $0x180] sm:$0xff]
  %v69 = vld [vmem:[%s1 + $0x188] sm:$0xff]
  %v70 = vld [vmem:[%s1 + $0x190] sm:$0xff]
  %v71 = vld [vmem:[%s1 + $0x198] sm:$0xff]
  %v72 = vld [vmem:[%s1 + $0x1a0] sm:$0xff]
  %v73 = vld [vmem:[%s1 + $0x1a8] sm:$0xff]
  %v74 = vld [vmem:[%s1 + $0x1b0] sm:$0xff]
  %v75 = vld [vmem:[%s1 + $0x1b8] sm:$0xff]
  %v76 = vld [vmem:[%s1 + $0x1c0] sm:$0xff]
  %v77 = vld [vmem:[%s1 + $0x1c8] sm:$0xff]
  %v78 = vld [vmem:[%s1 + $0x1d0] sm:$0xff]
  %v79 = vld [vmem:[%s1 + $0x1d8] sm:$0xff]
  %v80 = vld [vmem:[%s1 + $0x1e0] sm:$0xff]
  %v81 = vld [vmem:[%s1 + $0x1e8] sm:$0xff]
  %v82 = vld [vmem:[%s1 + $0x1f0] sm:$0xff]
  %v83 = vld [vmem:[%s1 + $0x1f8] sm:$0xff]
  %v84 = vld [vmem:[%s1 + $0x200] sm:$0xff]
  %v85 = vld [vmem:[%s1 + $0x208] sm:$0xff]
  %v86 = vld [vmem:[%s1 + $0x210] sm:$0xff]
  %v87 = vld [vmem:[%s1 + $0x218] sm:$0xff]
  %v88 = vld [vmem:[%s1 + $0x220] sm:$0xff]
  %v89 = vld [vmem:[%s1 + $0x228] sm:$0xff]
  %v90 = vld [vmem:[%s1 + $0x230] sm:$0xff]
  %v91 = vld [vmem:[%s1 + $0x238] sm:$0xff]
  %v92 = vld [vmem:[%s1 + $0x240] sm:$0xff]
  %v93 = vld [vmem:[%s1 + $0x248] sm:$0xff]
  %v94 = vld [vmem:[%s1 + $0x250] sm:$0xff]
  %v95 = vld [vmem:[%s1 + $0x258] sm:$0xff]
  %v96 = vld [vmem:[%s1 + $0x260] sm:$0xff]
  %v97 = vld [vmem:[%s1 + $0x268] sm:$0xff]
  %v98 = vld [vmem:[%s1 + $0x270] sm:$0xff]
  %v99 = vld [vmem:[%s1 + $0x278] sm:$0xff]
  %v100 = vld [vmem:[%s1 + $0x280] sm:$0xff]
  %v101 = vld [vmem:[%s1 + $0x288] sm:$0xff]
  %v102 = vld [vmem:[%s1 + $0x290] sm:$0xff]
  %v103 = vld [vmem:[%s1 + $0x298] sm:$0xff]
  %v104 = vld [vmem:[%s1 + $0x2a0] sm:$0xff]
  %v105 = vld [vmem:[%s1 + $0x2a8] sm:$0xff]
  %v106 = vld [vmem:[%s1 + $0x2b0] sm:$0xff]
  %v107 = vld [vmem:[%s1 + $0x2b8] sm:$0xff]
  %v108 = vld [vmem:[%s1 + $0x2c0] sm:$0xff]
  %v109 = vld [vmem:[%s1 + $0x2c8] sm:$0xff]
  %v110 = vld [vmem:[%s1 + $0x2d0] sm:$0xff]
  %v111 = vld [vmem:[%s1 + $0x2d8] sm:$0xff]
  %v112 = vld [vmem:[%s1 + $0x2e0] sm:$0xff]
  %v113 = vld [vmem:[%s1 + $0x2e8] sm:$0xff]
  %v114 = vld [vmem:[%s1 + $0x2f0] sm:$0xff]
  %v115 = vld [vmem:[%s1 + $0x2f8] sm:$0xff]
  %v116 = vld [vmem:[%s1 + $0x300] sm:$0xff]
  %v117 = vld [vmem:[%s1 + $0x308] sm:$0xff]
  %v118 = vld [vmem:[%s1 + $0x310] sm:$0xff]
  %v119 = vld [vmem:[%s1 + $0x318] sm:$0xff]
  %v120 = vld [vmem:[%s1 + $0x320] sm:$0xff]
  %v121 = vld [vmem:[%s1 + $0x328] sm:$0xff]
  %v122 = vld [vmem:[%s1 + $0x330] sm:$0xff]
  %v123 = vld [vmem:[%s1 + $0x338] sm:$0xff]
  %v124 = vld [vmem:[%s1 + $0x340] sm:$0xff]
  %v125 = vld [vmem:[%s1 + $0x348] sm:$0xff]
  %v126 = vld [vmem:[%s1 + $0x350] sm:$0xff]
  %v127 = vld [vmem:[%s1 + $0x358] sm:$0xff]
  %v128 = vld [vmem:[%s1 + $0x360] sm:$0xff]
  %v129 = vld [vmem:[%s1 + $0x368] sm:$0xff]
  %v130 = vld [vmem:[%s1 + $0x370] sm:$0xff]
  %v131 = vld [vmem:[%s1 + $0x378] sm:$0xff]
  %v132 = vld [vmem:[%s1 + $0x380] sm:$0xff]
  %v133 = vld [vmem:[%s1 + $0x388] sm:$0xff]
  %v134 = vld [vmem:[%s1 + $0x390] sm:$0xff]
  %v135 = vld [vmem:[%s1 + $0x398] sm:$0xff]
  %v136 = vld [vmem:[%s1 + $0x3a0] sm:$0xff]
  %v137 = vld [vmem:[%s1 + $0x3a8] sm:$0xff]
  %v138 = vld [vmem:[%s1 + $0x3b0] sm:$0xff]
  %v139 = vld [vmem:[%s1 + $0x3b8] sm:$0xff]
  %v140 = vld [vmem:[%s1 + $0x3c0] sm:$0xff]
  %v141 = vld [vmem:[%s1 + $0x3c8] sm:$0xff]
  %v142 = vld [vmem:[%s1 + $0x3d0] sm:$0xff]
  %v143 = vld [vmem:[%s1 + $0x3d8] sm:$0xff]
  %v144 = vld [vmem:[%s1 + $0x3e0] sm:$0xff]
  %v145 = vld [vmem:[%s1 + $0x3e8] sm:$0xff]
  %v146 = vld [vmem:[%s1 + $0x3f0] sm:$0xff]
  %v147 = vld [vmem:[%s1 + $0x3f8] sm:$0xff]
  %v148 = vld [vmem:[%s1 + $0x400] sm:$0xff]
  %v149 = vld [vmem:[%s1 + $0x408] sm:$0xff]
  %v150 = vld [vmem:[%s1 + $0x410] sm:$0xff]
  %v151 = vld [vmem:[%s1 + $0x418] sm:$0xff]
  %v152 = vld [vmem:[%s1 + $0x420] sm:$0xff]
  %v153 = vld [vmem:[%s1 + $0x428] sm:$0xff]
  %v154 = vld [vmem:[%s1 + $0x430] sm:$0xff]
  %v155 = vld [vmem:[%s1 + $0x438] sm:$0xff]
  %v156 = vld [vmem:[%s1 + $0x440] sm:$0xff]
  %v157 = vld [vmem:[%s1 + $0x448] sm:$0xff]
  %v158 = vld [vmem:[%s1 + $0x450] sm:$0xff]
  %v159 = vld [vmem:[%s1 + $0x458] sm:$0xff]
  %v160 = vld [vmem:[%s1 + $0x460] sm:$0xff]
  %v161 = vld [vmem:[%s1 + $0x468] sm:$0xff]
  %v162 = vld [vmem:[%s1 + $0x470] sm:$0xff]
  %v163 = vld [vmem:[%s1 + $0x478] sm:$0xff]
  %v164 = vld [vmem:[%s1 + $0x480] sm:$0xff]
  %v165 = vld [vmem:[%s1 + $0x488] sm:$0xff]
  %v166 = vld [vmem:[%s1 + $0x490] sm:$0xff]
  %v167 = vld [vmem:[%s1 + $0x498] sm:$0xff]
  %v168 = vld [vmem:[%s1 + $0x4a0] sm:$0xff]
  %v169 = vld [vmem:[%s1 + $0x4a8] sm:$0xff]
  %v170 = vld [vmem:[%s1 + $0x4b0] sm:$0xff]
  %v171 = vld [vmem:[%s1 + $0x4b8] sm:$0xff]
  %v172 = vld [vmem:[%s1 + $0x4c0] sm:$0xff]
  %v173 = vld [vmem:[%s1 + $0x4c8] sm:$0xff]
  %v174 = vld [vmem:[%s1 + $0x4d0] sm:$0xff]
  %v175 = vld [vmem:[%s1 + $0x4d8] sm:$0xff]
  %v176 = vld [vmem:[%s1 + $0x4e0] sm:$0xff]
  %v177 = vld [vmem:[%s1 + $0x4e8] sm:$0xff]
  %v178 = vld [vmem:[%s1 + $0x4f0] sm:$0xff]
  %v179 = vld [vmem:[%s1 + $0x4f8] sm:$0xff]
  %v180 = vld [vmem:[%s1 + $0x500] sm:$0xff]
  %v181 = vld [vmem:[%s1 + $0x508] sm:$0xff]
  %v182 = vld [vmem:[%s1 + $0x510] sm:$0xff]
  %v183 = vld [vmem:[%s1 + $0x518] sm:$0xff]
  %v184 = vld [vmem:[%s1 + $0x520] sm:$0xff]
  %v185 = vld [vmem:[%s1 + $0x528] sm:$0xff]
  %v186 = vld [vmem:[%s1 + $0x530] sm:$0xff]
  %v187 = vld [vmem:[%s1 + $0x538] sm:$0xff]
  %v188 = vld [vmem:[%s1 + $0x540] sm:$0xff]
  %v189 = vld [vmem:[%s1 + $0x548] sm:$0xff]
  %v190 = vld [vmem:[%s1 + $0x550] sm:$0xff]
  %v191 = vld [vmem:[%s1 + $0x558] sm:$0xff]
  %v192 = vld [vmem:[%s1 + $0x560] sm:$0xff]
  %v193 = vld [vmem:[%s1 + $0x568] sm:$0xff]
  %v194 = vld [vmem:[%s1 + $0x570] sm:$0xff]
  %v195 = vld [vmem:[%s1 + $0x578] sm:$0xff]
  %v196 = vld [vmem:[%s1 + $0x580] sm:$0xff]
  %v197 = vld [vmem:[%s1 + $0x588] sm:$0xff]
  %v198 = vld [vmem:[%s1 + $0x590] sm:$0xff]
  %v199 = vld [vmem:[%s1 + $0x598] sm:$0xff]
  %v200 = vld [vmem:[%s1 + $0x5a0] sm:$0xff]
  %v201 = vld [vmem:[%s1 + $0x5a8] sm:$0xff]
  %v202 = vld [vmem:[%s1 + $0x5b0] sm:$0xff]
  %v203 = vld [vmem:[%s1 + $0x5b8] sm:$0xff]
  %v204 = vld [vmem:[%s1 + $0x5c0] sm:$0xff]
  %v205 = vld [vmem:[%s1 + $0x5c8] sm:$0xff]
  %v206 = vld [vmem:[%s1 + $0x5d0] sm:$0xff]
  %v207 = vld [vmem:[%s1 + $0x5d8] sm:$0xff]
  %v208 = vld [vmem:[%s1 + $0x5e0] sm:$0xff]
  %v209 = vld [vmem:[%s1 + $0x5e8] sm:$0xff]
  %v210 = vld [vmem:[%s1 + $0x5f0] sm:$0xff]
  %v211 = vld [vmem:[%s1 + $0x5f8] sm:$0xff]
  %v212 = vld [vmem:[%s1 + $0x600] sm:$0xff]
  %v213 = vld [vmem:[%s1 + $0x608] sm:$0xff]
  %v214 = vld [vmem:[%s1 + $0x610] sm:$0xff]
  %v215 = vld [vmem:[%s1 + $0x618] sm:$0xff]
  %v216 = vld [vmem:[%s1 + $0x620] sm:$0xff]
  %v217 = vld [vmem:[%s1 + $0x628] sm:$0xff]
  %v218 = vld [vmem:[%s1 + $0x630] sm:$0xff]
  %v219 = vld [vmem:[%s1 + $0x638] sm:$0xff]
  %v220 = vld [vmem:[%s1 + $0x640] sm:$0xff]
  %v221 = vld [vmem:[%s1 + $0x648] sm:$0xff]
  %v222 = vld [vmem:[%s1 + $0x650] sm:$0xff]
  %v223 = vld [vmem:[%s1 + $0x658] sm:$0xff]
  %v224 = vld [vmem:[%s1 + $0x660] sm:$0xff]
  %v225 = vld [vmem:[%s1 + $0x668] sm:$0xff]
  %v226 = vld [vmem:[%s1 + $0x670] sm:$0xff]
  %v227 = vld [vmem:[%s1 + $0x678] sm:$0xff]
  %v228 = vld [vmem:[%s1 + $0x680] sm:$0xff]
  %v229 = vld [vmem:[%s1 + $0x688] sm:$0xff]
  %v230 = vld [vmem:[%s1 + $0x690] sm:$0xff]
  %v231 = vld [vmem:[%s1 + $0x698] sm:$0xff]
  %v232 = vld [vmem:[%s1 + $0x6a0] sm:$0xff]
  %v233 = vld [vmem:[%s1 + $0x6a8] sm:$0xff]
  %v234 = vld [vmem:[%s1 + $0x6b0] sm:$0xff]
  %v235 = vld [vmem:[%s1 + $0x6b8] sm:$0xff]
  %v236 = vld [vmem:[%s1 + $0x6c0] sm:$0xff]
  %v237 = vld [vmem:[%s1 + $0x6c8] sm:$0xff]
  %v238 = vld [vmem:[%s1 + $0x6d0] sm:$0xff]
  %v239 = vld [vmem:[%s1 + $0x6d8] sm:$0xff]
  %v240 = vld [vmem:[%s1 + $0x6e0] sm:$0xff]
  %v241 = vld [vmem:[%s1 + $0x6e8] sm:$0xff]
  %v242 = vld [vmem:[%s1 + $0x6f0] sm:$0xff]
  %v243 = vld [vmem:[%s1 + $0x6f8] sm:$0xff]
  %v244 = vld [vmem:[%s1 + $0x700] sm:$0xff]
  %v245 = vld [vmem:[%s1 + $0x708] sm:$0xff]
  %v246 = vld [vmem:[%s1 + $0x710] sm:$0xff]
  %v247 = vld [vmem:[%s1 + $0x718] sm:$0xff]
  %v248 = vld [vmem:[%s1 + $0x720] sm:$0xff]
  %v249 = vld [vmem:[%s1 + $0x728] sm:$0xff]
  %v250 = vld [vmem:[%s1 + $0x730] sm:$0xff]
  %v251 = vld [vmem:[%s1 + $0x738] sm:$0xff]
  %v252 = vld [vmem:[%s1 + $0x740] sm:$0xff]
  %v253 = vld [vmem:[%s1 + $0x748] sm:$0xff]
  %v254 = vld [vmem:[%s1 + $0x750] sm:$0xff]
  %v255 = vld [vmem:[%s1 + $0x758] sm:$0xff]
  %v256 = vld [vmem:[%s1 + $0x760] sm:$0xff]
  %v257 = vld [vmem:[%s1 + $0x768] sm:$0xff]
  %v258 = vld [vmem:[%s1 + $0x770] sm:$0xff]
  %v259 = vld [vmem:[%s1 + $0x778] sm:$0xff]
  %v260 = vld [vmem:[%s1 + $0x780] sm:$0xff]
  %v261 = vld [vmem:[%s1 + $0x788] sm:$0xff]
  %v262 = vld [vmem:[%s1 + $0x790] sm:$0xff]
  %v263 = vld [vmem:[%s1 + $0x798] sm:$0xff]
  %v264 = vld [vmem:[%s1 + $0x7a0] sm:$0xff]
  %v265 = vld [vmem:[%s1 + $0x7a8] sm:$0xff]
  %v266 = vld [vmem:[%s1 + $0x7b0] sm:$0xff]
  %v267 = vld [vmem:[%s1 + $0x7b8] sm:$0xff]
  %v268 = vld [vmem:[%s1 + $0x7c0] sm:$0xff]
  %v269 = vld [vmem:[%s1 + $0x7c8] sm:$0xff]
  %v270 = vld [vmem:[%s1 + $0x7d0] sm:$0xff]
  %v271 = vld [vmem:[%s1 + $0x7d8] sm:$0xff]
  %v272 = vld [vmem:[%s1 + $0x7e0] sm:$0xff]
  %v273 = vld [vmem:[%s1 + $0x7e8] sm:$0xff]
  %v274 = vld [vmem:[%s1 + $0x7f0] sm:$0xff]
  %v275 = vld [vmem:[%s1 + $0x7f8] sm:$0xff]
  %v276 = vld [vmem:[%s0] sm:$0xf]
  %v277 = vld [vmem:[%s0 + $0x4] sm:$0xf]
  %v278 = vld [vmem:[%s0 + $0x8] sm:$0xf]
  %v279 = vld [vmem:[%s0 + $0xc] sm:$0xf]
  %v280 = vld [vmem:[%s0 + $0x10] sm:$0xf]
  %v281 = vld [vmem:[%s0 + $0x14] sm:$0xf]
  %v282 = vld [vmem:[%s0 + $0x18] sm:$0xf]
  %v283 = vld [vmem:[%s0 + $0x1c] sm:$0xf]
  %v284 = vld [vmem:[%s0 + $0x20] sm:$0xf]
  %v285 = vld [vmem:[%s0 + $0x24] sm:$0xf]
  %v286 = vld [vmem:[%s0 + $0x28] sm:$0xf]
  %v287 = vld [vmem:[%s0 + $0x2c] sm:$0xf]
  %v288 = vld [vmem:[%s0 + $0x30] sm:$0xf]
  %v289 = vld [vmem:[%s0 + $0x34] sm:$0xf]
  %v290 = vld [vmem:[%s0 + $0x38] sm:$0xf]
  %v291 = vld [vmem:[%s0 + $0x3c] sm:$0xf]
  %v292 = vld [vmem:[%s0 + $0x40] sm:$0xf]
  %v293 = vld [vmem:[%s0 + $0x44] sm:$0xf]
  %v294 = vld [vmem:[%s0 + $0x48] sm:$0xf]
  %v295 = vld [vmem:[%s0 + $0x4c] sm:$0xf]
  %v296 = vld [vmem:[%s0 + $0x50] sm:$0xf]
  %v297 = vld [vmem:[%s0 + $0x54] sm:$0xf]
  %v298 = vld [vmem:[%s0 + $0x58] sm:$0xf]
  %v299 = vld [vmem:[%s0 + $0x5c] sm:$0xf]
  %v300 = vld [vmem:[%s0 + $0x60] sm:$0xf]
  %v301 = vld [vmem:[%s0 + $0x64] sm:$0xf]
  %v302 = vld [vmem:[%s0 + $0x68] sm:$0xf]
  %v303 = vld [vmem:[%s0 + $0x6c] sm:$0xf]
  %v304 = vld [vmem:[%s0 + $0x70] sm:$0xf]
  %v305 = vld [vmem:[%s0 + $0x74] sm:$0xf]
  %v306 = vld [vmem:[%s0 + $0x78] sm:$0xf]
  %v307 = vld [vmem:[%s0 + $0x7c] sm:$0xf]
  %v308 = vld [vmem:[%s0 + $0x80] sm:$0xf]
  %v309 = vld [vmem:[%s0 + $0x84] sm:$0xf]
  %v310 = vld [vmem:[%s0 + $0x88] sm:$0xf]
  %v311 = vld [vmem:[%s0 + $0x8c] sm:$0xf]
  %v312 = vld [vmem:[%s0 + $0x90] sm:$0xf]
  %v313 = vld [vmem:[%s0 + $0x94] sm:$0xf]
  %v314 = vld [vmem:[%s0 + $0x98] sm:$0xf]
  %v315 = vld [vmem:[%s0 + $0x9c] sm:$0xf]
  %v316 = vld [vmem:[%s0 + $0xa0] sm:$0xf]
  %v317 = vld [vmem:[%s0 + $0xa4] sm:$0xf]
  %v318 = vld [vmem:[%s0 + $0xa8] sm:$0xf]
  %v319 = vld [vmem:[%s0 + $0xac] sm:$0xf]
  %v320 = vld [vmem:[%s0 + $0xb0] sm:$0xf]
  %v321 = vld [vmem:[%s0 + $0xb4] sm:$0xf]
  %v322 = vld [vmem:[%s0 + $0xb8] sm:$0xf]
  %v323 = vld [vmem:[%s0 + $0xbc] sm:$0xf]
  %v324 = vld [vmem:[%s0 + $0xc0] sm:$0xf]
  %v325 = vld [vmem:[%s0 + $0xc4] sm:$0xf]
  %v326 = vld [vmem:[%s0 + $0xc8] sm:$0xf]
  %v327 = vld [vmem:[%s0 + $0xcc] sm:$0xf]
  %v328 = vld [vmem:[%s0 + $0xd0] sm:$0xf]
  %v329 = vld [vmem:[%s0 + $0xd4] sm:$0xf]
  %v330 = vld [vmem:[%s0 + $0xd8] sm:$0xf]
  %v331 = vld [vmem:[%s0 + $0xdc] sm:$0xf]
  %v332 = vld [vmem:[%s0 + $0xe0] sm:$0xf]
  %v333 = vld [vmem:[%s0 + $0xe4] sm:$0xf]
  %v334 = vld [vmem:[%s0 + $0xe8] sm:$0xf]
  %v335 = vld [vmem:[%s0 + $0xec] sm:$0xf]
  %v336 = vld [vmem:[%s0 + $0xf0] sm:$0xf]
  %v337 = vld [vmem:[%s0 + $0xf4] sm:$0xf]
  %v338 = vld [vmem:[%s0 + $0xf8] sm:$0xf]
  %v339 = vld [vmem:[%s0 + $0xfc] sm:$0xf]
  %v340 = vld [vmem:[%s0 + $0x100] sm:$0xf]
  %v341 = vld [vmem:[%s0 + $0x104] sm:$0xf]
  %v342 = vld [vmem:[%s0 + $0x108] sm:$0xf]
  %v343 = vld [vmem:[%s0 + $0x10c] sm:$0xf]
  %v344 = vld [vmem:[%s0 + $0x110] sm:$0xf]
  %v345 = vld [vmem:[%s0 + $0x114] sm:$0xf]
  %v346 = vld [vmem:[%s0 + $0x118] sm:$0xf]
  %v347 = vld [vmem:[%s0 + $0x11c] sm:$0xf]
  %v348 = vld [vmem:[%s0 + $0x120] sm:$0xf]
  %v349 = vld [vmem:[%s0 + $0x124] sm:$0xf]
  %v350 = vld [vmem:[%s0 + $0x128] sm:$0xf]
  %v351 = vld [vmem:[%s0 + $0x12c] sm:$0xf]
  %v352 = vld [vmem:[%s0 + $0x130] sm:$0xf]
  %v353 = vld [vmem:[%s0 + $0x134] sm:$0xf]
  %v354 = vld [vmem:[%s0 + $0x138] sm:$0xf]
  %v355 = vld [vmem:[%s0 + $0x13c] sm:$0xf]
  %v356 = vld [vmem:[%s0 + $0x140] sm:$0xf]
  %v357 = vld [vmem:[%s0 + $0x144] sm:$0xf]
  %v358 = vld [vmem:[%s0 + $0x148] sm:$0xf]
  %v359 = vld [vmem:[%s0 + $0x14c] sm:$0xf]
  %v360 = vld [vmem:[%s0 + $0x150] sm:$0xf]
  %v361 = vld [vmem:[%s0 + $0x154] sm:$0xf]
  %v362 = vld [vmem:[%s0 + $0x158] sm:$0xf]
  %v363 = vld [vmem:[%s0 + $0x15c] sm:$0xf]
  %v364 = vld [vmem:[%s0 + $0x160] sm:$0xf]
  %v365 = vld [vmem:[%s0 + $0x164] sm:$0xf]
  %v366 = vld [vmem:[%s0 + $0x168] sm:$0xf]
  %v367 = vld [vmem:[%s0 + $0x16c] sm:$0xf]
  %v368 = vld [vmem:[%s0 + $0x170] sm:$0xf]
  %v369 = vld [vmem:[%s0 + $0x174] sm:$0xf]
  %v370 = vld [vmem:[%s0 + $0x178] sm:$0xf]
  %v371 = vld [vmem:[%s0 + $0x17c] sm:$0xf]
  %v372 = vld [vmem:[%s0 + $0x180] sm:$0xf]
  %v373 = vld [vmem:[%s0 + $0x184] sm:$0xf]
  %v374 = vld [vmem:[%s0 + $0x188] sm:$0xf]
  %v375 = vld [vmem:[%s0 + $0x18c] sm:$0xf]
  %v376 = vld [vmem:[%s0 + $0x190] sm:$0xf]
  %v377 = vld [vmem:[%s0 + $0x194] sm:$0xf]
  %v378 = vld [vmem:[%s0 + $0x198] sm:$0xf]
  %v379 = vld [vmem:[%s0 + $0x19c] sm:$0xf]
  %v380 = vld [vmem:[%s0 + $0x1a0] sm:$0xf]
  %v381 = vld [vmem:[%s0 + $0x1a4] sm:$0xf]
  %v382 = vld [vmem:[%s0 + $0x1a8] sm:$0xf]
  %v383 = vld [vmem:[%s0 + $0x1ac] sm:$0xf]
  %v384 = vld [vmem:[%s0 + $0x1b0] sm:$0xf]
  %v385 = vld [vmem:[%s0 + $0x1b4] sm:$0xf]
  %v386 = vld [vmem:[%s0 + $0x1b8] sm:$0xf]
  %v387 = vld [vmem:[%s0 + $0x1bc] sm:$0xf]
  %v388 = vld [vmem:[%s0 + $0x1c0] sm:$0xf]
  %v389 = vld [vmem:[%s0 + $0x1c4] sm:$0xf]
  %v390 = vld [vmem:[%s0 + $0x1c8] sm:$0xf]
  %v391 = vld [vmem:[%s0 + $0x1cc] sm:$0xf]
  %v392 = vld [vmem:[%s0 + $0x1d0] sm:$0xf]
  %v393 = vld [vmem:[%s0 + $0x1d4] sm:$0xf]
  %v394 = vld [vmem:[%s0 + $0x1d8] sm:$0xf]
  %v395 = vld [vmem:[%s0 + $0x1dc] sm:$0xf]
  %v396 = vld [vmem:[%s0 + $0x1e0] sm:$0xf]
  %v397 = vld [vmem:[%s0 + $0x1e4] sm:$0xf]
  %v398 = vld [vmem:[%s0 + $0x1e8] sm:$0xf]
  %v399 = vld [vmem:[%s0 + $0x1ec] sm:$0xf]
  %v400 = vld [vmem:[%s0 + $0x1f0] sm:$0xf]
  %v401 = vld [vmem:[%s0 + $0x1f4] sm:$0xf]
  %v402 = vld [vmem:[%s0 + $0x1f8] sm:$0xf]
  %v403 = vld [vmem:[%s0 + $0x1fc] sm:$0xf]
  %v404 = vld [vmem:[%s0 + $0x200] sm:$0xf]
  %v405 = vld [vmem:[%s0 + $0x204] sm:$0xf]
  %v406 = vld [vmem:[%s0 + $0x208] sm:$0xf]
  %v407 = vld [vmem:[%s0 + $0x20c] sm:$0xf]
  %v408 = vld [vmem:[%s0 + $0x210] sm:$0xf]
  %v409 = vld [vmem:[%s0 + $0x214] sm:$0xf]
  %v410 = vld [vmem:[%s0 + $0x218] sm:$0xf]
  %v411 = vld [vmem:[%s0 + $0x21c] sm:$0xf]
  %v412 = vld [vmem:[%s0 + $0x220] sm:$0xf]
  %v413 = vld [vmem:[%s0 + $0x224] sm:$0xf]
  %v414 = vld [vmem:[%s0 + $0x228] sm:$0xf]
  %v415 = vld [vmem:[%s0 + $0x22c] sm:$0xf]
  %v416 = vld [vmem:[%s0 + $0x230] sm:$0xf]
  %v417 = vld [vmem:[%s0 + $0x234] sm:$0xf]
  %v418 = vld [vmem:[%s0 + $0x238] sm:$0xf]
  %v419 = vld [vmem:[%s0 + $0x23c] sm:$0xf]
  %v420 = vld [vmem:[%s0 + $0x240] sm:$0xf]
  %v421 = vld [vmem:[%s0 + $0x244] sm:$0xf]
  %v422 = vld [vmem:[%s0 + $0x248] sm:$0xf]
  %v423 = vld [vmem:[%s0 + $0x24c] sm:$0xf]
  %v424 = vld [vmem:[%s0 + $0x250] sm:$0xf]
  %v425 = vld [vmem:[%s0 + $0x254] sm:$0xf]
  %v426 = vld [vmem:[%s0 + $0x258] sm:$0xf]
  %v427 = vld [vmem:[%s0 + $0x25c] sm:$0xf]
  %v428 = vld [vmem:[%s0 + $0x260] sm:$0xf]
  %v429 = vld [vmem:[%s0 + $0x264] sm:$0xf]
  %v430 = vld [vmem:[%s0 + $0x268] sm:$0xf]
  %v431 = vld [vmem:[%s0 + $0x26c] sm:$0xf]
  %v432 = vld [vmem:[%s0 + $0x270] sm:$0xf]
  %v433 = vld [vmem:[%s0 + $0x274] sm:$0xf]
  %v434 = vld [vmem:[%s0 + $0x278] sm:$0xf]
  %v435 = vld [vmem:[%s0 + $0x27c] sm:$0xf]
  %v436 = vld [vmem:[%s0 + $0x280] sm:$0xf]
  %v437 = vld [vmem:[%s0 + $0x284] sm:$0xf]
  %v438 = vld [vmem:[%s0 + $0x288] sm:$0xf]
  %v439 = vld [vmem:[%s0 + $0x28c] sm:$0xf]
  %v440 = vld [vmem:[%s0 + $0x290] sm:$0xf]
  %v441 = vld [vmem:[%s0 + $0x294] sm:$0xf]
  %v442 = vld [vmem:[%s0 + $0x298] sm:$0xf]
  %v443 = vld [vmem:[%s0 + $0x29c] sm:$0xf]
  %v444 = vld [vmem:[%s0 + $0x2a0] sm:$0xf]
  %v445 = vld [vmem:[%s0 + $0x2a4] sm:$0xf]
  %v446 = vld [vmem:[%s0 + $0x2a8] sm:$0xf]
  %v447 = vld [vmem:[%s0 + $0x2ac] sm:$0xf]
  %v448 = vld [vmem:[%s0 + $0x2b0] sm:$0xf]
  %v449 = vld [vmem:[%s0 + $0x2b4] sm:$0xf]
  %v450 = vld [vmem:[%s0 + $0x2b8] sm:$0xf]
  %v451 = vld [vmem:[%s0 + $0x2bc] sm:$0xf]
  %v452 = vld [vmem:[%s0 + $0x2c0] sm:$0xf]
  %v453 = vld [vmem:[%s0 + $0x2c4] sm:$0xf]
  %v454 = vld [vmem:[%s0 + $0x2c8] sm:$0xf]
  %v455 = vld [vmem:[%s0 + $0x2cc] sm:$0xf]
  %v456 = vld [vmem:[%s0 + $0x2d0] sm:$0xf]
  %v457 = vld [vmem:[%s0 + $0x2d4] sm:$0xf]
  %v458 = vld [vmem:[%s0 + $0x2d8] sm:$0xf]
  %v459 = vld [vmem:[%s0 + $0x2dc] sm:$0xf]
  %v460 = vld [vmem:[%s0 + $0x2e0] sm:$0xf]
  %v461 = vld [vmem:[%s0 + $0x2e4] sm:$0xf]
  %v462 = vld [vmem:[%s0 + $0x2e8] sm:$0xf]
  %v463 = vld [vmem:[%s0 + $0x2ec] sm:$0xf]
  %v464 = vld [vmem:[%s0 + $0x2f0] sm:$0xf]
  %v465 = vld [vmem:[%s0 + $0x2f4] sm:$0xf]
  %v466 = vld [vmem:[%s0 + $0x2f8] sm:$0xf]
  %v467 = vld [vmem:[%s0 + $0x2fc] sm:$0xf]
  %v468 = vld [vmem:[%s0 + $0x300] sm:$0xf]
  %v469 = vld [vmem:[%s0 + $0x304] sm:$0xf]
  %v470 = vld [vmem:[%s0 + $0x308] sm:$0xf]
  %v471 = vld [vmem:[%s0 + $0x30c] sm:$0xf]
  %v472 = vld [vmem:[%s0 + $0x310] sm:$0xf]
  %v473 = vld [vmem:[%s0 + $0x314] sm:$0xf]
  %v474 = vld [vmem:[%s0 + $0x318] sm:$0xf]
  %v475 = vld [vmem:[%s0 + $0x31c] sm:$0xf]
  %v476 = vld [vmem:[%s0 + $0x320] sm:$0xf]
  %v477 = vld [vmem:[%s0 + $0x324] sm:$0xf]
  %v478 = vld [vmem:[%s0 + $0x328] sm:$0xf]
  %v479 = vld [vmem:[%s0 + $0x32c] sm:$0xf]
  %v480 = vld [vmem:[%s0 + $0x330] sm:$0xf]
  %v481 = vld [vmem:[%s0 + $0x334] sm:$0xf]
  %v482 = vld [vmem:[%s0 + $0x338] sm:$0xf]
  %v483 = vld [vmem:[%s0 + $0x33c] sm:$0xf]
  %v484 = vld [vmem:[%s0 + $0x340] sm:$0xf]
  %v485 = vld [vmem:[%s0 + $0x344] sm:$0xf]
  %v486 = vld [vmem:[%s0 + $0x348] sm:$0xf]
  %v487 = vld [vmem:[%s0 + $0x34c] sm:$0xf]
  %v488 = vld [vmem:[%s0 + $0x350] sm:$0xf]
  %v489 = vld [vmem:[%s0 + $0x354] sm:$0xf]
  %v490 = vld [vmem:[%s0 + $0x358] sm:$0xf]
  %v491 = vld [vmem:[%s0 + $0x35c] sm:$0xf]
  %v492 = vld [vmem:[%s0 + $0x360] sm:$0xf]
  %v493 = vld [vmem:[%s0 + $0x364] sm:$0xf]
  %v494 = vld [vmem:[%s0 + $0x368] sm:$0xf]
  %v495 = vld [vmem:[%s0 + $0x36c] sm:$0xf]
  %v496 = vld [vmem:[%s0 + $0x370] sm:$0xf]
  %v497 = vld [vmem:[%s0 + $0x374] sm:$0xf]
  %v498 = vld [vmem:[%s0 + $0x378] sm:$0xf]
  %v499 = vld [vmem:[%s0 + $0x37c] sm:$0xf]
  %v500 = vld [vmem:[%s0 + $0x380] sm:$0xf]
  %v501 = vld [vmem:[%s0 + $0x384] sm:$0xf]
  %v502 = vld [vmem:[%s0 + $0x388] sm:$0xf]
  %v503 = vld [vmem:[%s0 + $0x38c] sm:$0xf]
  %v504 = vld [vmem:[%s0 + $0x390] sm:$0xf]
  %v505 = vld [vmem:[%s0 + $0x394] sm:$0xf]
  %v506 = vld [vmem:[%s0 + $0x398] sm:$0xf]
  %v507 = vld [vmem:[%s0 + $0x39c] sm:$0xf]
  %v508 = vld [vmem:[%s0 + $0x3a0] sm:$0xf]
  %v509 = vld [vmem:[%s0 + $0x3a4] sm:$0xf]
  %v510 = vld [vmem:[%s0 + $0x3a8] sm:$0xf]
  %v511 = vld [vmem:[%s0 + $0x3ac] sm:$0xf]
  %v512 = vld [vmem:[%s0 + $0x3b0] sm:$0xf]
  %v513 = vld [vmem:[%s0 + $0x3b4] sm:$0xf]
  %v514 = vld [vmem:[%s0 + $0x3b8] sm:$0xf]
  %v515 = vld [vmem:[%s0 + $0x3bc] sm:$0xf]
  %v516 = vld [vmem:[%s0 + $0x3c0] sm:$0xf]
  %v517 = vld [vmem:[%s0 + $0x3c4] sm:$0xf]
  %v518 = vld [vmem:[%s0 + $0x3c8] sm:$0xf]
  %v519 = vld [vmem:[%s0 + $0x3cc] sm:$0xf]
  %v520 = vld [vmem:[%s0 + $0x3d0] sm:$0xf]
  %v521 = vld [vmem:[%s0 + $0x3d4] sm:$0xf]
  %v522 = vld [vmem:[%s0 + $0x3d8] sm:$0xf]
  %v523 = vld [vmem:[%s0 + $0x3dc] sm:$0xf]
  %v524 = vld [vmem:[%s0 + $0x3e0] sm:$0xf]
  %v525 = vld [vmem:[%s0 + $0x3e4] sm:$0xf]
  %v526 = vld [vmem:[%s0 + $0x3e8] sm:$0xf]
  %v527 = vld [vmem:[%s0 + $0x3ec] sm:$0xf]
  %v528 = vld [vmem:[%s0 + $0x3f0] sm:$0xf]
  %v529 = vld [vmem:[%s0 + $0x3f4] sm:$0xf]
  %v530 = vld [vmem:[%s0 + $0x3f8] sm:$0xf]
  %v531 = vld [vmem:[%s0 + $0x3fc] sm:$0xf]
  %v532 = vld [vmem:[%s0 + $0x400] sm:$0xf]
  %v533 = vld [vmem:[%s0 + $0x404] sm:$0xf]
  %v534 = vld [vmem:[%s0 + $0x408] sm:$0xf]
  %v535 = vld [vmem:[%s0 + $0x40c] sm:$0xf]
  %v536 = vld [vmem:[%s0 + $0x410] sm:$0xf]
  %v537 = vld [vmem:[%s0 + $0x414] sm:$0xf]
  %v538 = vld [vmem:[%s0 + $0x418] sm:$0xf]
  %v539 = vld [vmem:[%s0 + $0x41c] sm:$0xf]
  %v540 = vld [vmem:[%s0 + $0x420] sm:$0xf]
  %v541 = vld [vmem:[%s0 + $0x424] sm:$0xf]
  %v542 = vld [vmem:[%s0 + $0x428] sm:$0xf]
  %v543 = vld [vmem:[%s0 + $0x42c] sm:$0xf]
  %v544 = vld [vmem:[%s0 + $0x430] sm:$0xf]
  %v545 = vld [vmem:[%s0 + $0x434] sm:$0xf]
  %v546 = vld [vmem:[%s0 + $0x438] sm:$0xf]
  %v547 = vld [vmem:[%s0 + $0x43c] sm:$0xf]
  %v548 = vld [vmem:[%s0 + $0x440] sm:$0xf]
  %v549 = vld [vmem:[%s0 + $0x444] sm:$0xf]
  %v550 = vld [vmem:[%s0 + $0x448] sm:$0xf]
  %v551 = vld [vmem:[%s0 + $0x44c] sm:$0xf]
  %v552 = vld [vmem:[%s0 + $0x450] sm:$0xf]
  %v553 = vld [vmem:[%s0 + $0x454] sm:$0xf]
  %v554 = vld [vmem:[%s0 + $0x458] sm:$0xf]
  %v555 = vld [vmem:[%s0 + $0x45c] sm:$0xf]
  %v556 = vld [vmem:[%s0 + $0x460] sm:$0xf]
  %v557 = vld [vmem:[%s0 + $0x464] sm:$0xf]
  %v558 = vld [vmem:[%s0 + $0x468] sm:$0xf]
  %v559 = vld [vmem:[%s0 + $0x46c] sm:$0xf]
  %v560 = vld [vmem:[%s0 + $0x470] sm:$0xf]
  %v561 = vld [vmem:[%s0 + $0x474] sm:$0xf]
  %v562 = vld [vmem:[%s0 + $0x478] sm:$0xf]
  %v563 = vld [vmem:[%s0 + $0x47c] sm:$0xf]
  %v564 = vld [vmem:[%s0 + $0x480] sm:$0xf]
  %v565 = vld [vmem:[%s0 + $0x484] sm:$0xf]
  %v566 = vld [vmem:[%s0 + $0x488] sm:$0xf]
  %v567 = vld [vmem:[%s0 + $0x48c] sm:$0xf]
  %v568 = vld [vmem:[%s0 + $0x490] sm:$0xf]
  %v569 = vld [vmem:[%s0 + $0x494] sm:$0xf]
  %v570 = vld [vmem:[%s0 + $0x498] sm:$0xf]
  %v571 = vld [vmem:[%s0 + $0x49c] sm:$0xf]
  %v572 = vld [vmem:[%s0 + $0x4a0] sm:$0xf]
  %v573 = vld [vmem:[%s0 + $0x4a4] sm:$0xf]
  %v574 = vld [vmem:[%s0 + $0x4a8] sm:$0xf]
  %v575 = vld [vmem:[%s0 + $0x4ac] sm:$0xf]
  %v576 = vld [vmem:[%s0 + $0x4b0] sm:$0xf]
  %v577 = vld [vmem:[%s0 + $0x4b4] sm:$0xf]
  %v578 = vld [vmem:[%s0 + $0x4b8] sm:$0xf]
  %v579 = vld [vmem:[%s0 + $0x4bc] sm:$0xf]
  %v580 = vld [vmem:[%s0 + $0x4c0] sm:$0xf]
  %v581 = vld [vmem:[%s0 + $0x4c4] sm:$0xf]
  %v582 = vld [vmem:[%s0 + $0x4c8] sm:$0xf]
  %v583 = vld [vmem:[%s0 + $0x4cc] sm:$0xf]
  %v584 = vld [vmem:[%s0 + $0x4d0] sm:$0xf]
  %v585 = vld [vmem:[%s0 + $0x4d4] sm:$0xf]
  %v586 = vld [vmem:[%s0 + $0x4d8] sm:$0xf]
  %v587 = vld [vmem:[%s0 + $0x4dc] sm:$0xf]
  %v588 = vld [vmem:[%s0 + $0x4e0] sm:$0xf]
  %v589 = vld [vmem:[%s0 + $0x4e4] sm:$0xf]
  %v590 = vld [vmem:[%s0 + $0x4e8] sm:$0xf]
  %v591 = vld [vmem:[%s0 + $0x4ec] sm:$0xf]
  %v592 = vld [vmem:[%s0 + $0x4f0] sm:$0xf]
  %v593 = vld [vmem:[%s0 + $0x4f4] sm:$0xf]
  %v594 = vld [vmem:[%s0 + $0x4f8] sm:$0xf]
  %v595 = vld [vmem:[%s0 + $0x4fc] sm:$0xf]
  %v596 = vld [vmem:[%s0 + $0x500] sm:$0xf]
  %v597 = vld [vmem:[%s0 + $0x504] sm:$0xf]
  %v598 = vld [vmem:[%s0 + $0x508] sm:$0xf]
  %v599 = vld [vmem:[%s0 + $0x50c] sm:$0xf]
  %v600 = vld [vmem:[%s0 + $0x510] sm:$0xf]
  %v601 = vld [vmem:[%s0 + $0x514] sm:$0xf]
  %v602 = vld [vmem:[%s0 + $0x518] sm:$0xf]
  %v603 = vld [vmem:[%s0 + $0x51c] sm:$0xf]
  %v604 = vld [vmem:[%s0 + $0x520] sm:$0xf]
  %v605 = vld [vmem:[%s0 + $0x524] sm:$0xf]
  %v606 = vld [vmem:[%s0 + $0x528] sm:$0xf]
  %v607 = vld [vmem:[%s0 + $0x52c] sm:$0xf]
  %v608 = vld [vmem:[%s0 + $0x530] sm:$0xf]
  %v609 = vld [vmem:[%s0 + $0x534] sm:$0xf]
  %v610 = vld [vmem:[%s0 + $0x538] sm:$0xf]
  %v611 = vld [vmem:[%s0 + $0x53c] sm:$0xf]
  %v612 = vld [vmem:[%s0 + $0x540] sm:$0xf]
  %v613 = vld [vmem:[%s0 + $0x544] sm:$0xf]
  %v614 = vld [vmem:[%s0 + $0x548] sm:$0xf]
  %v615 = vld [vmem:[%s0 + $0x54c] sm:$0xf]
  %v616 = vld [vmem:[%s0 + $0x550] sm:$0xf]
  %v617 = vld [vmem:[%s0 + $0x554] sm:$0xf]
  %v618 = vld [vmem:[%s0 + $0x558] sm:$0xf]
  %v619 = vld [vmem:[%s0 + $0x55c] sm:$0xf]
  %v620 = vld [vmem:[%s0 + $0x560] sm:$0xf]
  %v621 = vld [vmem:[%s0 + $0x564] sm:$0xf]
  %v622 = vld [vmem:[%s0 + $0x568] sm:$0xf]
  %v623 = vld [vmem:[%s0 + $0x56c] sm:$0xf]
  %v624 = vld [vmem:[%s0 + $0x570] sm:$0xf]
  %v625 = vld [vmem:[%s0 + $0x574] sm:$0xf]
  %v626 = vld [vmem:[%s0 + $0x578] sm:$0xf]
  %v627 = vld [vmem:[%s0 + $0x57c] sm:$0xf]
  %v628 = vld [vmem:[%s0 + $0x580] sm:$0xf]
  %v629 = vld [vmem:[%s0 + $0x584] sm:$0xf]
  %v630 = vld [vmem:[%s0 + $0x588] sm:$0xf]
  %v631 = vld [vmem:[%s0 + $0x58c] sm:$0xf]
  %v632 = vld [vmem:[%s0 + $0x590] sm:$0xf]
  %v633 = vld [vmem:[%s0 + $0x594] sm:$0xf]
  %v634 = vld [vmem:[%s0 + $0x598] sm:$0xf]
  %v635 = vld [vmem:[%s0 + $0x59c] sm:$0xf]
  %v636 = vld [vmem:[%s0 + $0x5a0] sm:$0xf]
  %v637 = vld [vmem:[%s0 + $0x5a4] sm:$0xf]
  %v638 = vld [vmem:[%s0 + $0x5a8] sm:$0xf]
  %v639 = vld [vmem:[%s0 + $0x5ac] sm:$0xf]
  %v640 = vld [vmem:[%s0 + $0x5b0] sm:$0xf]
  %v641 = vld [vmem:[%s0 + $0x5b4] sm:$0xf]
  %v642 = vld [vmem:[%s0 + $0x5b8] sm:$0xf]
  %v643 = vld [vmem:[%s0 + $0x5bc] sm:$0xf]
  %v644 = vld [vmem:[%s0 + $0x5c0] sm:$0xf]
  %v645 = vld [vmem:[%s0 + $0x5c4] sm:$0xf]
  %v646 = vld [vmem:[%s0 + $0x5c8] sm:$0xf]
  %v647 = vld [vmem:[%s0 + $0x5cc] sm:$0xf]
  %v648 = vld [vmem:[%s0 + $0x5d0] sm:$0xf]
  %v649 = vld [vmem:[%s0 + $0x5d4] sm:$0xf]
  %v650 = vld [vmem:[%s0 + $0x5d8] sm:$0xf]
  %v651 = vld [vmem:[%s0 + $0x5dc] sm:$0xf]
  %v652 = vld [vmem:[%s0 + $0x5e0] sm:$0xf]
  %v653 = vld [vmem:[%s0 + $0x5e4] sm:$0xf]
  %v654 = vld [vmem:[%s0 + $0x5e8] sm:$0xf]
  %v655 = vld [vmem:[%s0 + $0x5ec] sm:$0xf]
  %v656 = vld [vmem:[%s0 + $0x5f0] sm:$0xf]
  %v657 = vld [vmem:[%s0 + $0x5f4] sm:$0xf]
  %v658 = vld [vmem:[%s0 + $0x5f8] sm:$0xf]
  %v659 = vld [vmem:[%s0 + $0x5fc] sm:$0xf]
  %v660 = vld [vmem:[%s0 + $0x600] sm:$0xf]
  %v661 = vld [vmem:[%s0 + $0x604] sm:$0xf]
  %v662 = vld [vmem:[%s0 + $0x608] sm:$0xf]
  %v663 = vld [vmem:[%s0 + $0x60c] sm:$0xf]
  %v664 = vld [vmem:[%s0 + $0x610] sm:$0xf]
  %v665 = vld [vmem:[%s0 + $0x614] sm:$0xf]
  %v666 = vld [vmem:[%s0 + $0x618] sm:$0xf]
  %v667 = vld [vmem:[%s0 + $0x61c] sm:$0xf]
  %v668 = vld [vmem:[%s0 + $0x620] sm:$0xf]
  %v669 = vld [vmem:[%s0 + $0x624] sm:$0xf]
  %v670 = vld [vmem:[%s0 + $0x628] sm:$0xf]
  %v671 = vld [vmem:[%s0 + $0x62c] sm:$0xf]
  %v672 = vld [vmem:[%s0 + $0x630] sm:$0xf]
  %v673 = vld [vmem:[%s0 + $0x634] sm:$0xf]
  %v674 = vld [vmem:[%s0 + $0x638] sm:$0xf]
  %v675 = vld [vmem:[%s0 + $0x63c] sm:$0xf]
  %v676 = vld [vmem:[%s0 + $0x640] sm:$0xf]
  %v677 = vld [vmem:[%s0 + $0x644] sm:$0xf]
  %v678 = vld [vmem:[%s0 + $0x648] sm:$0xf]
  %v679 = vld [vmem:[%s0 + $0x64c] sm:$0xf]
  %v680 = vld [vmem:[%s0 + $0x650] sm:$0xf]
  %v681 = vld [vmem:[%s0 + $0x654] sm:$0xf]
  %v682 = vld [vmem:[%s0 + $0x658] sm:$0xf]
  %v683 = vld [vmem:[%s0 + $0x65c] sm:$0xf]
  %v684 = vld [vmem:[%s0 + $0x660] sm:$0xf]
  %v685 = vld [vmem:[%s0 + $0x664] sm:$0xf]
  %v686 = vld [vmem:[%s0 + $0x668] sm:$0xf]
  %v687 = vld [vmem:[%s0 + $0x66c] sm:$0xf]
  %v688 = vld [vmem:[%s0 + $0x670] sm:$0xf]
  %v689 = vld [vmem:[%s0 + $0x674] sm:$0xf]
  %v690 = vld [vmem:[%s0 + $0x678] sm:$0xf]
  %v691 = vld [vmem:[%s0 + $0x67c] sm:$0xf]
  %v692 = vld [vmem:[%s0 + $0x680] sm:$0xf]
  %v693 = vld [vmem:[%s0 + $0x684] sm:$0xf]
  %v694 = vld [vmem:[%s0 + $0x688] sm:$0xf]
  %v695 = vld [vmem:[%s0 + $0x68c] sm:$0xf]
  %v696 = vld [vmem:[%s0 + $0x690] sm:$0xf]
  %v697 = vld [vmem:[%s0 + $0x694] sm:$0xf]
  %v698 = vld [vmem:[%s0 + $0x698] sm:$0xf]
  %v699 = vld [vmem:[%s0 + $0x69c] sm:$0xf]
  %v700 = vld [vmem:[%s0 + $0x6a0] sm:$0xf]
  %v701 = vld [vmem:[%s0 + $0x6a4] sm:$0xf]
  %v702 = vld [vmem:[%s0 + $0x6a8] sm:$0xf]
  %v703 = vld [vmem:[%s0 + $0x6ac] sm:$0xf]
  %v704 = vld [vmem:[%s0 + $0x6b0] sm:$0xf]
  %v705 = vld [vmem:[%s0 + $0x6b4] sm:$0xf]
  %v706 = vld [vmem:[%s0 + $0x6b8] sm:$0xf]
  %v707 = vld [vmem:[%s0 + $0x6bc] sm:$0xf]
  %v708 = vld [vmem:[%s0 + $0x6c0] sm:$0xf]
  %v709 = vld [vmem:[%s0 + $0x6c4] sm:$0xf]
  %v710 = vld [vmem:[%s0 + $0x6c8] sm:$0xf]
  %v711 = vld [vmem:[%s0 + $0x6cc] sm:$0xf]
  %v712 = vld [vmem:[%s0 + $0x6d0] sm:$0xf]
  %v713 = vld [vmem:[%s0 + $0x6d4] sm:$0xf]
  %v714 = vld [vmem:[%s0 + $0x6d8] sm:$0xf]
  %v715 = vld [vmem:[%s0 + $0x6dc] sm:$0xf]
  %v716 = vld [vmem:[%s0 + $0x6e0] sm:$0xf]
  %v717 = vld [vmem:[%s0 + $0x6e4] sm:$0xf]
  %v718 = vld [vmem:[%s0 + $0x6e8] sm:$0xf]
  %v719 = vld [vmem:[%s0 + $0x6ec] sm:$0xf]
  %v720 = vld [vmem:[%s0 + $0x6f0] sm:$0xf]
  %v721 = vld [vmem:[%s0 + $0x6f4] sm:$0xf]
  %v722 = vld [vmem:[%s0 + $0x6f8] sm:$0xf]
  %v723 = vld [vmem:[%s0 + $0x6fc] sm:$0xf]
  %v724 = vld [vmem:[%s0 + $0x700] sm:$0xf]
  %v725 = vld [vmem:[%s0 + $0x704] sm:$0xf]
  %v726 = vld [vmem:[%s0 + $0x708] sm:$0xf]
  %v727 = vld [vmem:[%s0 + $0x70c] sm:$0xf]
  %v728 = vld [vmem:[%s0 + $0x710] sm:$0xf]
  %v729 = vld [vmem:[%s0 + $0x714] sm:$0xf]
  %v730 = vld [vmem:[%s0 + $0x718] sm:$0xf]
  %v731 = vld [vmem:[%s0 + $0x71c] sm:$0xf]
  %v732 = vld [vmem:[%s0 + $0x720] sm:$0xf]
  %v733 = vld [vmem:[%s0 + $0x724] sm:$0xf]
  %v734 = vld [vmem:[%s0 + $0x728] sm:$0xf]
  %v735 = vld [vmem:[%s0 + $0x72c] sm:$0xf]
  %v736 = vld [vmem:[%s0 + $0x730] sm:$0xf]
  %v737 = vld [vmem:[%s0 + $0x734] sm:$0xf]
  %v738 = vld [vmem:[%s0 + $0x738] sm:$0xf]
  %v739 = vld [vmem:[%s0 + $0x73c] sm:$0xf]
  %v740 = vld [vmem:[%s0 + $0x740] sm:$0xf]
  %v741 = vld [vmem:[%s0 + $0x744] sm:$0xf]
  %v742 = vld [vmem:[%s0 + $0x748] sm:$0xf]
  %v743 = vld [vmem:[%s0 + $0x74c] sm:$0xf]
  %v744 = vld [vmem:[%s0 + $0x750] sm:$0xf]
  %v745 = vld [vmem:[%s0 + $0x754] sm:$0xf]
  %v746 = vld [vmem:[%s0 + $0x758] sm:$0xf]
  %v747 = vld [vmem:[%s0 + $0x75c] sm:$0xf]
  %v748 = vld [vmem:[%s0 + $0x760] sm:$0xf]
  %v749 = vld [vmem:[%s0 + $0x764] sm:$0xf]
  %v750 = vld [vmem:[%s0 + $0x768] sm:$0xf]
  %v751 = vld [vmem:[%s0 + $0x76c] sm:$0xf]
  %v752 = vld [vmem:[%s0 + $0x770] sm:$0xf]
  %v753 = vld [vmem:[%s0 + $0x774] sm:$0xf]
  %v754 = vld [vmem:[%s0 + $0x778] sm:$0xf]
  %v755 = vld [vmem:[%s0 + $0x77c] sm:$0xf]
  %v756 = vld [vmem:[%s0 + $0x780] sm:$0xf]
  %v757 = vld [vmem:[%s0 + $0x784] sm:$0xf]
  %v758 = vld [vmem:[%s0 + $0x788] sm:$0xf]
  %v759 = vld [vmem:[%s0 + $0x78c] sm:$0xf]
  %v760 = vld [vmem:[%s0 + $0x790] sm:$0xf]
  %v761 = vld [vmem:[%s0 + $0x794] sm:$0xf]
  %v762 = vld [vmem:[%s0 + $0x798] sm:$0xf]
  %v763 = vld [vmem:[%s0 + $0x79c] sm:$0xf]
  %v764 = vld [vmem:[%s0 + $0x7a0] sm:$0xf]
  %v765 = vld [vmem:[%s0 + $0x7a4] sm:$0xf]
  %v766 = vld [vmem:[%s0 + $0x7a8] sm:$0xf]
  %v767 = vld [vmem:[%s0 + $0x7ac] sm:$0xf]
  %v768 = vld [vmem:[%s0 + $0x7b0] sm:$0xf]
  %v769 = vld [vmem:[%s0 + $0x7b4] sm:$0xf]
  %v770 = vld [vmem:[%s0 + $0x7b8] sm:$0xf]
  %v771 = vld [vmem:[%s0 + $0x7bc] sm:$0xf]
  %v772 = vld [vmem:[%s0 + $0x7c0] sm:$0xf]
  %v773 = vld [vmem:[%s0 + $0x7c4] sm:$0xf]
  %v774 = vld [vmem:[%s0 + $0x7c8] sm:$0xf]
  %v775 = vld [vmem:[%s0 + $0x7cc] sm:$0xf]
  %v776 = vld [vmem:[%s0 + $0x7d0] sm:$0xf]
  %v777 = vld [vmem:[%s0 + $0x7d4] sm:$0xf]
  %v778 = vld [vmem:[%s0 + $0x7d8] sm:$0xf]
  %v779 = vld [vmem:[%s0 + $0x7dc] sm:$0xf]
  %v780 = vld [vmem:[%s0 + $0x7e0] sm:$0xf]
  %v781 = vld [vmem:[%s0 + $0x7e4] sm:$0xf]
  %v782 = vld [vmem:[%s0 + $0x7e8] sm:$0xf]
  %v783 = vld [vmem:[%s0 + $0x7ec] sm:$0xf]
  %v784 = vld [vmem:[%s0 + $0x7f0] sm:$0xf]
  %v785 = vld [vmem:[%s0 + $0x7f4] sm:$0xf]
  %v786 = vld [vmem:[%s0 + $0x7f8] sm:$0xf]
  %v787 = vld [vmem:[%s0 + $0x7fc] sm:$0xf]
  %v788 = vld [vmem:[%s2] sm:$0xff]
  %v789 = vld [vmem:[%s2 + $0x8] sm:$0xff]
  %v790 = vld [vmem:[%s2 + $0x10] sm:$0xff]
  %v791 = vld [vmem:[%s2 + $0x18] sm:$0xff]
  %v792 = vld [vmem:[%s2 + $0x20] sm:$0xff]
  %v793 = vld [vmem:[%s2 + $0x28] sm:$0xff]
  %v794 = vld [vmem:[%s2 + $0x30] sm:$0xff]
  %v795 = vld [vmem:[%s2 + $0x38] sm:$0xff]
  %v796 = vld [vmem:[%s2 + $0x40] sm:$0xff]
  %v797 = vld [vmem:[%s2 + $0x48] sm:$0xff]
  %v798 = vld [vmem:[%s2 + $0x50] sm:$0xff]
  %v799 = vld [vmem:[%s2 + $0x58] sm:$0xff]
  %v800 = vld [vmem:[%s2 + $0x60] sm:$0xff]
  %v801 = vld [vmem:[%s2 + $0x68] sm:$0xff]
  %v802 = vld [vmem:[%s2 + $0x70] sm:$0xff]
  %v803 = vld [vmem:[%s2 + $0x78] sm:$0xff]
  %805 = vset.pattern.permute.xlu0 0
  %806 = vperm.xlu0 %805, %v788
  %v807 = vpop.permute.xlu0 %806
  %810 = vset.pattern.permute.xlu0 0
  %811 = vperm.xlu0 %810, %v789
  %v812 = vpop.permute.xlu0 %811
  %815 = vset.pattern.permute.xlu0 0
  %816 = vperm.xlu0 %815, %v790
  %v817 = vpop.permute.xlu0 %816
  %820 = vset.pattern.permute.xlu0 0
  %821 = vperm.xlu0 %820, %v791
  %v822 = vpop.permute.xlu0 %821
  %825 = vset.pattern.permute.xlu0 0
  %826 = vperm.xlu0 %825, %v792
  %v827 = vpop.permute.xlu0 %826
  %830 = vset.pattern.permute.xlu0 0
  %831 = vperm.xlu0 %830, %v793
  %v832 = vpop.permute.xlu0 %831
  %835 = vset.pattern.permute.xlu0 0
  %836 = vperm.xlu0 %835, %v794
  %v837 = vpop.permute.xlu0 %836
  %840 = vset.pattern.permute.xlu0 0
  %841 = vperm.xlu0 %840, %v795
  %v842 = vpop.permute.xlu0 %841
  %845 = vset.pattern.permute.xlu0 0
  %846 = vperm.xlu0 %845, %v796
  %v847 = vpop.permute.xlu0 %846
  %850 = vset.pattern.permute.xlu0 0
  %851 = vperm.xlu0 %850, %v797
  %v852 = vpop.permute.xlu0 %851
  %855 = vset.pattern.permute.xlu0 0
  %856 = vperm.xlu0 %855, %v798
  %v857 = vpop.permute.xlu0 %856
  %860 = vset.pattern.permute.xlu0 0
  %861 = vperm.xlu0 %860, %v799
  %v862 = vpop.permute.xlu0 %861
  %865 = vset.pattern.permute.xlu0 0
  %866 = vperm.xlu0 %865, %v800
  %v867 = vpop.permute.xlu0 %866
  %870 = vset.pattern.permute.xlu0 0
  %871 = vperm.xlu0 %870, %v801
  %v872 = vpop.permute.xlu0 %871
  %875 = vset.pattern.permute.xlu0 0
  %876 = vperm.xlu0 %875, %v802
  %v877 = vpop.permute.xlu0 %876
  %880 = vset.pattern.permute.xlu0 0
  %881 = vperm.xlu0 %880, %v803
  %v882 = vpop.permute.xlu0 %881
  %v1140 = vunpack.c.l.b16 %v20
  %v1141 = vunpack.c.h.b16 %v20
  %v1142 = vunpack.c.l.b16 %v21
  %v1143 = vunpack.c.h.b16 %v21
  %v1144 = vunpack.c.l.b16 %v22
  %v1145 = vunpack.c.h.b16 %v22
  %v1146 = vunpack.c.l.b16 %v23
  %v1147 = vunpack.c.h.b16 %v23
  %v1148 = vunpack.c.l.b16 %v24
  %v1149 = vunpack.c.h.b16 %v24
  %v1150 = vunpack.c.l.b16 %v25
  %v1151 = vunpack.c.h.b16 %v25
  %v1152 = vunpack.c.l.b16 %v26
  %v1153 = vunpack.c.h.b16 %v26
  %v1154 = vunpack.c.l.b16 %v27
  %v1155 = vunpack.c.h.b16 %v27
  %v1156 = vunpack.c.l.b16 %v28
  %v1157 = vunpack.c.h.b16 %v28
  %v1158 = vunpack.c.l.b16 %v29
  %v1159 = vunpack.c.h.b16 %v29
  %v1160 = vunpack.c.l.b16 %v30
  %v1161 = vunpack.c.h.b16 %v30
  %v1162 = vunpack.c.l.b16 %v31
  %v1163 = vunpack.c.h.b16 %v31
  %v1164 = vunpack.c.l.b16 %v32
  %v1165 = vunpack.c.h.b16 %v32
  %v1166 = vunpack.c.l.b16 %v33
  %v1167 = vunpack.c.h.b16 %v33
  %v1168 = vunpack.c.l.b16 %v34
  %v1169 = vunpack.c.h.b16 %v34
  %v1170 = vunpack.c.l.b16 %v35
  %v1171 = vunpack.c.h.b16 %v35
  %v1172 = vunpack.c.l.b16 %v36
  %v1173 = vunpack.c.h.b16 %v36
  %v1174 = vunpack.c.l.b16 %v37
  %v1175 = vunpack.c.h.b16 %v37
  %v1176 = vunpack.c.l.b16 %v38
  %v1177 = vunpack.c.h.b16 %v38
  %v1178 = vunpack.c.l.b16 %v39
  %v1179 = vunpack.c.h.b16 %v39
  %v1180 = vunpack.c.l.b16 %v40
  %v1181 = vunpack.c.h.b16 %v40
  %v1182 = vunpack.c.l.b16 %v41
  %v1183 = vunpack.c.h.b16 %v41
  %v1184 = vunpack.c.l.b16 %v42
  %v1185 = vunpack.c.h.b16 %v42
  %v1186 = vunpack.c.l.b16 %v43
  %v1187 = vunpack.c.h.b16 %v43
  %v1188 = vunpack.c.l.b16 %v44
  %v1189 = vunpack.c.h.b16 %v44
  %v1190 = vunpack.c.l.b16 %v45
  %v1191 = vunpack.c.h.b16 %v45
  %v1192 = vunpack.c.l.b16 %v46
  %v1193 = vunpack.c.h.b16 %v46
  %v1194 = vunpack.c.l.b16 %v47
  %v1195 = vunpack.c.h.b16 %v47
  %v1196 = vunpack.c.l.b16 %v48
  %v1197 = vunpack.c.h.b16 %v48
  %v1198 = vunpack.c.l.b16 %v49
  %v1199 = vunpack.c.h.b16 %v49
  %v1200 = vunpack.c.l.b16 %v50
  %v1201 = vunpack.c.h.b16 %v50
  %v1202 = vunpack.c.l.b16 %v51
  %v1203 = vunpack.c.h.b16 %v51
  %v1204 = vunpack.c.l.b16 %v52
  %v1205 = vunpack.c.h.b16 %v52
  %v1206 = vunpack.c.l.b16 %v53
  %v1207 = vunpack.c.h.b16 %v53
  %v1208 = vunpack.c.l.b16 %v54
  %v1209 = vunpack.c.h.b16 %v54
  %v1210 = vunpack.c.l.b16 %v55
  %v1211 = vunpack.c.h.b16 %v55
  %v1212 = vunpack.c.l.b16 %v56
  %v1213 = vunpack.c.h.b16 %v56
  %v1214 = vunpack.c.l.b16 %v57
  %v1215 = vunpack.c.h.b16 %v57
  %v1216 = vunpack.c.l.b16 %v58
  %v1217 = vunpack.c.h.b16 %v58
  %v1218 = vunpack.c.l.b16 %v59
  %v1219 = vunpack.c.h.b16 %v59
  %v1220 = vunpack.c.l.b16 %v60
  %v1221 = vunpack.c.h.b16 %v60
  %v1222 = vunpack.c.l.b16 %v61
  %v1223 = vunpack.c.h.b16 %v61
  %v1224 = vunpack.c.l.b16 %v62
  %v1225 = vunpack.c.h.b16 %v62
  %v1226 = vunpack.c.l.b16 %v63
  %v1227 = vunpack.c.h.b16 %v63
  %v1228 = vunpack.c.l.b16 %v64
  %v1229 = vunpack.c.h.b16 %v64
  %v1230 = vunpack.c.l.b16 %v65
  %v1231 = vunpack.c.h.b16 %v65
  %v1232 = vunpack.c.l.b16 %v66
  %v1233 = vunpack.c.h.b16 %v66
  %v1234 = vunpack.c.l.b16 %v67
  %v1235 = vunpack.c.h.b16 %v67
  %v1236 = vunpack.c.l.b16 %v68
  %v1237 = vunpack.c.h.b16 %v68
  %v1238 = vunpack.c.l.b16 %v69
  %v1239 = vunpack.c.h.b16 %v69
  %v1240 = vunpack.c.l.b16 %v70
  %v1241 = vunpack.c.h.b16 %v70
  %v1242 = vunpack.c.l.b16 %v71
  %v1243 = vunpack.c.h.b16 %v71
  %v1244 = vunpack.c.l.b16 %v72
  %v1245 = vunpack.c.h.b16 %v72
  %v1246 = vunpack.c.l.b16 %v73
  %v1247 = vunpack.c.h.b16 %v73
  %v1248 = vunpack.c.l.b16 %v74
  %v1249 = vunpack.c.h.b16 %v74
  %v1250 = vunpack.c.l.b16 %v75
  %v1251 = vunpack.c.h.b16 %v75
  %v1252 = vunpack.c.l.b16 %v76
  %v1253 = vunpack.c.h.b16 %v76
  %v1254 = vunpack.c.l.b16 %v77
  %v1255 = vunpack.c.h.b16 %v77
  %v1256 = vunpack.c.l.b16 %v78
  %v1257 = vunpack.c.h.b16 %v78
  %v1258 = vunpack.c.l.b16 %v79
  %v1259 = vunpack.c.h.b16 %v79
  %v1260 = vunpack.c.l.b16 %v80
  %v1261 = vunpack.c.h.b16 %v80
  %v1262 = vunpack.c.l.b16 %v81
  %v1263 = vunpack.c.h.b16 %v81
  %v1264 = vunpack.c.l.b16 %v82
  %v1265 = vunpack.c.h.b16 %v82
  %v1266 = vunpack.c.l.b16 %v83
  %v1267 = vunpack.c.h.b16 %v83
  %v1268 = vunpack.c.l.b16 %v84
  %v1269 = vunpack.c.h.b16 %v84
  %v1270 = vunpack.c.l.b16 %v85
  %v1271 = vunpack.c.h.b16 %v85
  %v1272 = vunpack.c.l.b16 %v86
  %v1273 = vunpack.c.h.b16 %v86
  %v1274 = vunpack.c.l.b16 %v87
  %v1275 = vunpack.c.h.b16 %v87
  %v1276 = vunpack.c.l.b16 %v88
  %v1277 = vunpack.c.h.b16 %v88
  %v1278 = vunpack.c.l.b16 %v89
  %v1279 = vunpack.c.h.b16 %v89
  %v1280 = vunpack.c.l.b16 %v90
  %v1281 = vunpack.c.h.b16 %v90
  %v1282 = vunpack.c.l.b16 %v91
  %v1283 = vunpack.c.h.b16 %v91
  %v1284 = vunpack.c.l.b16 %v92
  %v1285 = vunpack.c.h.b16 %v92
  %v1286 = vunpack.c.l.b16 %v93
  %v1287 = vunpack.c.h.b16 %v93
  %v1288 = vunpack.c.l.b16 %v94
  %v1289 = vunpack.c.h.b16 %v94
  %v1290 = vunpack.c.l.b16 %v95
  %v1291 = vunpack.c.h.b16 %v95
  %v1292 = vunpack.c.l.b16 %v96
  %v1293 = vunpack.c.h.b16 %v96
  %v1294 = vunpack.c.l.b16 %v97
  %v1295 = vunpack.c.h.b16 %v97
  %v1296 = vunpack.c.l.b16 %v98
  %v1297 = vunpack.c.h.b16 %v98
  %v1298 = vunpack.c.l.b16 %v99
  %v1299 = vunpack.c.h.b16 %v99
  %v1300 = vunpack.c.l.b16 %v100
  %v1301 = vunpack.c.h.b16 %v100
  %v1302 = vunpack.c.l.b16 %v101
  %v1303 = vunpack.c.h.b16 %v101
  %v1304 = vunpack.c.l.b16 %v102
  %v1305 = vunpack.c.h.b16 %v102
  %v1306 = vunpack.c.l.b16 %v103
  %v1307 = vunpack.c.h.b16 %v103
  %v1308 = vunpack.c.l.b16 %v104
  %v1309 = vunpack.c.h.b16 %v104
  %v1310 = vunpack.c.l.b16 %v105
  %v1311 = vunpack.c.h.b16 %v105
  %v1312 = vunpack.c.l.b16 %v106
  %v1313 = vunpack.c.h.b16 %v106
  %v1314 = vunpack.c.l.b16 %v107
  %v1315 = vunpack.c.h.b16 %v107
  %v1316 = vunpack.c.l.b16 %v108
  %v1317 = vunpack.c.h.b16 %v108
  %v1318 = vunpack.c.l.b16 %v109
  %v1319 = vunpack.c.h.b16 %v109
  %v1320 = vunpack.c.l.b16 %v110
  %v1321 = vunpack.c.h.b16 %v110
  %v1322 = vunpack.c.l.b16 %v111
  %v1323 = vunpack.c.h.b16 %v111
  %v1324 = vunpack.c.l.b16 %v112
  %v1325 = vunpack.c.h.b16 %v112
  %v1326 = vunpack.c.l.b16 %v113
  %v1327 = vunpack.c.h.b16 %v113
  %v1328 = vunpack.c.l.b16 %v114
  %v1329 = vunpack.c.h.b16 %v114
  %v1330 = vunpack.c.l.b16 %v115
  %v1331 = vunpack.c.h.b16 %v115
  %v1332 = vunpack.c.l.b16 %v116
  %v1333 = vunpack.c.h.b16 %v116
  %v1334 = vunpack.c.l.b16 %v117
  %v1335 = vunpack.c.h.b16 %v117
  %v1336 = vunpack.c.l.b16 %v118
  %v1337 = vunpack.c.h.b16 %v118
  %v1338 = vunpack.c.l.b16 %v119
  %v1339 = vunpack.c.h.b16 %v119
  %v1340 = vunpack.c.l.b16 %v120
  %v1341 = vunpack.c.h.b16 %v120
  %v1342 = vunpack.c.l.b16 %v121
  %v1343 = vunpack.c.h.b16 %v121
  %v1344 = vunpack.c.l.b16 %v122
  %v1345 = vunpack.c.h.b16 %v122
  %v1346 = vunpack.c.l.b16 %v123
  %v1347 = vunpack.c.h.b16 %v123
  %v1348 = vunpack.c.l.b16 %v124
  %v1349 = vunpack.c.h.b16 %v124
  %v1350 = vunpack.c.l.b16 %v125
  %v1351 = vunpack.c.h.b16 %v125
  %v1352 = vunpack.c.l.b16 %v126
  %v1353 = vunpack.c.h.b16 %v126
  %v1354 = vunpack.c.l.b16 %v127
  %v1355 = vunpack.c.h.b16 %v127
  %v1356 = vunpack.c.l.b16 %v128
  %v1357 = vunpack.c.h.b16 %v128
  %v1358 = vunpack.c.l.b16 %v129
  %v1359 = vunpack.c.h.b16 %v129
  %v1360 = vunpack.c.l.b16 %v130
  %v1361 = vunpack.c.h.b16 %v130
  %v1362 = vunpack.c.l.b16 %v131
  %v1363 = vunpack.c.h.b16 %v131
  %v1364 = vunpack.c.l.b16 %v132
  %v1365 = vunpack.c.h.b16 %v132
  %v1366 = vunpack.c.l.b16 %v133
  %v1367 = vunpack.c.h.b16 %v133
  %v1368 = vunpack.c.l.b16 %v134
  %v1369 = vunpack.c.h.b16 %v134
  %v1370 = vunpack.c.l.b16 %v135
  %v1371 = vunpack.c.h.b16 %v135
  %v1372 = vunpack.c.l.b16 %v136
  %v1373 = vunpack.c.h.b16 %v136
  %v1374 = vunpack.c.l.b16 %v137
  %v1375 = vunpack.c.h.b16 %v137
  %v1376 = vunpack.c.l.b16 %v138
  %v1377 = vunpack.c.h.b16 %v138
  %v1378 = vunpack.c.l.b16 %v139
  %v1379 = vunpack.c.h.b16 %v139
  %v1380 = vunpack.c.l.b16 %v140
  %v1381 = vunpack.c.h.b16 %v140
  %v1382 = vunpack.c.l.b16 %v141
  %v1383 = vunpack.c.h.b16 %v141
  %v1384 = vunpack.c.l.b16 %v142
  %v1385 = vunpack.c.h.b16 %v142
  %v1386 = vunpack.c.l.b16 %v143
  %v1387 = vunpack.c.h.b16 %v143
  %v1388 = vunpack.c.l.b16 %v144
  %v1389 = vunpack.c.h.b16 %v144
  %v1390 = vunpack.c.l.b16 %v145
  %v1391 = vunpack.c.h.b16 %v145
  %v1392 = vunpack.c.l.b16 %v146
  %v1393 = vunpack.c.h.b16 %v146
  %v1394 = vunpack.c.l.b16 %v147
  %v1395 = vunpack.c.h.b16 %v147
  %v1396 = vunpack.c.l.b16 %v148
  %v1397 = vunpack.c.h.b16 %v148
  %v1398 = vunpack.c.l.b16 %v149
  %v1399 = vunpack.c.h.b16 %v149
  %v1400 = vunpack.c.l.b16 %v150
  %v1401 = vunpack.c.h.b16 %v150
  %v1402 = vunpack.c.l.b16 %v151
  %v1403 = vunpack.c.h.b16 %v151
  %v1404 = vunpack.c.l.b16 %v152
  %v1405 = vunpack.c.h.b16 %v152
  %v1406 = vunpack.c.l.b16 %v153
  %v1407 = vunpack.c.h.b16 %v153
  %v1408 = vunpack.c.l.b16 %v154
  %v1409 = vunpack.c.h.b16 %v154
  %v1410 = vunpack.c.l.b16 %v155
  %v1411 = vunpack.c.h.b16 %v155
  %v1412 = vunpack.c.l.b16 %v156
  %v1413 = vunpack.c.h.b16 %v156
  %v1414 = vunpack.c.l.b16 %v157
  %v1415 = vunpack.c.h.b16 %v157
  %v1416 = vunpack.c.l.b16 %v158
  %v1417 = vunpack.c.h.b16 %v158
  %v1418 = vunpack.c.l.b16 %v159
  %v1419 = vunpack.c.h.b16 %v159
  %v1420 = vunpack.c.l.b16 %v160
  %v1421 = vunpack.c.h.b16 %v160
  %v1422 = vunpack.c.l.b16 %v161
  %v1423 = vunpack.c.h.b16 %v161
  %v1424 = vunpack.c.l.b16 %v162
  %v1425 = vunpack.c.h.b16 %v162
  %v1426 = vunpack.c.l.b16 %v163
  %v1427 = vunpack.c.h.b16 %v163
  %v1428 = vunpack.c.l.b16 %v164
  %v1429 = vunpack.c.h.b16 %v164
  %v1430 = vunpack.c.l.b16 %v165
  %v1431 = vunpack.c.h.b16 %v165
  %v1432 = vunpack.c.l.b16 %v166
  %v1433 = vunpack.c.h.b16 %v166
  %v1434 = vunpack.c.l.b16 %v167
  %v1435 = vunpack.c.h.b16 %v167
  %v1436 = vunpack.c.l.b16 %v168
  %v1437 = vunpack.c.h.b16 %v168
  %v1438 = vunpack.c.l.b16 %v169
  %v1439 = vunpack.c.h.b16 %v169
  %v1440 = vunpack.c.l.b16 %v170
  %v1441 = vunpack.c.h.b16 %v170
  %v1442 = vunpack.c.l.b16 %v171
  %v1443 = vunpack.c.h.b16 %v171
  %v1444 = vunpack.c.l.b16 %v172
  %v1445 = vunpack.c.h.b16 %v172
  %v1446 = vunpack.c.l.b16 %v173
  %v1447 = vunpack.c.h.b16 %v173
  %v1448 = vunpack.c.l.b16 %v174
  %v1449 = vunpack.c.h.b16 %v174
  %v1450 = vunpack.c.l.b16 %v175
  %v1451 = vunpack.c.h.b16 %v175
  %v1452 = vunpack.c.l.b16 %v176
  %v1453 = vunpack.c.h.b16 %v176
  %v1454 = vunpack.c.l.b16 %v177
  %v1455 = vunpack.c.h.b16 %v177
  %v1456 = vunpack.c.l.b16 %v178
  %v1457 = vunpack.c.h.b16 %v178
  %v1458 = vunpack.c.l.b16 %v179
  %v1459 = vunpack.c.h.b16 %v179
  %v1460 = vunpack.c.l.b16 %v180
  %v1461 = vunpack.c.h.b16 %v180
  %v1462 = vunpack.c.l.b16 %v181
  %v1463 = vunpack.c.h.b16 %v181
  %v1464 = vunpack.c.l.b16 %v182
  %v1465 = vunpack.c.h.b16 %v182
  %v1466 = vunpack.c.l.b16 %v183
  %v1467 = vunpack.c.h.b16 %v183
  %v1468 = vunpack.c.l.b16 %v184
  %v1469 = vunpack.c.h.b16 %v184
  %v1470 = vunpack.c.l.b16 %v185
  %v1471 = vunpack.c.h.b16 %v185
  %v1472 = vunpack.c.l.b16 %v186
  %v1473 = vunpack.c.h.b16 %v186
  %v1474 = vunpack.c.l.b16 %v187
  %v1475 = vunpack.c.h.b16 %v187
  %v1476 = vunpack.c.l.b16 %v188
  %v1477 = vunpack.c.h.b16 %v188
  %v1478 = vunpack.c.l.b16 %v189
  %v1479 = vunpack.c.h.b16 %v189
  %v1480 = vunpack.c.l.b16 %v190
  %v1481 = vunpack.c.h.b16 %v190
  %v1482 = vunpack.c.l.b16 %v191
  %v1483 = vunpack.c.h.b16 %v191
  %v1484 = vunpack.c.l.b16 %v192
  %v1485 = vunpack.c.h.b16 %v192
  %v1486 = vunpack.c.l.b16 %v193
  %v1487 = vunpack.c.h.b16 %v193
  %v1488 = vunpack.c.l.b16 %v194
  %v1489 = vunpack.c.h.b16 %v194
  %v1490 = vunpack.c.l.b16 %v195
  %v1491 = vunpack.c.h.b16 %v195
  %v1492 = vunpack.c.l.b16 %v196
  %v1493 = vunpack.c.h.b16 %v196
  %v1494 = vunpack.c.l.b16 %v197
  %v1495 = vunpack.c.h.b16 %v197
  %v1496 = vunpack.c.l.b16 %v198
  %v1497 = vunpack.c.h.b16 %v198
  %v1498 = vunpack.c.l.b16 %v199
  %v1499 = vunpack.c.h.b16 %v199
  %v1500 = vunpack.c.l.b16 %v200
  %v1501 = vunpack.c.h.b16 %v200
  %v1502 = vunpack.c.l.b16 %v201
  %v1503 = vunpack.c.h.b16 %v201
  %v1504 = vunpack.c.l.b16 %v202
  %v1505 = vunpack.c.h.b16 %v202
  %v1506 = vunpack.c.l.b16 %v203
  %v1507 = vunpack.c.h.b16 %v203
  %v1508 = vunpack.c.l.b16 %v204
  %v1509 = vunpack.c.h.b16 %v204
  %v1510 = vunpack.c.l.b16 %v205
  %v1511 = vunpack.c.h.b16 %v205
  %v1512 = vunpack.c.l.b16 %v206
  %v1513 = vunpack.c.h.b16 %v206
  %v1514 = vunpack.c.l.b16 %v207
  %v1515 = vunpack.c.h.b16 %v207
  %v1516 = vunpack.c.l.b16 %v208
  %v1517 = vunpack.c.h.b16 %v208
  %v1518 = vunpack.c.l.b16 %v209
  %v1519 = vunpack.c.h.b16 %v209
  %v1520 = vunpack.c.l.b16 %v210
  %v1521 = vunpack.c.h.b16 %v210
  %v1522 = vunpack.c.l.b16 %v211
  %v1523 = vunpack.c.h.b16 %v211
  %v1524 = vunpack.c.l.b16 %v212
  %v1525 = vunpack.c.h.b16 %v212
  %v1526 = vunpack.c.l.b16 %v213
  %v1527 = vunpack.c.h.b16 %v213
  %v1528 = vunpack.c.l.b16 %v214
  %v1529 = vunpack.c.h.b16 %v214
  %v1530 = vunpack.c.l.b16 %v215
  %v1531 = vunpack.c.h.b16 %v215
  %v1532 = vunpack.c.l.b16 %v216
  %v1533 = vunpack.c.h.b16 %v216
  %v1534 = vunpack.c.l.b16 %v217
  %v1535 = vunpack.c.h.b16 %v217
  %v1536 = vunpack.c.l.b16 %v218
  %v1537 = vunpack.c.h.b16 %v218
  %v1538 = vunpack.c.l.b16 %v219
  %v1539 = vunpack.c.h.b16 %v219
  %v1540 = vunpack.c.l.b16 %v220
  %v1541 = vunpack.c.h.b16 %v220
  %v1542 = vunpack.c.l.b16 %v221
  %v1543 = vunpack.c.h.b16 %v221
  %v1544 = vunpack.c.l.b16 %v222
  %v1545 = vunpack.c.h.b16 %v222
  %v1546 = vunpack.c.l.b16 %v223
  %v1547 = vunpack.c.h.b16 %v223
  %v1548 = vunpack.c.l.b16 %v224
  %v1549 = vunpack.c.h.b16 %v224
  %v1550 = vunpack.c.l.b16 %v225
  %v1551 = vunpack.c.h.b16 %v225
  %v1552 = vunpack.c.l.b16 %v226
  %v1553 = vunpack.c.h.b16 %v226
  %v1554 = vunpack.c.l.b16 %v227
  %v1555 = vunpack.c.h.b16 %v227
  %v1556 = vunpack.c.l.b16 %v228
  %v1557 = vunpack.c.h.b16 %v228
  %v1558 = vunpack.c.l.b16 %v229
  %v1559 = vunpack.c.h.b16 %v229
  %v1560 = vunpack.c.l.b16 %v230
  %v1561 = vunpack.c.h.b16 %v230
  %v1562 = vunpack.c.l.b16 %v231
  %v1563 = vunpack.c.h.b16 %v231
  %v1564 = vunpack.c.l.b16 %v232
  %v1565 = vunpack.c.h.b16 %v232
  %v1566 = vunpack.c.l.b16 %v233
  %v1567 = vunpack.c.h.b16 %v233
  %v1568 = vunpack.c.l.b16 %v234
  %v1569 = vunpack.c.h.b16 %v234
  %v1570 = vunpack.c.l.b16 %v235
  %v1571 = vunpack.c.h.b16 %v235
  %v1572 = vunpack.c.l.b16 %v236
  %v1573 = vunpack.c.h.b16 %v236
  %v1574 = vunpack.c.l.b16 %v237
  %v1575 = vunpack.c.h.b16 %v237
  %v1576 = vunpack.c.l.b16 %v238
  %v1577 = vunpack.c.h.b16 %v238
  %v1578 = vunpack.c.l.b16 %v239
  %v1579 = vunpack.c.h.b16 %v239
  %v1580 = vunpack.c.l.b16 %v240
  %v1581 = vunpack.c.h.b16 %v240
  %v1582 = vunpack.c.l.b16 %v241
  %v1583 = vunpack.c.h.b16 %v241
  %v1584 = vunpack.c.l.b16 %v242
  %v1585 = vunpack.c.h.b16 %v242
  %v1586 = vunpack.c.l.b16 %v243
  %v1587 = vunpack.c.h.b16 %v243
  %v1588 = vunpack.c.l.b16 %v244
  %v1589 = vunpack.c.h.b16 %v244
  %v1590 = vunpack.c.l.b16 %v245
  %v1591 = vunpack.c.h.b16 %v245
  %v1592 = vunpack.c.l.b16 %v246
  %v1593 = vunpack.c.h.b16 %v246
  %v1594 = vunpack.c.l.b16 %v247
  %v1595 = vunpack.c.h.b16 %v247
  %v1596 = vunpack.c.l.b16 %v248
  %v1597 = vunpack.c.h.b16 %v248
  %v1598 = vunpack.c.l.b16 %v249
  %v1599 = vunpack.c.h.b16 %v249
  %v1600 = vunpack.c.l.b16 %v250
  %v1601 = vunpack.c.h.b16 %v250
  %v1602 = vunpack.c.l.b16 %v251
  %v1603 = vunpack.c.h.b16 %v251
  %v1604 = vunpack.c.l.b16 %v252
  %v1605 = vunpack.c.h.b16 %v252
  %v1606 = vunpack.c.l.b16 %v253
  %v1607 = vunpack.c.h.b16 %v253
  %v1608 = vunpack.c.l.b16 %v254
  %v1609 = vunpack.c.h.b16 %v254
  %v1610 = vunpack.c.l.b16 %v255
  %v1611 = vunpack.c.h.b16 %v255
  %v1612 = vunpack.c.l.b16 %v256
  %v1613 = vunpack.c.h.b16 %v256
  %v1614 = vunpack.c.l.b16 %v257
  %v1615 = vunpack.c.h.b16 %v257
  %v1616 = vunpack.c.l.b16 %v258
  %v1617 = vunpack.c.h.b16 %v258
  %v1618 = vunpack.c.l.b16 %v259
  %v1619 = vunpack.c.h.b16 %v259
  %v1620 = vunpack.c.l.b16 %v260
  %v1621 = vunpack.c.h.b16 %v260
  %v1622 = vunpack.c.l.b16 %v261
  %v1623 = vunpack.c.h.b16 %v261
  %v1624 = vunpack.c.l.b16 %v262
  %v1625 = vunpack.c.h.b16 %v262
  %v1626 = vunpack.c.l.b16 %v263
  %v1627 = vunpack.c.h.b16 %v263
  %v1628 = vunpack.c.l.b16 %v264
  %v1629 = vunpack.c.h.b16 %v264
  %v1630 = vunpack.c.l.b16 %v265
  %v1631 = vunpack.c.h.b16 %v265
  %v1632 = vunpack.c.l.b16 %v266
  %v1633 = vunpack.c.h.b16 %v266
  %v1634 = vunpack.c.l.b16 %v267
  %v1635 = vunpack.c.h.b16 %v267
  %v1636 = vunpack.c.l.b16 %v268
  %v1637 = vunpack.c.h.b16 %v268
  %v1638 = vunpack.c.l.b16 %v269
  %v1639 = vunpack.c.h.b16 %v269
  %v1640 = vunpack.c.l.b16 %v270
  %v1641 = vunpack.c.h.b16 %v270
  %v1642 = vunpack.c.l.b16 %v271
  %v1643 = vunpack.c.h.b16 %v271
  %v1644 = vunpack.c.l.b16 %v272
  %v1645 = vunpack.c.h.b16 %v272
  %v1646 = vunpack.c.l.b16 %v273
  %v1647 = vunpack.c.h.b16 %v273
  %v1648 = vunpack.c.l.b16 %v274
  %v1649 = vunpack.c.h.b16 %v274
  %v1650 = vunpack.c.l.b16 %v275
  %v1651 = vunpack.c.h.b16 %v275
  %v1652 = vpack.c.b16 %v1172, %v1140
  %v1653 = vpack.c.b16 %v1173, %v1141
  %v1654 = vpack.c.b16 %v1174, %v1142
  %v1655 = vpack.c.b16 %v1175, %v1143
  %v1656 = vpack.c.b16 %v1176, %v1144
  %v1657 = vpack.c.b16 %v1177, %v1145
  %v1658 = vpack.c.b16 %v1178, %v1146
  %v1659 = vpack.c.b16 %v1179, %v1147
  %v1660 = vpack.c.b16 %v1180, %v1148
  %v1661 = vpack.c.b16 %v1181, %v1149
  %v1662 = vpack.c.b16 %v1182, %v1150
  %v1663 = vpack.c.b16 %v1183, %v1151
  %v1664 = vpack.c.b16 %v1184, %v1152
  %v1665 = vpack.c.b16 %v1185, %v1153
  %v1666 = vpack.c.b16 %v1186, %v1154
  %v1667 = vpack.c.b16 %v1187, %v1155
  %v1668 = vpack.c.b16 %v1188, %v1156
  %v1669 = vpack.c.b16 %v1189, %v1157
  %v1670 = vpack.c.b16 %v1190, %v1158
  %v1671 = vpack.c.b16 %v1191, %v1159
  %v1672 = vpack.c.b16 %v1192, %v1160
  %v1673 = vpack.c.b16 %v1193, %v1161
  %v1674 = vpack.c.b16 %v1194, %v1162
  %v1675 = vpack.c.b16 %v1195, %v1163
  %v1676 = vpack.c.b16 %v1196, %v1164
  %v1677 = vpack.c.b16 %v1197, %v1165
  %v1678 = vpack.c.b16 %v1198, %v1166
  %v1679 = vpack.c.b16 %v1199, %v1167
  %v1680 = vpack.c.b16 %v1200, %v1168
  %v1681 = vpack.c.b16 %v1201, %v1169
  %v1682 = vpack.c.b16 %v1202, %v1170
  %v1683 = vpack.c.b16 %v1203, %v1171
  %v1684 = vpack.c.b16 %v1236, %v1204
  %v1685 = vpack.c.b16 %v1237, %v1205
  %v1686 = vpack.c.b16 %v1238, %v1206
  %v1687 = vpack.c.b16 %v1239, %v1207
  %v1688 = vpack.c.b16 %v1240, %v1208
  %v1689 = vpack.c.b16 %v1241, %v1209
  %v1690 = vpack.c.b16 %v1242, %v1210
  %v1691 = vpack.c.b16 %v1243, %v1211
  %v1692 = vpack.c.b16 %v1244, %v1212
  %v1693 = vpack.c.b16 %v1245, %v1213
  %v1694 = vpack.c.b16 %v1246, %v1214
  %v1695 = vpack.c.b16 %v1247, %v1215
  %v1696 = vpack.c.b16 %v1248, %v1216
  %v1697 = vpack.c.b16 %v1249, %v1217
  %v1698 = vpack.c.b16 %v1250, %v1218
  %v1699 = vpack.c.b16 %v1251, %v1219
  %v1700 = vpack.c.b16 %v1252, %v1220
  %v1701 = vpack.c.b16 %v1253, %v1221
  %v1702 = vpack.c.b16 %v1254, %v1222
  %v1703 = vpack.c.b16 %v1255, %v1223
  %v1704 = vpack.c.b16 %v1256, %v1224
  %v1705 = vpack.c.b16 %v1257, %v1225
  %v1706 = vpack.c.b16 %v1258, %v1226
  %v1707 = vpack.c.b16 %v1259, %v1227
  %v1708 = vpack.c.b16 %v1260, %v1228
  %v1709 = vpack.c.b16 %v1261, %v1229
  %v1710 = vpack.c.b16 %v1262, %v1230
  %v1711 = vpack.c.b16 %v1263, %v1231
  %v1712 = vpack.c.b16 %v1264, %v1232
  %v1713 = vpack.c.b16 %v1265, %v1233
  %v1714 = vpack.c.b16 %v1266, %v1234
  %v1715 = vpack.c.b16 %v1267, %v1235
  %v1716 = vpack.c.b16 %v1300, %v1268
  %v1717 = vpack.c.b16 %v1301, %v1269
  %v1718 = vpack.c.b16 %v1302, %v1270
  %v1719 = vpack.c.b16 %v1303, %v1271
  %v1720 = vpack.c.b16 %v1304, %v1272
  %v1721 = vpack.c.b16 %v1305, %v1273
  %v1722 = vpack.c.b16 %v1306, %v1274
  %v1723 = vpack.c.b16 %v1307, %v1275
  %v1724 = vpack.c.b16 %v1308, %v1276
  %v1725 = vpack.c.b16 %v1309, %v1277
  %v1726 = vpack.c.b16 %v1310, %v1278
  %v1727 = vpack.c.b16 %v1311, %v1279
  %v1728 = vpack.c.b16 %v1312, %v1280
  %v1729 = vpack.c.b16 %v1313, %v1281
  %v1730 = vpack.c.b16 %v1314, %v1282
  %v1731 = vpack.c.b16 %v1315, %v1283
  %v1732 = vpack.c.b16 %v1316, %v1284
  %v1733 = vpack.c.b16 %v1317, %v1285
  %v1734 = vpack.c.b16 %v1318, %v1286
  %v1735 = vpack.c.b16 %v1319, %v1287
  %v1736 = vpack.c.b16 %v1320, %v1288
  %v1737 = vpack.c.b16 %v1321, %v1289
  %v1738 = vpack.c.b16 %v1322, %v1290
  %v1739 = vpack.c.b16 %v1323, %v1291
  %v1740 = vpack.c.b16 %v1324, %v1292
  %v1741 = vpack.c.b16 %v1325, %v1293
  %v1742 = vpack.c.b16 %v1326, %v1294
  %v1743 = vpack.c.b16 %v1327, %v1295
  %v1744 = vpack.c.b16 %v1328, %v1296
  %v1745 = vpack.c.b16 %v1329, %v1297
  %v1746 = vpack.c.b16 %v1330, %v1298
  %v1747 = vpack.c.b16 %v1331, %v1299
  %v1748 = vpack.c.b16 %v1364, %v1332
  %v1749 = vpack.c.b16 %v1365, %v1333
  %v1750 = vpack.c.b16 %v1366, %v1334
  %v1751 = vpack.c.b16 %v1367, %v1335
  %v1752 = vpack.c.b16 %v1368, %v1336
  %v1753 = vpack.c.b16 %v1369, %v1337
  %v1754 = vpack.c.b16 %v1370, %v1338
  %v1755 = vpack.c.b16 %v1371, %v1339
  %v1756 = vpack.c.b16 %v1372, %v1340
  %v1757 = vpack.c.b16 %v1373, %v1341
  %v1758 = vpack.c.b16 %v1374, %v1342
  %v1759 = vpack.c.b16 %v1375, %v1343
  %v1760 = vpack.c.b16 %v1376, %v1344
  %v1761 = vpack.c.b16 %v1377, %v1345
  %v1762 = vpack.c.b16 %v1378, %v1346
  %v1763 = vpack.c.b16 %v1379, %v1347
  %v1764 = vpack.c.b16 %v1380, %v1348
  %v1765 = vpack.c.b16 %v1381, %v1349
  %v1766 = vpack.c.b16 %v1382, %v1350
  %v1767 = vpack.c.b16 %v1383, %v1351
  %v1768 = vpack.c.b16 %v1384, %v1352
  %v1769 = vpack.c.b16 %v1385, %v1353
  %v1770 = vpack.c.b16 %v1386, %v1354
  %v1771 = vpack.c.b16 %v1387, %v1355
  %v1772 = vpack.c.b16 %v1388, %v1356
  %v1773 = vpack.c.b16 %v1389, %v1357
  %v1774 = vpack.c.b16 %v1390, %v1358
  %v1775 = vpack.c.b16 %v1391, %v1359
  %v1776 = vpack.c.b16 %v1392, %v1360
  %v1777 = vpack.c.b16 %v1393, %v1361
  %v1778 = vpack.c.b16 %v1394, %v1362
  %v1779 = vpack.c.b16 %v1395, %v1363
  %v1780 = vpack.c.b16 %v1428, %v1396
  %v1781 = vpack.c.b16 %v1429, %v1397
  %v1782 = vpack.c.b16 %v1430, %v1398
  %v1783 = vpack.c.b16 %v1431, %v1399
  %v1784 = vpack.c.b16 %v1432, %v1400
  %v1785 = vpack.c.b16 %v1433, %v1401
  %v1786 = vpack.c.b16 %v1434, %v1402
  %v1787 = vpack.c.b16 %v1435, %v1403
  %v1788 = vpack.c.b16 %v1436, %v1404
  %v1789 = vpack.c.b16 %v1437, %v1405
  %v1790 = vpack.c.b16 %v1438, %v1406
  %v1791 = vpack.c.b16 %v1439, %v1407
  %v1792 = vpack.c.b16 %v1440, %v1408
  %v1793 = vpack.c.b16 %v1441, %v1409
  %v1794 = vpack.c.b16 %v1442, %v1410
  %v1795 = vpack.c.b16 %v1443, %v1411
  %v1796 = vpack.c.b16 %v1444, %v1412
  %v1797 = vpack.c.b16 %v1445, %v1413
  %v1798 = vpack.c.b16 %v1446, %v1414
  %v1799 = vpack.c.b16 %v1447, %v1415
  %v1800 = vpack.c.b16 %v1448, %v1416
  %v1801 = vpack.c.b16 %v1449, %v1417
  %v1802 = vpack.c.b16 %v1450, %v1418
  %v1803 = vpack.c.b16 %v1451, %v1419
  %v1804 = vpack.c.b16 %v1452, %v1420
  %v1805 = vpack.c.b16 %v1453, %v1421
  %v1806 = vpack.c.b16 %v1454, %v1422
  %v1807 = vpack.c.b16 %v1455, %v1423
  %v1808 = vpack.c.b16 %v1456, %v1424
  %v1809 = vpack.c.b16 %v1457, %v1425
  %v1810 = vpack.c.b16 %v1458, %v1426
  %v1811 = vpack.c.b16 %v1459, %v1427
  %v1812 = vpack.c.b16 %v1492, %v1460
  %v1813 = vpack.c.b16 %v1493, %v1461
  %v1814 = vpack.c.b16 %v1494, %v1462
  %v1815 = vpack.c.b16 %v1495, %v1463
  %v1816 = vpack.c.b16 %v1496, %v1464
  %v1817 = vpack.c.b16 %v1497, %v1465
  %v1818 = vpack.c.b16 %v1498, %v1466
  %v1819 = vpack.c.b16 %v1499, %v1467
  %v1820 = vpack.c.b16 %v1500, %v1468
  %v1821 = vpack.c.b16 %v1501, %v1469
  %v1822 = vpack.c.b16 %v1502, %v1470
  %v1823 = vpack.c.b16 %v1503, %v1471
  %v1824 = vpack.c.b16 %v1504, %v1472
  %v1825 = vpack.c.b16 %v1505, %v1473
  %v1826 = vpack.c.b16 %v1506, %v1474
  %v1827 = vpack.c.b16 %v1507, %v1475
  %v1828 = vpack.c.b16 %v1508, %v1476
  %v1829 = vpack.c.b16 %v1509, %v1477
  %v1830 = vpack.c.b16 %v1510, %v1478
  %v1831 = vpack.c.b16 %v1511, %v1479
  %v1832 = vpack.c.b16 %v1512, %v1480
  %v1833 = vpack.c.b16 %v1513, %v1481
  %v1834 = vpack.c.b16 %v1514, %v1482
  %v1835 = vpack.c.b16 %v1515, %v1483
  %v1836 = vpack.c.b16 %v1516, %v1484
  %v1837 = vpack.c.b16 %v1517, %v1485
  %v1838 = vpack.c.b16 %v1518, %v1486
  %v1839 = vpack.c.b16 %v1519, %v1487
  %v1840 = vpack.c.b16 %v1520, %v1488
  %v1841 = vpack.c.b16 %v1521, %v1489
  %v1842 = vpack.c.b16 %v1522, %v1490
  %v1843 = vpack.c.b16 %v1523, %v1491
  %v1844 = vpack.c.b16 %v1556, %v1524
  %v1845 = vpack.c.b16 %v1557, %v1525
  %v1846 = vpack.c.b16 %v1558, %v1526
  %v1847 = vpack.c.b16 %v1559, %v1527
  %v1848 = vpack.c.b16 %v1560, %v1528
  %v1849 = vpack.c.b16 %v1561, %v1529
  %v1850 = vpack.c.b16 %v1562, %v1530
  %v1851 = vpack.c.b16 %v1563, %v1531
  %v1852 = vpack.c.b16 %v1564, %v1532
  %v1853 = vpack.c.b16 %v1565, %v1533
  %v1854 = vpack.c.b16 %v1566, %v1534
  %v1855 = vpack.c.b16 %v1567, %v1535
  %v1856 = vpack.c.b16 %v1568, %v1536
  %v1857 = vpack.c.b16 %v1569, %v1537
  %v1858 = vpack.c.b16 %v1570, %v1538
  %v1859 = vpack.c.b16 %v1571, %v1539
  %v1860 = vpack.c.b16 %v1572, %v1540
  %v1861 = vpack.c.b16 %v1573, %v1541
  %v1862 = vpack.c.b16 %v1574, %v1542
  %v1863 = vpack.c.b16 %v1575, %v1543
  %v1864 = vpack.c.b16 %v1576, %v1544
  %v1865 = vpack.c.b16 %v1577, %v1545
  %v1866 = vpack.c.b16 %v1578, %v1546
  %v1867 = vpack.c.b16 %v1579, %v1547
  %v1868 = vpack.c.b16 %v1580, %v1548
  %v1869 = vpack.c.b16 %v1581, %v1549
  %v1870 = vpack.c.b16 %v1582, %v1550
  %v1871 = vpack.c.b16 %v1583, %v1551
  %v1872 = vpack.c.b16 %v1584, %v1552
  %v1873 = vpack.c.b16 %v1585, %v1553
  %v1874 = vpack.c.b16 %v1586, %v1554
  %v1875 = vpack.c.b16 %v1587, %v1555
  %v1876 = vpack.c.b16 %v1620, %v1588
  %v1877 = vpack.c.b16 %v1621, %v1589
  %v1878 = vpack.c.b16 %v1622, %v1590
  %v1879 = vpack.c.b16 %v1623, %v1591
  %v1880 = vpack.c.b16 %v1624, %v1592
  %v1881 = vpack.c.b16 %v1625, %v1593
  %v1882 = vpack.c.b16 %v1626, %v1594
  %v1883 = vpack.c.b16 %v1627, %v1595
  %v1884 = vpack.c.b16 %v1628, %v1596
  %v1885 = vpack.c.b16 %v1629, %v1597
  %v1886 = vpack.c.b16 %v1630, %v1598
  %v1887 = vpack.c.b16 %v1631, %v1599
  %v1888 = vpack.c.b16 %v1632, %v1600
  %v1889 = vpack.c.b16 %v1633, %v1601
  %v1890 = vpack.c.b16 %v1634, %v1602
  %v1891 = vpack.c.b16 %v1635, %v1603
  %v1892 = vpack.c.b16 %v1636, %v1604
  %v1893 = vpack.c.b16 %v1637, %v1605
  %v1894 = vpack.c.b16 %v1638, %v1606
  %v1895 = vpack.c.b16 %v1639, %v1607
  %v1896 = vpack.c.b16 %v1640, %v1608
  %v1897 = vpack.c.b16 %v1641, %v1609
  %v1898 = vpack.c.b16 %v1642, %v1610
  %v1899 = vpack.c.b16 %v1643, %v1611
  %v1900 = vpack.c.b16 %v1644, %v1612
  %v1901 = vpack.c.b16 %v1645, %v1613
  %v1902 = vpack.c.b16 %v1646, %v1614
  %v1903 = vpack.c.b16 %v1647, %v1615
  %v1904 = vpack.c.b16 %v1648, %v1616
  %v1905 = vpack.c.b16 %v1649, %v1617
  %v1906 = vpack.c.b16 %v1650, %v1618
  %v1907 = vpack.c.b16 %v1651, %v1619
  %v2676 = vunpack.c.l.b16 %v276
  %v2677 = vunpack.c.l.b16 %v277
  %v2678 = vunpack.c.l.b16 %v278
  %v2679 = vunpack.c.l.b16 %v279
  %v2680 = vunpack.c.l.b16 %v280
  %v2681 = vunpack.c.l.b16 %v281
  %v2682 = vunpack.c.l.b16 %v282
  %v2683 = vunpack.c.l.b16 %v283
  %v2684 = vunpack.c.l.b16 %v284
  %v2685 = vunpack.c.l.b16 %v285
  %v2686 = vunpack.c.l.b16 %v286
  %v2687 = vunpack.c.l.b16 %v287
  %v2688 = vunpack.c.l.b16 %v288
  %v2689 = vunpack.c.l.b16 %v289
  %v2690 = vunpack.c.l.b16 %v290
  %v2691 = vunpack.c.l.b16 %v291
  %v2692 = vunpack.c.l.b16 %v292
  %v2693 = vunpack.c.l.b16 %v293
  %v2694 = vunpack.c.l.b16 %v294
  %v2695 = vunpack.c.l.b16 %v295
  %v2696 = vunpack.c.l.b16 %v296
  %v2697 = vunpack.c.l.b16 %v297
  %v2698 = vunpack.c.l.b16 %v298
  %v2699 = vunpack.c.l.b16 %v299
  %v2700 = vunpack.c.l.b16 %v300
  %v2701 = vunpack.c.l.b16 %v301
  %v2702 = vunpack.c.l.b16 %v302
  %v2703 = vunpack.c.l.b16 %v303
  %v2704 = vunpack.c.l.b16 %v304
  %v2705 = vunpack.c.l.b16 %v305
  %v2706 = vunpack.c.l.b16 %v306
  %v2707 = vunpack.c.l.b16 %v307
  %v2708 = vunpack.c.l.b16 %v308
  %v2709 = vunpack.c.l.b16 %v309
  %v2710 = vunpack.c.l.b16 %v310
  %v2711 = vunpack.c.l.b16 %v311
  %v2712 = vunpack.c.l.b16 %v312
  %v2713 = vunpack.c.l.b16 %v313
  %v2714 = vunpack.c.l.b16 %v314
  %v2715 = vunpack.c.l.b16 %v315
  %v2716 = vunpack.c.l.b16 %v316
  %v2717 = vunpack.c.l.b16 %v317
  %v2718 = vunpack.c.l.b16 %v318
  %v2719 = vunpack.c.l.b16 %v319
  %v2720 = vunpack.c.l.b16 %v320
  %v2721 = vunpack.c.l.b16 %v321
  %v2722 = vunpack.c.l.b16 %v322
  %v2723 = vunpack.c.l.b16 %v323
  %v2724 = vunpack.c.l.b16 %v324
  %v2725 = vunpack.c.l.b16 %v325
  %v2726 = vunpack.c.l.b16 %v326
  %v2727 = vunpack.c.l.b16 %v327
  %v2728 = vunpack.c.l.b16 %v328
  %v2729 = vunpack.c.l.b16 %v329
  %v2730 = vunpack.c.l.b16 %v330
  %v2731 = vunpack.c.l.b16 %v331
  %v2732 = vunpack.c.l.b16 %v332
  %v2733 = vunpack.c.l.b16 %v333
  %v2734 = vunpack.c.l.b16 %v334
  %v2735 = vunpack.c.l.b16 %v335
  %v2736 = vunpack.c.l.b16 %v336
  %v2737 = vunpack.c.l.b16 %v337
  %v2738 = vunpack.c.l.b16 %v338
  %v2739 = vunpack.c.l.b16 %v339
  %v2740 = vunpack.c.l.b16 %v340
  %v2741 = vunpack.c.l.b16 %v341
  %v2742 = vunpack.c.l.b16 %v342
  %v2743 = vunpack.c.l.b16 %v343
  %v2744 = vunpack.c.l.b16 %v344
  %v2745 = vunpack.c.l.b16 %v345
  %v2746 = vunpack.c.l.b16 %v346
  %v2747 = vunpack.c.l.b16 %v347
  %v2748 = vunpack.c.l.b16 %v348
  %v2749 = vunpack.c.l.b16 %v349
  %v2750 = vunpack.c.l.b16 %v350
  %v2751 = vunpack.c.l.b16 %v351
  %v2752 = vunpack.c.l.b16 %v352
  %v2753 = vunpack.c.l.b16 %v353
  %v2754 = vunpack.c.l.b16 %v354
  %v2755 = vunpack.c.l.b16 %v355
  %v2756 = vunpack.c.l.b16 %v356
  %v2757 = vunpack.c.l.b16 %v357
  %v2758 = vunpack.c.l.b16 %v358
  %v2759 = vunpack.c.l.b16 %v359
  %v2760 = vunpack.c.l.b16 %v360
  %v2761 = vunpack.c.l.b16 %v361
  %v2762 = vunpack.c.l.b16 %v362
  %v2763 = vunpack.c.l.b16 %v363
  %v2764 = vunpack.c.l.b16 %v364
  %v2765 = vunpack.c.l.b16 %v365
  %v2766 = vunpack.c.l.b16 %v366
  %v2767 = vunpack.c.l.b16 %v367
  %v2768 = vunpack.c.l.b16 %v368
  %v2769 = vunpack.c.l.b16 %v369
  %v2770 = vunpack.c.l.b16 %v370
  %v2771 = vunpack.c.l.b16 %v371
  %v2772 = vunpack.c.l.b16 %v372
  %v2773 = vunpack.c.l.b16 %v373
  %v2774 = vunpack.c.l.b16 %v374
  %v2775 = vunpack.c.l.b16 %v375
  %v2776 = vunpack.c.l.b16 %v376
  %v2777 = vunpack.c.l.b16 %v377
  %v2778 = vunpack.c.l.b16 %v378
  %v2779 = vunpack.c.l.b16 %v379
  %v2780 = vunpack.c.l.b16 %v380
  %v2781 = vunpack.c.l.b16 %v381
  %v2782 = vunpack.c.l.b16 %v382
  %v2783 = vunpack.c.l.b16 %v383
  %v2784 = vunpack.c.l.b16 %v384
  %v2785 = vunpack.c.l.b16 %v385
  %v2786 = vunpack.c.l.b16 %v386
  %v2787 = vunpack.c.l.b16 %v387
  %v2788 = vunpack.c.l.b16 %v388
  %v2789 = vunpack.c.l.b16 %v389
  %v2790 = vunpack.c.l.b16 %v390
  %v2791 = vunpack.c.l.b16 %v391
  %v2792 = vunpack.c.l.b16 %v392
  %v2793 = vunpack.c.l.b16 %v393
  %v2794 = vunpack.c.l.b16 %v394
  %v2795 = vunpack.c.l.b16 %v395
  %v2796 = vunpack.c.l.b16 %v396
  %v2797 = vunpack.c.l.b16 %v397
  %v2798 = vunpack.c.l.b16 %v398
  %v2799 = vunpack.c.l.b16 %v399
  %v2800 = vunpack.c.l.b16 %v400
  %v2801 = vunpack.c.l.b16 %v401
  %v2802 = vunpack.c.l.b16 %v402
  %v2803 = vunpack.c.l.b16 %v403
  %v2804 = vunpack.c.l.b16 %v404
  %v2805 = vunpack.c.l.b16 %v405
  %v2806 = vunpack.c.l.b16 %v406
  %v2807 = vunpack.c.l.b16 %v407
  %v2808 = vunpack.c.l.b16 %v408
  %v2809 = vunpack.c.l.b16 %v409
  %v2810 = vunpack.c.l.b16 %v410
  %v2811 = vunpack.c.l.b16 %v411
  %v2812 = vunpack.c.l.b16 %v412
  %v2813 = vunpack.c.l.b16 %v413
  %v2814 = vunpack.c.l.b16 %v414
  %v2815 = vunpack.c.l.b16 %v415
  %v2816 = vunpack.c.l.b16 %v416
  %v2817 = vunpack.c.l.b16 %v417
  %v2818 = vunpack.c.l.b16 %v418
  %v2819 = vunpack.c.l.b16 %v419
  %v2820 = vunpack.c.l.b16 %v420
  %v2821 = vunpack.c.l.b16 %v421
  %v2822 = vunpack.c.l.b16 %v422
  %v2823 = vunpack.c.l.b16 %v423
  %v2824 = vunpack.c.l.b16 %v424
  %v2825 = vunpack.c.l.b16 %v425
  %v2826 = vunpack.c.l.b16 %v426
  %v2827 = vunpack.c.l.b16 %v427
  %v2828 = vunpack.c.l.b16 %v428
  %v2829 = vunpack.c.l.b16 %v429
  %v2830 = vunpack.c.l.b16 %v430
  %v2831 = vunpack.c.l.b16 %v431
  %v2832 = vunpack.c.l.b16 %v432
  %v2833 = vunpack.c.l.b16 %v433
  %v2834 = vunpack.c.l.b16 %v434
  %v2835 = vunpack.c.l.b16 %v435
  %v2836 = vunpack.c.l.b16 %v436
  %v2837 = vunpack.c.l.b16 %v437
  %v2838 = vunpack.c.l.b16 %v438
  %v2839 = vunpack.c.l.b16 %v439
  %v2840 = vunpack.c.l.b16 %v440
  %v2841 = vunpack.c.l.b16 %v441
  %v2842 = vunpack.c.l.b16 %v442
  %v2843 = vunpack.c.l.b16 %v443
  %v2844 = vunpack.c.l.b16 %v444
  %v2845 = vunpack.c.l.b16 %v445
  %v2846 = vunpack.c.l.b16 %v446
  %v2847 = vunpack.c.l.b16 %v447
  %v2848 = vunpack.c.l.b16 %v448
  %v2849 = vunpack.c.l.b16 %v449
  %v2850 = vunpack.c.l.b16 %v450
  %v2851 = vunpack.c.l.b16 %v451
  %v2852 = vunpack.c.l.b16 %v452
  %v2853 = vunpack.c.l.b16 %v453
  %v2854 = vunpack.c.l.b16 %v454
  %v2855 = vunpack.c.l.b16 %v455
  %v2856 = vunpack.c.l.b16 %v456
  %v2857 = vunpack.c.l.b16 %v457
  %v2858 = vunpack.c.l.b16 %v458
  %v2859 = vunpack.c.l.b16 %v459
  %v2860 = vunpack.c.l.b16 %v460
  %v2861 = vunpack.c.l.b16 %v461
  %v2862 = vunpack.c.l.b16 %v462
  %v2863 = vunpack.c.l.b16 %v463
  %v2864 = vunpack.c.l.b16 %v464
  %v2865 = vunpack.c.l.b16 %v465
  %v2866 = vunpack.c.l.b16 %v466
  %v2867 = vunpack.c.l.b16 %v467
  %v2868 = vunpack.c.l.b16 %v468
  %v2869 = vunpack.c.l.b16 %v469
  %v2870 = vunpack.c.l.b16 %v470
  %v2871 = vunpack.c.l.b16 %v471
  %v2872 = vunpack.c.l.b16 %v472
  %v2873 = vunpack.c.l.b16 %v473
  %v2874 = vunpack.c.l.b16 %v474
  %v2875 = vunpack.c.l.b16 %v475
  %v2876 = vunpack.c.l.b16 %v476
  %v2877 = vunpack.c.l.b16 %v477
  %v2878 = vunpack.c.l.b16 %v478
  %v2879 = vunpack.c.l.b16 %v479
  %v2880 = vunpack.c.l.b16 %v480
  %v2881 = vunpack.c.l.b16 %v481
  %v2882 = vunpack.c.l.b16 %v482
  %v2883 = vunpack.c.l.b16 %v483
  %v2884 = vunpack.c.l.b16 %v484
  %v2885 = vunpack.c.l.b16 %v485
  %v2886 = vunpack.c.l.b16 %v486
  %v2887 = vunpack.c.l.b16 %v487
  %v2888 = vunpack.c.l.b16 %v488
  %v2889 = vunpack.c.l.b16 %v489
  %v2890 = vunpack.c.l.b16 %v490
  %v2891 = vunpack.c.l.b16 %v491
  %v2892 = vunpack.c.l.b16 %v492
  %v2893 = vunpack.c.l.b16 %v493
  %v2894 = vunpack.c.l.b16 %v494
  %v2895 = vunpack.c.l.b16 %v495
  %v2896 = vunpack.c.l.b16 %v496
  %v2897 = vunpack.c.l.b16 %v497
  %v2898 = vunpack.c.l.b16 %v498
  %v2899 = vunpack.c.l.b16 %v499
  %v2900 = vunpack.c.l.b16 %v500
  %v2901 = vunpack.c.l.b16 %v501
  %v2902 = vunpack.c.l.b16 %v502
  %v2903 = vunpack.c.l.b16 %v503
  %v2904 = vunpack.c.l.b16 %v504
  %v2905 = vunpack.c.l.b16 %v505
  %v2906 = vunpack.c.l.b16 %v506
  %v2907 = vunpack.c.l.b16 %v507
  %v2908 = vunpack.c.l.b16 %v508
  %v2909 = vunpack.c.l.b16 %v509
  %v2910 = vunpack.c.l.b16 %v510
  %v2911 = vunpack.c.l.b16 %v511
  %v2912 = vunpack.c.l.b16 %v512
  %v2913 = vunpack.c.l.b16 %v513
  %v2914 = vunpack.c.l.b16 %v514
  %v2915 = vunpack.c.l.b16 %v515
  %v2916 = vunpack.c.l.b16 %v516
  %v2917 = vunpack.c.l.b16 %v517
  %v2918 = vunpack.c.l.b16 %v518
  %v2919 = vunpack.c.l.b16 %v519
  %v2920 = vunpack.c.l.b16 %v520
  %v2921 = vunpack.c.l.b16 %v521
  %v2922 = vunpack.c.l.b16 %v522
  %v2923 = vunpack.c.l.b16 %v523
  %v2924 = vunpack.c.l.b16 %v524
  %v2925 = vunpack.c.l.b16 %v525
  %v2926 = vunpack.c.l.b16 %v526
  %v2927 = vunpack.c.l.b16 %v527
  %v2928 = vunpack.c.l.b16 %v528
  %v2929 = vunpack.c.l.b16 %v529
  %v2930 = vunpack.c.l.b16 %v530
  %v2931 = vunpack.c.l.b16 %v531
  %v2932 = vunpack.c.l.b16 %v532
  %v2933 = vunpack.c.l.b16 %v533
  %v2934 = vunpack.c.l.b16 %v534
  %v2935 = vunpack.c.l.b16 %v535
  %v2936 = vunpack.c.l.b16 %v536
  %v2937 = vunpack.c.l.b16 %v537
  %v2938 = vunpack.c.l.b16 %v538
  %v2939 = vunpack.c.l.b16 %v539
  %v2940 = vunpack.c.l.b16 %v540
  %v2941 = vunpack.c.l.b16 %v541
  %v2942 = vunpack.c.l.b16 %v542
  %v2943 = vunpack.c.l.b16 %v543
  %v2944 = vunpack.c.l.b16 %v544
  %v2945 = vunpack.c.l.b16 %v545
  %v2946 = vunpack.c.l.b16 %v546
  %v2947 = vunpack.c.l.b16 %v547
  %v2948 = vunpack.c.l.b16 %v548
  %v2949 = vunpack.c.l.b16 %v549
  %v2950 = vunpack.c.l.b16 %v550
  %v2951 = vunpack.c.l.b16 %v551
  %v2952 = vunpack.c.l.b16 %v552
  %v2953 = vunpack.c.l.b16 %v553
  %v2954 = vunpack.c.l.b16 %v554
  %v2955 = vunpack.c.l.b16 %v555
  %v2956 = vunpack.c.l.b16 %v556
  %v2957 = vunpack.c.l.b16 %v557
  %v2958 = vunpack.c.l.b16 %v558
  %v2959 = vunpack.c.l.b16 %v559
  %v2960 = vunpack.c.l.b16 %v560
  %v2961 = vunpack.c.l.b16 %v561
  %v2962 = vunpack.c.l.b16 %v562
  %v2963 = vunpack.c.l.b16 %v563
  %v2964 = vunpack.c.l.b16 %v564
  %v2965 = vunpack.c.l.b16 %v565
  %v2966 = vunpack.c.l.b16 %v566
  %v2967 = vunpack.c.l.b16 %v567
  %v2968 = vunpack.c.l.b16 %v568
  %v2969 = vunpack.c.l.b16 %v569
  %v2970 = vunpack.c.l.b16 %v570
  %v2971 = vunpack.c.l.b16 %v571
  %v2972 = vunpack.c.l.b16 %v572
  %v2973 = vunpack.c.l.b16 %v573
  %v2974 = vunpack.c.l.b16 %v574
  %v2975 = vunpack.c.l.b16 %v575
  %v2976 = vunpack.c.l.b16 %v576
  %v2977 = vunpack.c.l.b16 %v577
  %v2978 = vunpack.c.l.b16 %v578
  %v2979 = vunpack.c.l.b16 %v579
  %v2980 = vunpack.c.l.b16 %v580
  %v2981 = vunpack.c.l.b16 %v581
  %v2982 = vunpack.c.l.b16 %v582
  %v2983 = vunpack.c.l.b16 %v583
  %v2984 = vunpack.c.l.b16 %v584
  %v2985 = vunpack.c.l.b16 %v585
  %v2986 = vunpack.c.l.b16 %v586
  %v2987 = vunpack.c.l.b16 %v587
  %v2988 = vunpack.c.l.b16 %v588
  %v2989 = vunpack.c.l.b16 %v589
  %v2990 = vunpack.c.l.b16 %v590
  %v2991 = vunpack.c.l.b16 %v591
  %v2992 = vunpack.c.l.b16 %v592
  %v2993 = vunpack.c.l.b16 %v593
  %v2994 = vunpack.c.l.b16 %v594
  %v2995 = vunpack.c.l.b16 %v595
  %v2996 = vunpack.c.l.b16 %v596
  %v2997 = vunpack.c.l.b16 %v597
  %v2998 = vunpack.c.l.b16 %v598
  %v2999 = vunpack.c.l.b16 %v599
  %v3000 = vunpack.c.l.b16 %v600
  %v3001 = vunpack.c.l.b16 %v601
  %v3002 = vunpack.c.l.b16 %v602
  %v3003 = vunpack.c.l.b16 %v603
  %v3004 = vunpack.c.l.b16 %v604
  %v3005 = vunpack.c.l.b16 %v605
  %v3006 = vunpack.c.l.b16 %v606
  %v3007 = vunpack.c.l.b16 %v607
  %v3008 = vunpack.c.l.b16 %v608
  %v3009 = vunpack.c.l.b16 %v609
  %v3010 = vunpack.c.l.b16 %v610
  %v3011 = vunpack.c.l.b16 %v611
  %v3012 = vunpack.c.l.b16 %v612
  %v3013 = vunpack.c.l.b16 %v613
  %v3014 = vunpack.c.l.b16 %v614
  %v3015 = vunpack.c.l.b16 %v615
  %v3016 = vunpack.c.l.b16 %v616
  %v3017 = vunpack.c.l.b16 %v617
  %v3018 = vunpack.c.l.b16 %v618
  %v3019 = vunpack.c.l.b16 %v619
  %v3020 = vunpack.c.l.b16 %v620
  %v3021 = vunpack.c.l.b16 %v621
  %v3022 = vunpack.c.l.b16 %v622
  %v3023 = vunpack.c.l.b16 %v623
  %v3024 = vunpack.c.l.b16 %v624
  %v3025 = vunpack.c.l.b16 %v625
  %v3026 = vunpack.c.l.b16 %v626
  %v3027 = vunpack.c.l.b16 %v627
  %v3028 = vunpack.c.l.b16 %v628
  %v3029 = vunpack.c.l.b16 %v629
  %v3030 = vunpack.c.l.b16 %v630
  %v3031 = vunpack.c.l.b16 %v631
  %v3032 = vunpack.c.l.b16 %v632
  %v3033 = vunpack.c.l.b16 %v633
  %v3034 = vunpack.c.l.b16 %v634
  %v3035 = vunpack.c.l.b16 %v635
  %v3036 = vunpack.c.l.b16 %v636
  %v3037 = vunpack.c.l.b16 %v637
  %v3038 = vunpack.c.l.b16 %v638
  %v3039 = vunpack.c.l.b16 %v639
  %v3040 = vunpack.c.l.b16 %v640
  %v3041 = vunpack.c.l.b16 %v641
  %v3042 = vunpack.c.l.b16 %v642
  %v3043 = vunpack.c.l.b16 %v643
  %v3044 = vunpack.c.l.b16 %v644
  %v3045 = vunpack.c.l.b16 %v645
  %v3046 = vunpack.c.l.b16 %v646
  %v3047 = vunpack.c.l.b16 %v647
  %v3048 = vunpack.c.l.b16 %v648
  %v3049 = vunpack.c.l.b16 %v649
  %v3050 = vunpack.c.l.b16 %v650
  %v3051 = vunpack.c.l.b16 %v651
  %v3052 = vunpack.c.l.b16 %v652
  %v3053 = vunpack.c.l.b16 %v653
  %v3054 = vunpack.c.l.b16 %v654
  %v3055 = vunpack.c.l.b16 %v655
  %v3056 = vunpack.c.l.b16 %v656
  %v3057 = vunpack.c.l.b16 %v657
  %v3058 = vunpack.c.l.b16 %v658
  %v3059 = vunpack.c.l.b16 %v659
  %v3060 = vunpack.c.l.b16 %v660
  %v3061 = vunpack.c.l.b16 %v661
  %v3062 = vunpack.c.l.b16 %v662
  %v3063 = vunpack.c.l.b16 %v663
  %v3064 = vunpack.c.l.b16 %v664
  %v3065 = vunpack.c.l.b16 %v665
  %v3066 = vunpack.c.l.b16 %v666
  %v3067 = vunpack.c.l.b16 %v667
  %v3068 = vunpack.c.l.b16 %v668
  %v3069 = vunpack.c.l.b16 %v669
  %v3070 = vunpack.c.l.b16 %v670
  %v3071 = vunpack.c.l.b16 %v671
  %v3072 = vunpack.c.l.b16 %v672
  %v3073 = vunpack.c.l.b16 %v673
  %v3074 = vunpack.c.l.b16 %v674
  %v3075 = vunpack.c.l.b16 %v675
  %v3076 = vunpack.c.l.b16 %v676
  %v3077 = vunpack.c.l.b16 %v677
  %v3078 = vunpack.c.l.b16 %v678
  %v3079 = vunpack.c.l.b16 %v679
  %v3080 = vunpack.c.l.b16 %v680
  %v3081 = vunpack.c.l.b16 %v681
  %v3082 = vunpack.c.l.b16 %v682
  %v3083 = vunpack.c.l.b16 %v683
  %v3084 = vunpack.c.l.b16 %v684
  %v3085 = vunpack.c.l.b16 %v685
  %v3086 = vunpack.c.l.b16 %v686
  %v3087 = vunpack.c.l.b16 %v687
  %v3088 = vunpack.c.l.b16 %v688
  %v3089 = vunpack.c.l.b16 %v689
  %v3090 = vunpack.c.l.b16 %v690
  %v3091 = vunpack.c.l.b16 %v691
  %v3092 = vunpack.c.l.b16 %v692
  %v3093 = vunpack.c.l.b16 %v693
  %v3094 = vunpack.c.l.b16 %v694
  %v3095 = vunpack.c.l.b16 %v695
  %v3096 = vunpack.c.l.b16 %v696
  %v3097 = vunpack.c.l.b16 %v697
  %v3098 = vunpack.c.l.b16 %v698
  %v3099 = vunpack.c.l.b16 %v699
  %v3100 = vunpack.c.l.b16 %v700
  %v3101 = vunpack.c.l.b16 %v701
  %v3102 = vunpack.c.l.b16 %v702
  %v3103 = vunpack.c.l.b16 %v703
  %v3104 = vunpack.c.l.b16 %v704
  %v3105 = vunpack.c.l.b16 %v705
  %v3106 = vunpack.c.l.b16 %v706
  %v3107 = vunpack.c.l.b16 %v707
  %v3108 = vunpack.c.l.b16 %v708
  %v3109 = vunpack.c.l.b16 %v709
  %v3110 = vunpack.c.l.b16 %v710
  %v3111 = vunpack.c.l.b16 %v711
  %v3112 = vunpack.c.l.b16 %v712
  %v3113 = vunpack.c.l.b16 %v713
  %v3114 = vunpack.c.l.b16 %v714
  %v3115 = vunpack.c.l.b16 %v715
  %v3116 = vunpack.c.l.b16 %v716
  %v3117 = vunpack.c.l.b16 %v717
  %v3118 = vunpack.c.l.b16 %v718
  %v3119 = vunpack.c.l.b16 %v719
  %v3120 = vunpack.c.l.b16 %v720
  %v3121 = vunpack.c.l.b16 %v721
  %v3122 = vunpack.c.l.b16 %v722
  %v3123 = vunpack.c.l.b16 %v723
  %v3124 = vunpack.c.l.b16 %v724
  %v3125 = vunpack.c.l.b16 %v725
  %v3126 = vunpack.c.l.b16 %v726
  %v3127 = vunpack.c.l.b16 %v727
  %v3128 = vunpack.c.l.b16 %v728
  %v3129 = vunpack.c.l.b16 %v729
  %v3130 = vunpack.c.l.b16 %v730
  %v3131 = vunpack.c.l.b16 %v731
  %v3132 = vunpack.c.l.b16 %v732
  %v3133 = vunpack.c.l.b16 %v733
  %v3134 = vunpack.c.l.b16 %v734
  %v3135 = vunpack.c.l.b16 %v735
  %v3136 = vunpack.c.l.b16 %v736
  %v3137 = vunpack.c.l.b16 %v737
  %v3138 = vunpack.c.l.b16 %v738
  %v3139 = vunpack.c.l.b16 %v739
  %v3140 = vunpack.c.l.b16 %v740
  %v3141 = vunpack.c.l.b16 %v741
  %v3142 = vunpack.c.l.b16 %v742
  %v3143 = vunpack.c.l.b16 %v743
  %v3144 = vunpack.c.l.b16 %v744
  %v3145 = vunpack.c.l.b16 %v745
  %v3146 = vunpack.c.l.b16 %v746
  %v3147 = vunpack.c.l.b16 %v747
  %v3148 = vunpack.c.l.b16 %v748
  %v3149 = vunpack.c.l.b16 %v749
  %v3150 = vunpack.c.l.b16 %v750
  %v3151 = vunpack.c.l.b16 %v751
  %v3152 = vunpack.c.l.b16 %v752
  %v3153 = vunpack.c.l.b16 %v753
  %v3154 = vunpack.c.l.b16 %v754
  %v3155 = vunpack.c.l.b16 %v755
  %v3156 = vunpack.c.l.b16 %v756
  %v3157 = vunpack.c.l.b16 %v757
  %v3158 = vunpack.c.l.b16 %v758
  %v3159 = vunpack.c.l.b16 %v759
  %v3160 = vunpack.c.l.b16 %v760
  %v3161 = vunpack.c.l.b16 %v761
  %v3162 = vunpack.c.l.b16 %v762
  %v3163 = vunpack.c.l.b16 %v763
  %v3164 = vunpack.c.l.b16 %v764
  %v3165 = vunpack.c.l.b16 %v765
  %v3166 = vunpack.c.l.b16 %v766
  %v3167 = vunpack.c.l.b16 %v767
  %v3168 = vunpack.c.l.b16 %v768
  %v3169 = vunpack.c.l.b16 %v769
  %v3170 = vunpack.c.l.b16 %v770
  %v3171 = vunpack.c.l.b16 %v771
  %v3172 = vunpack.c.l.b16 %v772
  %v3173 = vunpack.c.l.b16 %v773
  %v3174 = vunpack.c.l.b16 %v774
  %v3175 = vunpack.c.l.b16 %v775
  %v3176 = vunpack.c.l.b16 %v776
  %v3177 = vunpack.c.l.b16 %v777
  %v3178 = vunpack.c.l.b16 %v778
  %v3179 = vunpack.c.l.b16 %v779
  %v3180 = vunpack.c.l.b16 %v780
  %v3181 = vunpack.c.l.b16 %v781
  %v3182 = vunpack.c.l.b16 %v782
  %v3183 = vunpack.c.l.b16 %v783
  %v3184 = vunpack.c.l.b16 %v784
  %v3185 = vunpack.c.l.b16 %v785
  %v3186 = vunpack.c.l.b16 %v786
  %v3187 = vunpack.c.l.b16 %v787
  %v3188 = vpack.c.b16 %v2677, %v2676
  %v3189 = vpack.c.b16 %v2679, %v2678
  %v3190 = vpack.c.b16 %v2681, %v2680
  %v3191 = vpack.c.b16 %v2683, %v2682
  %v3192 = vpack.c.b16 %v2685, %v2684
  %v3193 = vpack.c.b16 %v2687, %v2686
  %v3194 = vpack.c.b16 %v2689, %v2688
  %v3195 = vpack.c.b16 %v2691, %v2690
  %v3196 = vpack.c.b16 %v2693, %v2692
  %v3197 = vpack.c.b16 %v2695, %v2694
  %v3198 = vpack.c.b16 %v2697, %v2696
  %v3199 = vpack.c.b16 %v2699, %v2698
  %v3200 = vpack.c.b16 %v2701, %v2700
  %v3201 = vpack.c.b16 %v2703, %v2702
  %v3202 = vpack.c.b16 %v2705, %v2704
  %v3203 = vpack.c.b16 %v2707, %v2706
  %v3204 = vpack.c.b16 %v2709, %v2708
  %v3205 = vpack.c.b16 %v2711, %v2710
  %v3206 = vpack.c.b16 %v2713, %v2712
  %v3207 = vpack.c.b16 %v2715, %v2714
  %v3208 = vpack.c.b16 %v2717, %v2716
  %v3209 = vpack.c.b16 %v2719, %v2718
  %v3210 = vpack.c.b16 %v2721, %v2720
  %v3211 = vpack.c.b16 %v2723, %v2722
  %v3212 = vpack.c.b16 %v2725, %v2724
  %v3213 = vpack.c.b16 %v2727, %v2726
  %v3214 = vpack.c.b16 %v2729, %v2728
  %v3215 = vpack.c.b16 %v2731, %v2730
  %v3216 = vpack.c.b16 %v2733, %v2732
  %v3217 = vpack.c.b16 %v2735, %v2734
  %v3218 = vpack.c.b16 %v2737, %v2736
  %v3219 = vpack.c.b16 %v2739, %v2738
  %v3220 = vpack.c.b16 %v2741, %v2740
  %v3221 = vpack.c.b16 %v2743, %v2742
  %v3222 = vpack.c.b16 %v2745, %v2744
  %v3223 = vpack.c.b16 %v2747, %v2746
  %v3224 = vpack.c.b16 %v2749, %v2748
  %v3225 = vpack.c.b16 %v2751, %v2750
  %v3226 = vpack.c.b16 %v2753, %v2752
  %v3227 = vpack.c.b16 %v2755, %v2754
  %v3228 = vpack.c.b16 %v2757, %v2756
  %v3229 = vpack.c.b16 %v2759, %v2758
  %v3230 = vpack.c.b16 %v2761, %v2760
  %v3231 = vpack.c.b16 %v2763, %v2762
  %v3232 = vpack.c.b16 %v2765, %v2764
  %v3233 = vpack.c.b16 %v2767, %v2766
  %v3234 = vpack.c.b16 %v2769, %v2768
  %v3235 = vpack.c.b16 %v2771, %v2770
  %v3236 = vpack.c.b16 %v2773, %v2772
  %v3237 = vpack.c.b16 %v2775, %v2774
  %v3238 = vpack.c.b16 %v2777, %v2776
  %v3239 = vpack.c.b16 %v2779, %v2778
  %v3240 = vpack.c.b16 %v2781, %v2780
  %v3241 = vpack.c.b16 %v2783, %v2782
  %v3242 = vpack.c.b16 %v2785, %v2784
  %v3243 = vpack.c.b16 %v2787, %v2786
  %v3244 = vpack.c.b16 %v2789, %v2788
  %v3245 = vpack.c.b16 %v2791, %v2790
  %v3246 = vpack.c.b16 %v2793, %v2792
  %v3247 = vpack.c.b16 %v2795, %v2794
  %v3248 = vpack.c.b16 %v2797, %v2796
  %v3249 = vpack.c.b16 %v2799, %v2798
  %v3250 = vpack.c.b16 %v2801, %v2800
  %v3251 = vpack.c.b16 %v2803, %v2802
  %v3252 = vpack.c.b16 %v2805, %v2804
  %v3253 = vpack.c.b16 %v2807, %v2806
  %v3254 = vpack.c.b16 %v2809, %v2808
  %v3255 = vpack.c.b16 %v2811, %v2810
  %v3256 = vpack.c.b16 %v2813, %v2812
  %v3257 = vpack.c.b16 %v2815, %v2814
  %v3258 = vpack.c.b16 %v2817, %v2816
  %v3259 = vpack.c.b16 %v2819, %v2818
  %v3260 = vpack.c.b16 %v2821, %v2820
  %v3261 = vpack.c.b16 %v2823, %v2822
  %v3262 = vpack.c.b16 %v2825, %v2824
  %v3263 = vpack.c.b16 %v2827, %v2826
  %v3264 = vpack.c.b16 %v2829, %v2828
  %v3265 = vpack.c.b16 %v2831, %v2830
  %v3266 = vpack.c.b16 %v2833, %v2832
  %v3267 = vpack.c.b16 %v2835, %v2834
  %v3268 = vpack.c.b16 %v2837, %v2836
  %v3269 = vpack.c.b16 %v2839, %v2838
  %v3270 = vpack.c.b16 %v2841, %v2840
  %v3271 = vpack.c.b16 %v2843, %v2842
  %v3272 = vpack.c.b16 %v2845, %v2844
  %v3273 = vpack.c.b16 %v2847, %v2846
  %v3274 = vpack.c.b16 %v2849, %v2848
  %v3275 = vpack.c.b16 %v2851, %v2850
  %v3276 = vpack.c.b16 %v2853, %v2852
  %v3277 = vpack.c.b16 %v2855, %v2854
  %v3278 = vpack.c.b16 %v2857, %v2856
  %v3279 = vpack.c.b16 %v2859, %v2858
  %v3280 = vpack.c.b16 %v2861, %v2860
  %v3281 = vpack.c.b16 %v2863, %v2862
  %v3282 = vpack.c.b16 %v2865, %v2864
  %v3283 = vpack.c.b16 %v2867, %v2866
  %v3284 = vpack.c.b16 %v2869, %v2868
  %v3285 = vpack.c.b16 %v2871, %v2870
  %v3286 = vpack.c.b16 %v2873, %v2872
  %v3287 = vpack.c.b16 %v2875, %v2874
  %v3288 = vpack.c.b16 %v2877, %v2876
  %v3289 = vpack.c.b16 %v2879, %v2878
  %v3290 = vpack.c.b16 %v2881, %v2880
  %v3291 = vpack.c.b16 %v2883, %v2882
  %v3292 = vpack.c.b16 %v2885, %v2884
  %v3293 = vpack.c.b16 %v2887, %v2886
  %v3294 = vpack.c.b16 %v2889, %v2888
  %v3295 = vpack.c.b16 %v2891, %v2890
  %v3296 = vpack.c.b16 %v2893, %v2892
  %v3297 = vpack.c.b16 %v2895, %v2894
  %v3298 = vpack.c.b16 %v2897, %v2896
  %v3299 = vpack.c.b16 %v2899, %v2898
  %v3300 = vpack.c.b16 %v2901, %v2900
  %v3301 = vpack.c.b16 %v2903, %v2902
  %v3302 = vpack.c.b16 %v2905, %v2904
  %v3303 = vpack.c.b16 %v2907, %v2906
  %v3304 = vpack.c.b16 %v2909, %v2908
  %v3305 = vpack.c.b16 %v2911, %v2910
  %v3306 = vpack.c.b16 %v2913, %v2912
  %v3307 = vpack.c.b16 %v2915, %v2914
  %v3308 = vpack.c.b16 %v2917, %v2916
  %v3309 = vpack.c.b16 %v2919, %v2918
  %v3310 = vpack.c.b16 %v2921, %v2920
  %v3311 = vpack.c.b16 %v2923, %v2922
  %v3312 = vpack.c.b16 %v2925, %v2924
  %v3313 = vpack.c.b16 %v2927, %v2926
  %v3314 = vpack.c.b16 %v2929, %v2928
  %v3315 = vpack.c.b16 %v2931, %v2930
  %v3316 = vpack.c.b16 %v2933, %v2932
  %v3317 = vpack.c.b16 %v2935, %v2934
  %v3318 = vpack.c.b16 %v2937, %v2936
  %v3319 = vpack.c.b16 %v2939, %v2938
  %v3320 = vpack.c.b16 %v2941, %v2940
  %v3321 = vpack.c.b16 %v2943, %v2942
  %v3322 = vpack.c.b16 %v2945, %v2944
  %v3323 = vpack.c.b16 %v2947, %v2946
  %v3324 = vpack.c.b16 %v2949, %v2948
  %v3325 = vpack.c.b16 %v2951, %v2950
  %v3326 = vpack.c.b16 %v2953, %v2952
  %v3327 = vpack.c.b16 %v2955, %v2954
  %v3328 = vpack.c.b16 %v2957, %v2956
  %v3329 = vpack.c.b16 %v2959, %v2958
  %v3330 = vpack.c.b16 %v2961, %v2960
  %v3331 = vpack.c.b16 %v2963, %v2962
  %v3332 = vpack.c.b16 %v2965, %v2964
  %v3333 = vpack.c.b16 %v2967, %v2966
  %v3334 = vpack.c.b16 %v2969, %v2968
  %v3335 = vpack.c.b16 %v2971, %v2970
  %v3336 = vpack.c.b16 %v2973, %v2972
  %v3337 = vpack.c.b16 %v2975, %v2974
  %v3338 = vpack.c.b16 %v2977, %v2976
  %v3339 = vpack.c.b16 %v2979, %v2978
  %v3340 = vpack.c.b16 %v2981, %v2980
  %v3341 = vpack.c.b16 %v2983, %v2982
  %v3342 = vpack.c.b16 %v2985, %v2984
  %v3343 = vpack.c.b16 %v2987, %v2986
  %v3344 = vpack.c.b16 %v2989, %v2988
  %v3345 = vpack.c.b16 %v2991, %v2990
  %v3346 = vpack.c.b16 %v2993, %v2992
  %v3347 = vpack.c.b16 %v2995, %v2994
  %v3348 = vpack.c.b16 %v2997, %v2996
  %v3349 = vpack.c.b16 %v2999, %v2998
  %v3350 = vpack.c.b16 %v3001, %v3000
  %v3351 = vpack.c.b16 %v3003, %v3002
  %v3352 = vpack.c.b16 %v3005, %v3004
  %v3353 = vpack.c.b16 %v3007, %v3006
  %v3354 = vpack.c.b16 %v3009, %v3008
  %v3355 = vpack.c.b16 %v3011, %v3010
  %v3356 = vpack.c.b16 %v3013, %v3012
  %v3357 = vpack.c.b16 %v3015, %v3014
  %v3358 = vpack.c.b16 %v3017, %v3016
  %v3359 = vpack.c.b16 %v3019, %v3018
  %v3360 = vpack.c.b16 %v3021, %v3020
  %v3361 = vpack.c.b16 %v3023, %v3022
  %v3362 = vpack.c.b16 %v3025, %v3024
  %v3363 = vpack.c.b16 %v3027, %v3026
  %v3364 = vpack.c.b16 %v3029, %v3028
  %v3365 = vpack.c.b16 %v3031, %v3030
  %v3366 = vpack.c.b16 %v3033, %v3032
  %v3367 = vpack.c.b16 %v3035, %v3034
  %v3368 = vpack.c.b16 %v3037, %v3036
  %v3369 = vpack.c.b16 %v3039, %v3038
  %v3370 = vpack.c.b16 %v3041, %v3040
  %v3371 = vpack.c.b16 %v3043, %v3042
  %v3372 = vpack.c.b16 %v3045, %v3044
  %v3373 = vpack.c.b16 %v3047, %v3046
  %v3374 = vpack.c.b16 %v3049, %v3048
  %v3375 = vpack.c.b16 %v3051, %v3050
  %v3376 = vpack.c.b16 %v3053, %v3052
  %v3377 = vpack.c.b16 %v3055, %v3054
  %v3378 = vpack.c.b16 %v3057, %v3056
  %v3379 = vpack.c.b16 %v3059, %v3058
  %v3380 = vpack.c.b16 %v3061, %v3060
  %v3381 = vpack.c.b16 %v3063, %v3062
  %v3382 = vpack.c.b16 %v3065, %v3064
  %v3383 = vpack.c.b16 %v3067, %v3066
  %v3384 = vpack.c.b16 %v3069, %v3068
  %v3385 = vpack.c.b16 %v3071, %v3070
  %v3386 = vpack.c.b16 %v3073, %v3072
  %v3387 = vpack.c.b16 %v3075, %v3074
  %v3388 = vpack.c.b16 %v3077, %v3076
  %v3389 = vpack.c.b16 %v3079, %v3078
  %v3390 = vpack.c.b16 %v3081, %v3080
  %v3391 = vpack.c.b16 %v3083, %v3082
  %v3392 = vpack.c.b16 %v3085, %v3084
  %v3393 = vpack.c.b16 %v3087, %v3086
  %v3394 = vpack.c.b16 %v3089, %v3088
  %v3395 = vpack.c.b16 %v3091, %v3090
  %v3396 = vpack.c.b16 %v3093, %v3092
  %v3397 = vpack.c.b16 %v3095, %v3094
  %v3398 = vpack.c.b16 %v3097, %v3096
  %v3399 = vpack.c.b16 %v3099, %v3098
  %v3400 = vpack.c.b16 %v3101, %v3100
  %v3401 = vpack.c.b16 %v3103, %v3102
  %v3402 = vpack.c.b16 %v3105, %v3104
  %v3403 = vpack.c.b16 %v3107, %v3106
  %v3404 = vpack.c.b16 %v3109, %v3108
  %v3405 = vpack.c.b16 %v3111, %v3110
  %v3406 = vpack.c.b16 %v3113, %v3112
  %v3407 = vpack.c.b16 %v3115, %v3114
  %v3408 = vpack.c.b16 %v3117, %v3116
  %v3409 = vpack.c.b16 %v3119, %v3118
  %v3410 = vpack.c.b16 %v3121, %v3120
  %v3411 = vpack.c.b16 %v3123, %v3122
  %v3412 = vpack.c.b16 %v3125, %v3124
  %v3413 = vpack.c.b16 %v3127, %v3126
  %v3414 = vpack.c.b16 %v3129, %v3128
  %v3415 = vpack.c.b16 %v3131, %v3130
  %v3416 = vpack.c.b16 %v3133, %v3132
  %v3417 = vpack.c.b16 %v3135, %v3134
  %v3418 = vpack.c.b16 %v3137, %v3136
  %v3419 = vpack.c.b16 %v3139, %v3138
  %v3420 = vpack.c.b16 %v3141, %v3140
  %v3421 = vpack.c.b16 %v3143, %v3142
  %v3422 = vpack.c.b16 %v3145, %v3144
  %v3423 = vpack.c.b16 %v3147, %v3146
  %v3424 = vpack.c.b16 %v3149, %v3148
  %v3425 = vpack.c.b16 %v3151, %v3150
  %v3426 = vpack.c.b16 %v3153, %v3152
  %v3427 = vpack.c.b16 %v3155, %v3154
  %v3428 = vpack.c.b16 %v3157, %v3156
  %v3429 = vpack.c.b16 %v3159, %v3158
  %v3430 = vpack.c.b16 %v3161, %v3160
  %v3431 = vpack.c.b16 %v3163, %v3162
  %v3432 = vpack.c.b16 %v3165, %v3164
  %v3433 = vpack.c.b16 %v3167, %v3166
  %v3434 = vpack.c.b16 %v3169, %v3168
  %v3435 = vpack.c.b16 %v3171, %v3170
  %v3436 = vpack.c.b16 %v3173, %v3172
  %v3437 = vpack.c.b16 %v3175, %v3174
  %v3438 = vpack.c.b16 %v3177, %v3176
  %v3439 = vpack.c.b16 %v3179, %v3178
  %v3440 = vpack.c.b16 %v3181, %v3180
  %v3441 = vpack.c.b16 %v3183, %v3182
  %v3442 = vpack.c.b16 %v3185, %v3184
  %v3443 = vpack.c.b16 %v3187, %v3186
  %3700 = vmatpush.bf16.msra.mxu0 %v3195
  %3701 = vmatpush.bf16.msra.mxu0 %v3194
  %3702 = vmatpush.bf16.msra.mxu0 %v3193
  %3703 = vmatpush.bf16.msra.mxu0 %v3192
  %3704 = vmatpush.bf16.msra.mxu0 %v3191
  %3705 = vmatpush.bf16.msra.mxu0 %v3190
  %3706 = vmatpush.bf16.msra.mxu0 %v3189
  %3707 = vmatpush.bf16.msra.mxu0 %v3188
  %3708 = vmatmul.bf16.gmra.mxu0 %v1652
  %v3709 = vpop.f32.mrf.mxu0
  %v3710 = vadd.f32 %v807, %v3709
  %v3711 = vpop.f32.mrf.mxu0
  %v3712 = vadd.f32 %v812, %v3711
  %3713 = vmatmul.bf16.gmra.mxu0 %v1684
  %v3714 = vpop.f32.mrf.mxu0
  %v3715 = vadd.f32 %v817, %v3714
  %v3716 = vpop.f32.mrf.mxu0
  %v3717 = vadd.f32 %v822, %v3716
  %3718 = vmatmul.bf16.gmra.mxu0 %v1716
  %v3719 = vpop.f32.mrf.mxu0
  %v3720 = vadd.f32 %v827, %v3719
  %v3721 = vpop.f32.mrf.mxu0
  %v3722 = vadd.f32 %v832, %v3721
  %3723 = vmatmul.bf16.gmra.mxu0 %v1748
  %v3724 = vpop.f32.mrf.mxu0
  %v3725 = vadd.f32 %v837, %v3724
  %v3726 = vpop.f32.mrf.mxu0
  %v3727 = vadd.f32 %v842, %v3726
  %3728 = vmatmul.bf16.gmra.mxu0 %v1780
  %v3729 = vpop.f32.mrf.mxu0
  %v3730 = vadd.f32 %v847, %v3729
  %v3731 = vpop.f32.mrf.mxu0
  %v3732 = vadd.f32 %v852, %v3731
  %3733 = vmatmul.bf16.gmra.mxu0 %v1812
  %v3734 = vpop.f32.mrf.mxu0
  %v3735 = vadd.f32 %v857, %v3734
  %v3736 = vpop.f32.mrf.mxu0
  %v3737 = vadd.f32 %v862, %v3736
  %3738 = vmatmul.bf16.gmra.mxu0 %v1844
  %v3739 = vpop.f32.mrf.mxu0
  %v3740 = vadd.f32 %v867, %v3739
  %v3741 = vpop.f32.mrf.mxu0
  %v3742 = vadd.f32 %v872, %v3741
  %3743 = vmatmul.bf16.gmra.mxu0 %v1876
  %v3744 = vpop.f32.mrf.mxu0
  %v3745 = vadd.f32 %v877, %v3744
  %v3746 = vpop.f32.mrf.mxu0
  %v3747 = vadd.f32 %v882, %v3746
  %3748 = vdwg.mxu0
  %3749 = vmatpush.bf16.msra.mxu0 %v3203
  %3750 = vmatpush.bf16.msra.mxu0 %v3202
  %3751 = vmatpush.bf16.msra.mxu0 %v3201
  %3752 = vmatpush.bf16.msra.mxu0 %v3200
  %3753 = vmatpush.bf16.msra.mxu0 %v3199
  %3754 = vmatpush.bf16.msra.mxu0 %v3198
  %3755 = vmatpush.bf16.msra.mxu0 %v3197
  %3756 = vmatpush.bf16.msra.mxu0 %v3196
  %3757 = vmatmul.bf16.gmra.mxu0 %v1653
  %v3758 = vpop.f32.mrf.mxu0
  %v3759 = vadd.f32 %v3710, %v3758
  %v3760 = vpop.f32.mrf.mxu0
  %v3761 = vadd.f32 %v3712, %v3760
  %3762 = vmatmul.bf16.gmra.mxu0 %v1685
  %v3763 = vpop.f32.mrf.mxu0
  %v3764 = vadd.f32 %v3715, %v3763
  %v3765 = vpop.f32.mrf.mxu0
  %v3766 = vadd.f32 %v3717, %v3765
  %3767 = vmatmul.bf16.gmra.mxu0 %v1717
  %v3768 = vpop.f32.mrf.mxu0
  %v3769 = vadd.f32 %v3720, %v3768
  %v3770 = vpop.f32.mrf.mxu0
  %v3771 = vadd.f32 %v3722, %v3770
  %3772 = vmatmul.bf16.gmra.mxu0 %v1749
  %v3773 = vpop.f32.mrf.mxu0
  %v3774 = vadd.f32 %v3725, %v3773
  %v3775 = vpop.f32.mrf.mxu0
  %v3776 = vadd.f32 %v3727, %v3775
  %3777 = vmatmul.bf16.gmra.mxu0 %v1781
  %v3778 = vpop.f32.mrf.mxu0
  %v3779 = vadd.f32 %v3730, %v3778
  %v3780 = vpop.f32.mrf.mxu0
  %v3781 = vadd.f32 %v3732, %v3780
  %3782 = vmatmul.bf16.gmra.mxu0 %v1813
  %v3783 = vpop.f32.mrf.mxu0
  %v3784 = vadd.f32 %v3735, %v3783
  %v3785 = vpop.f32.mrf.mxu0
  %v3786 = vadd.f32 %v3737, %v3785
  %3787 = vmatmul.bf16.gmra.mxu0 %v1845
  %v3788 = vpop.f32.mrf.mxu0
  %v3789 = vadd.f32 %v3740, %v3788
  %v3790 = vpop.f32.mrf.mxu0
  %v3791 = vadd.f32 %v3742, %v3790
  %3792 = vmatmul.bf16.gmra.mxu0 %v1877
  %v3793 = vpop.f32.mrf.mxu0
  %v3794 = vadd.f32 %v3745, %v3793
  %v3795 = vpop.f32.mrf.mxu0
  %v3796 = vadd.f32 %v3747, %v3795
  %3797 = vdwg.mxu0
  %3798 = vmatpush.bf16.msra.mxu0 %v3211
  %3799 = vmatpush.bf16.msra.mxu0 %v3210
  %3800 = vmatpush.bf16.msra.mxu0 %v3209
  %3801 = vmatpush.bf16.msra.mxu0 %v3208
  %3802 = vmatpush.bf16.msra.mxu0 %v3207
  %3803 = vmatpush.bf16.msra.mxu0 %v3206
  %3804 = vmatpush.bf16.msra.mxu0 %v3205
  %3805 = vmatpush.bf16.msra.mxu0 %v3204
  %3806 = vmatmul.bf16.gmra.mxu0 %v1654
  %v3807 = vpop.f32.mrf.mxu0
  %v3808 = vadd.f32 %v3759, %v3807
  %v3809 = vpop.f32.mrf.mxu0
  %v3810 = vadd.f32 %v3761, %v3809
  %3811 = vmatmul.bf16.gmra.mxu0 %v1686
  %v3812 = vpop.f32.mrf.mxu0
  %v3813 = vadd.f32 %v3764, %v3812
  %v3814 = vpop.f32.mrf.mxu0
  %v3815 = vadd.f32 %v3766, %v3814
  %3816 = vmatmul.bf16.gmra.mxu0 %v1718
  %v3817 = vpop.f32.mrf.mxu0
  %v3818 = vadd.f32 %v3769, %v3817
  %v3819 = vpop.f32.mrf.mxu0
  %v3820 = vadd.f32 %v3771, %v3819
  %3821 = vmatmul.bf16.gmra.mxu0 %v1750
  %v3822 = vpop.f32.mrf.mxu0
  %v3823 = vadd.f32 %v3774, %v3822
  %v3824 = vpop.f32.mrf.mxu0
  %v3825 = vadd.f32 %v3776, %v3824
  %3826 = vmatmul.bf16.gmra.mxu0 %v1782
  %v3827 = vpop.f32.mrf.mxu0
  %v3828 = vadd.f32 %v3779, %v3827
  %v3829 = vpop.f32.mrf.mxu0
  %v3830 = vadd.f32 %v3781, %v3829
  %3831 = vmatmul.bf16.gmra.mxu0 %v1814
  %v3832 = vpop.f32.mrf.mxu0
  %v3833 = vadd.f32 %v3784, %v3832
  %v3834 = vpop.f32.mrf.mxu0
  %v3835 = vadd.f32 %v3786, %v3834
  %3836 = vmatmul.bf16.gmra.mxu0 %v1846
  %v3837 = vpop.f32.mrf.mxu0
  %v3838 = vadd.f32 %v3789, %v3837
  %v3839 = vpop.f32.mrf.mxu0
  %v3840 = vadd.f32 %v3791, %v3839
  %3841 = vmatmul.bf16.gmra.mxu0 %v1878
  %v3842 = vpop.f32.mrf.mxu0
  %v3843 = vadd.f32 %v3794, %v3842
  %v3844 = vpop.f32.mrf.mxu0
  %v3845 = vadd.f32 %v3796, %v3844
  %3846 = vdwg.mxu0
  %3847 = vmatpush.bf16.msra.mxu0 %v3219
  %3848 = vmatpush.bf16.msra.mxu0 %v3218
  %3849 = vmatpush.bf16.msra.mxu0 %v3217
  %3850 = vmatpush.bf16.msra.mxu0 %v3216
  %3851 = vmatpush.bf16.msra.mxu0 %v3215
  %3852 = vmatpush.bf16.msra.mxu0 %v3214
  %3853 = vmatpush.bf16.msra.mxu0 %v3213
  %3854 = vmatpush.bf16.msra.mxu0 %v3212
  %3855 = vmatmul.bf16.gmra.mxu0 %v1655
  %v3856 = vpop.f32.mrf.mxu0
  %v3857 = vadd.f32 %v3808, %v3856
  %v3858 = vpop.f32.mrf.mxu0
  %v3859 = vadd.f32 %v3810, %v3858
  %3860 = vmatmul.bf16.gmra.mxu0 %v1687
  %v3861 = vpop.f32.mrf.mxu0
  %v3862 = vadd.f32 %v3813, %v3861
  %v3863 = vpop.f32.mrf.mxu0
  %v3864 = vadd.f32 %v3815, %v3863
  %3865 = vmatmul.bf16.gmra.mxu0 %v1719
  %v3866 = vpop.f32.mrf.mxu0
  %v3867 = vadd.f32 %v3818, %v3866
  %v3868 = vpop.f32.mrf.mxu0
  %v3869 = vadd.f32 %v3820, %v3868
  %3870 = vmatmul.bf16.gmra.mxu0 %v1751
  %v3871 = vpop.f32.mrf.mxu0
  %v3872 = vadd.f32 %v3823, %v3871
  %v3873 = vpop.f32.mrf.mxu0
  %v3874 = vadd.f32 %v3825, %v3873
  %3875 = vmatmul.bf16.gmra.mxu0 %v1783
  %v3876 = vpop.f32.mrf.mxu0
  %v3877 = vadd.f32 %v3828, %v3876
  %v3878 = vpop.f32.mrf.mxu0
  %v3879 = vadd.f32 %v3830, %v3878
  %3880 = vmatmul.bf16.gmra.mxu0 %v1815
  %v3881 = vpop.f32.mrf.mxu0
  %v3882 = vadd.f32 %v3833, %v3881
  %v3883 = vpop.f32.mrf.mxu0
  %v3884 = vadd.f32 %v3835, %v3883
  %3885 = vmatmul.bf16.gmra.mxu0 %v1847
  %v3886 = vpop.f32.mrf.mxu0
  %v3887 = vadd.f32 %v3838, %v3886
  %v3888 = vpop.f32.mrf.mxu0
  %v3889 = vadd.f32 %v3840, %v3888
  %3890 = vmatmul.bf16.gmra.mxu0 %v1879
  %v3891 = vpop.f32.mrf.mxu0
  %v3892 = vadd.f32 %v3843, %v3891
  %v3893 = vpop.f32.mrf.mxu0
  %v3894 = vadd.f32 %v3845, %v3893
  %3895 = vdwg.mxu0
  %3896 = vmatpush.bf16.msra.mxu0 %v3227
  %3897 = vmatpush.bf16.msra.mxu0 %v3226
  %3898 = vmatpush.bf16.msra.mxu0 %v3225
  %3899 = vmatpush.bf16.msra.mxu0 %v3224
  %3900 = vmatpush.bf16.msra.mxu0 %v3223
  %3901 = vmatpush.bf16.msra.mxu0 %v3222
  %3902 = vmatpush.bf16.msra.mxu0 %v3221
  %3903 = vmatpush.bf16.msra.mxu0 %v3220
  %3904 = vmatmul.bf16.gmra.mxu0 %v1656
  %v3905 = vpop.f32.mrf.mxu0
  %v3906 = vadd.f32 %v3857, %v3905
  %v3907 = vpop.f32.mrf.mxu0
  %v3908 = vadd.f32 %v3859, %v3907
  %3909 = vmatmul.bf16.gmra.mxu0 %v1688
  %v3910 = vpop.f32.mrf.mxu0
  %v3911 = vadd.f32 %v3862, %v3910
  %v3912 = vpop.f32.mrf.mxu0
  %v3913 = vadd.f32 %v3864, %v3912
  %3914 = vmatmul.bf16.gmra.mxu0 %v1720
  %v3915 = vpop.f32.mrf.mxu0
  %v3916 = vadd.f32 %v3867, %v3915
  %v3917 = vpop.f32.mrf.mxu0
  %v3918 = vadd.f32 %v3869, %v3917
  %3919 = vmatmul.bf16.gmra.mxu0 %v1752
  %v3920 = vpop.f32.mrf.mxu0
  %v3921 = vadd.f32 %v3872, %v3920
  %v3922 = vpop.f32.mrf.mxu0
  %v3923 = vadd.f32 %v3874, %v3922
  %3924 = vmatmul.bf16.gmra.mxu0 %v1784
  %v3925 = vpop.f32.mrf.mxu0
  %v3926 = vadd.f32 %v3877, %v3925
  %v3927 = vpop.f32.mrf.mxu0
  %v3928 = vadd.f32 %v3879, %v3927
  %3929 = vmatmul.bf16.gmra.mxu0 %v1816
  %v3930 = vpop.f32.mrf.mxu0
  %v3931 = vadd.f32 %v3882, %v3930
  %v3932 = vpop.f32.mrf.mxu0
  %v3933 = vadd.f32 %v3884, %v3932
  %3934 = vmatmul.bf16.gmra.mxu0 %v1848
  %v3935 = vpop.f32.mrf.mxu0
  %v3936 = vadd.f32 %v3887, %v3935
  %v3937 = vpop.f32.mrf.mxu0
  %v3938 = vadd.f32 %v3889, %v3937
  %3939 = vmatmul.bf16.gmra.mxu0 %v1880
  %v3940 = vpop.f32.mrf.mxu0
  %v3941 = vadd.f32 %v3892, %v3940
  %v3942 = vpop.f32.mrf.mxu0
  %v3943 = vadd.f32 %v3894, %v3942
  %3944 = vdwg.mxu0
  %3945 = vmatpush.bf16.msra.mxu0 %v3235
  %3946 = vmatpush.bf16.msra.mxu0 %v3234
  %3947 = vmatpush.bf16.msra.mxu0 %v3233
  %3948 = vmatpush.bf16.msra.mxu0 %v3232
  %3949 = vmatpush.bf16.msra.mxu0 %v3231
  %3950 = vmatpush.bf16.msra.mxu0 %v3230
  %3951 = vmatpush.bf16.msra.mxu0 %v3229
  %3952 = vmatpush.bf16.msra.mxu0 %v3228
  %3953 = vmatmul.bf16.gmra.mxu0 %v1657
  %v3954 = vpop.f32.mrf.mxu0
  %v3955 = vadd.f32 %v3906, %v3954
  %v3956 = vpop.f32.mrf.mxu0
  %v3957 = vadd.f32 %v3908, %v3956
  %3958 = vmatmul.bf16.gmra.mxu0 %v1689
  %v3959 = vpop.f32.mrf.mxu0
  %v3960 = vadd.f32 %v3911, %v3959
  %v3961 = vpop.f32.mrf.mxu0
  %v3962 = vadd.f32 %v3913, %v3961
  %3963 = vmatmul.bf16.gmra.mxu0 %v1721
  %v3964 = vpop.f32.mrf.mxu0
  %v3965 = vadd.f32 %v3916, %v3964
  %v3966 = vpop.f32.mrf.mxu0
  %v3967 = vadd.f32 %v3918, %v3966
  %3968 = vmatmul.bf16.gmra.mxu0 %v1753
  %v3969 = vpop.f32.mrf.mxu0
  %v3970 = vadd.f32 %v3921, %v3969
  %v3971 = vpop.f32.mrf.mxu0
  %v3972 = vadd.f32 %v3923, %v3971
  %3973 = vmatmul.bf16.gmra.mxu0 %v1785
  %v3974 = vpop.f32.mrf.mxu0
  %v3975 = vadd.f32 %v3926, %v3974
  %v3976 = vpop.f32.mrf.mxu0
  %v3977 = vadd.f32 %v3928, %v3976
  %3978 = vmatmul.bf16.gmra.mxu0 %v1817
  %v3979 = vpop.f32.mrf.mxu0
  %v3980 = vadd.f32 %v3931, %v3979
  %v3981 = vpop.f32.mrf.mxu0
  %v3982 = vadd.f32 %v3933, %v3981
  %3983 = vmatmul.bf16.gmra.mxu0 %v1849
  %v3984 = vpop.f32.mrf.mxu0
  %v3985 = vadd.f32 %v3936, %v3984
  %v3986 = vpop.f32.mrf.mxu0
  %v3987 = vadd.f32 %v3938, %v3986
  %3988 = vmatmul.bf16.gmra.mxu0 %v1881
  %v3989 = vpop.f32.mrf.mxu0
  %v3990 = vadd.f32 %v3941, %v3989
  %v3991 = vpop.f32.mrf.mxu0
  %v3992 = vadd.f32 %v3943, %v3991
  %3993 = vdwg.mxu0
  %3994 = vmatpush.bf16.msra.mxu0 %v3243
  %3995 = vmatpush.bf16.msra.mxu0 %v3242
  %3996 = vmatpush.bf16.msra.mxu0 %v3241
  %3997 = vmatpush.bf16.msra.mxu0 %v3240
  %3998 = vmatpush.bf16.msra.mxu0 %v3239
  %3999 = vmatpush.bf16.msra.mxu0 %v3238
  %4000 = vmatpush.bf16.msra.mxu0 %v3237
  %4001 = vmatpush.bf16.msra.mxu0 %v3236
  %4002 = vmatmul.bf16.gmra.mxu0 %v1658
  %v4003 = vpop.f32.mrf.mxu0
  %v4004 = vadd.f32 %v3955, %v4003
  %v4005 = vpop.f32.mrf.mxu0
  %v4006 = vadd.f32 %v3957, %v4005
  %4007 = vmatmul.bf16.gmra.mxu0 %v1690
  %v4008 = vpop.f32.mrf.mxu0
  %v4009 = vadd.f32 %v3960, %v4008
  %v4010 = vpop.f32.mrf.mxu0
  %v4011 = vadd.f32 %v3962, %v4010
  %4012 = vmatmul.bf16.gmra.mxu0 %v1722
  %v4013 = vpop.f32.mrf.mxu0
  %v4014 = vadd.f32 %v3965, %v4013
  %v4015 = vpop.f32.mrf.mxu0
  %v4016 = vadd.f32 %v3967, %v4015
  %4017 = vmatmul.bf16.gmra.mxu0 %v1754
  %v4018 = vpop.f32.mrf.mxu0
  %v4019 = vadd.f32 %v3970, %v4018
  %v4020 = vpop.f32.mrf.mxu0
  %v4021 = vadd.f32 %v3972, %v4020
  %4022 = vmatmul.bf16.gmra.mxu0 %v1786
  %v4023 = vpop.f32.mrf.mxu0
  %v4024 = vadd.f32 %v3975, %v4023
  %v4025 = vpop.f32.mrf.mxu0
  %v4026 = vadd.f32 %v3977, %v4025
  %4027 = vmatmul.bf16.gmra.mxu0 %v1818
  %v4028 = vpop.f32.mrf.mxu0
  %v4029 = vadd.f32 %v3980, %v4028
  %v4030 = vpop.f32.mrf.mxu0
  %v4031 = vadd.f32 %v3982, %v4030
  %4032 = vmatmul.bf16.gmra.mxu0 %v1850
  %v4033 = vpop.f32.mrf.mxu0
  %v4034 = vadd.f32 %v3985, %v4033
  %v4035 = vpop.f32.mrf.mxu0
  %v4036 = vadd.f32 %v3987, %v4035
  %4037 = vmatmul.bf16.gmra.mxu0 %v1882
  %v4038 = vpop.f32.mrf.mxu0
  %v4039 = vadd.f32 %v3990, %v4038
  %v4040 = vpop.f32.mrf.mxu0
  %v4041 = vadd.f32 %v3992, %v4040
  %4042 = vdwg.mxu0
  %4043 = vmatpush.bf16.msra.mxu0 %v3251
  %4044 = vmatpush.bf16.msra.mxu0 %v3250
  %4045 = vmatpush.bf16.msra.mxu0 %v3249
  %4046 = vmatpush.bf16.msra.mxu0 %v3248
  %4047 = vmatpush.bf16.msra.mxu0 %v3247
  %4048 = vmatpush.bf16.msra.mxu0 %v3246
  %4049 = vmatpush.bf16.msra.mxu0 %v3245
  %4050 = vmatpush.bf16.msra.mxu0 %v3244
  %4051 = vmatmul.bf16.gmra.mxu0 %v1659
  %v4052 = vpop.f32.mrf.mxu0
  %v4053 = vadd.f32 %v4004, %v4052
  %v4054 = vpop.f32.mrf.mxu0
  %v4055 = vadd.f32 %v4006, %v4054
  %4056 = vmatmul.bf16.gmra.mxu0 %v1691
  %v4057 = vpop.f32.mrf.mxu0
  %v4058 = vadd.f32 %v4009, %v4057
  %v4059 = vpop.f32.mrf.mxu0
  %v4060 = vadd.f32 %v4011, %v4059
  %4061 = vmatmul.bf16.gmra.mxu0 %v1723
  %v4062 = vpop.f32.mrf.mxu0
  %v4063 = vadd.f32 %v4014, %v4062
  %v4064 = vpop.f32.mrf.mxu0
  %v4065 = vadd.f32 %v4016, %v4064
  %4066 = vmatmul.bf16.gmra.mxu0 %v1755
  %v4067 = vpop.f32.mrf.mxu0
  %v4068 = vadd.f32 %v4019, %v4067
  %v4069 = vpop.f32.mrf.mxu0
  %v4070 = vadd.f32 %v4021, %v4069
  %4071 = vmatmul.bf16.gmra.mxu0 %v1787
  %v4072 = vpop.f32.mrf.mxu0
  %v4073 = vadd.f32 %v4024, %v4072
  %v4074 = vpop.f32.mrf.mxu0
  %v4075 = vadd.f32 %v4026, %v4074
  %4076 = vmatmul.bf16.gmra.mxu0 %v1819
  %v4077 = vpop.f32.mrf.mxu0
  %v4078 = vadd.f32 %v4029, %v4077
  %v4079 = vpop.f32.mrf.mxu0
  %v4080 = vadd.f32 %v4031, %v4079
  %4081 = vmatmul.bf16.gmra.mxu0 %v1851
  %v4082 = vpop.f32.mrf.mxu0
  %v4083 = vadd.f32 %v4034, %v4082
  %v4084 = vpop.f32.mrf.mxu0
  %v4085 = vadd.f32 %v4036, %v4084
  %4086 = vmatmul.bf16.gmra.mxu0 %v1883
  %v4087 = vpop.f32.mrf.mxu0
  %v4088 = vadd.f32 %v4039, %v4087
  %v4089 = vpop.f32.mrf.mxu0
  %v4090 = vadd.f32 %v4041, %v4089
  %4091 = vdwg.mxu0
  %4092 = vmatpush.bf16.msra.mxu0 %v3259
  %4093 = vmatpush.bf16.msra.mxu0 %v3258
  %4094 = vmatpush.bf16.msra.mxu0 %v3257
  %4095 = vmatpush.bf16.msra.mxu0 %v3256
  %4096 = vmatpush.bf16.msra.mxu0 %v3255
  %4097 = vmatpush.bf16.msra.mxu0 %v3254
  %4098 = vmatpush.bf16.msra.mxu0 %v3253
  %4099 = vmatpush.bf16.msra.mxu0 %v3252
  %4100 = vmatmul.bf16.gmra.mxu0 %v1660
  %v4101 = vpop.f32.mrf.mxu0
  %v4102 = vadd.f32 %v4053, %v4101
  %v4103 = vpop.f32.mrf.mxu0
  %v4104 = vadd.f32 %v4055, %v4103
  %4105 = vmatmul.bf16.gmra.mxu0 %v1692
  %v4106 = vpop.f32.mrf.mxu0
  %v4107 = vadd.f32 %v4058, %v4106
  %v4108 = vpop.f32.mrf.mxu0
  %v4109 = vadd.f32 %v4060, %v4108
  %4110 = vmatmul.bf16.gmra.mxu0 %v1724
  %v4111 = vpop.f32.mrf.mxu0
  %v4112 = vadd.f32 %v4063, %v4111
  %v4113 = vpop.f32.mrf.mxu0
  %v4114 = vadd.f32 %v4065, %v4113
  %4115 = vmatmul.bf16.gmra.mxu0 %v1756
  %v4116 = vpop.f32.mrf.mxu0
  %v4117 = vadd.f32 %v4068, %v4116
  %v4118 = vpop.f32.mrf.mxu0
  %v4119 = vadd.f32 %v4070, %v4118
  %4120 = vmatmul.bf16.gmra.mxu0 %v1788
  %v4121 = vpop.f32.mrf.mxu0
  %v4122 = vadd.f32 %v4073, %v4121
  %v4123 = vpop.f32.mrf.mxu0
  %v4124 = vadd.f32 %v4075, %v4123
  %4125 = vmatmul.bf16.gmra.mxu0 %v1820
  %v4126 = vpop.f32.mrf.mxu0
  %v4127 = vadd.f32 %v4078, %v4126
  %v4128 = vpop.f32.mrf.mxu0
  %v4129 = vadd.f32 %v4080, %v4128
  %4130 = vmatmul.bf16.gmra.mxu0 %v1852
  %v4131 = vpop.f32.mrf.mxu0
  %v4132 = vadd.f32 %v4083, %v4131
  %v4133 = vpop.f32.mrf.mxu0
  %v4134 = vadd.f32 %v4085, %v4133
  %4135 = vmatmul.bf16.gmra.mxu0 %v1884
  %v4136 = vpop.f32.mrf.mxu0
  %v4137 = vadd.f32 %v4088, %v4136
  %v4138 = vpop.f32.mrf.mxu0
  %v4139 = vadd.f32 %v4090, %v4138
  %4140 = vdwg.mxu0
  %4141 = vmatpush.bf16.msra.mxu0 %v3267
  %4142 = vmatpush.bf16.msra.mxu0 %v3266
  %4143 = vmatpush.bf16.msra.mxu0 %v3265
  %4144 = vmatpush.bf16.msra.mxu0 %v3264
  %4145 = vmatpush.bf16.msra.mxu0 %v3263
  %4146 = vmatpush.bf16.msra.mxu0 %v3262
  %4147 = vmatpush.bf16.msra.mxu0 %v3261
  %4148 = vmatpush.bf16.msra.mxu0 %v3260
  %4149 = vmatmul.bf16.gmra.mxu0 %v1661
  %v4150 = vpop.f32.mrf.mxu0
  %v4151 = vadd.f32 %v4102, %v4150
  %v4152 = vpop.f32.mrf.mxu0
  %v4153 = vadd.f32 %v4104, %v4152
  %4154 = vmatmul.bf16.gmra.mxu0 %v1693
  %v4155 = vpop.f32.mrf.mxu0
  %v4156 = vadd.f32 %v4107, %v4155
  %v4157 = vpop.f32.mrf.mxu0
  %v4158 = vadd.f32 %v4109, %v4157
  %4159 = vmatmul.bf16.gmra.mxu0 %v1725
  %v4160 = vpop.f32.mrf.mxu0
  %v4161 = vadd.f32 %v4112, %v4160
  %v4162 = vpop.f32.mrf.mxu0
  %v4163 = vadd.f32 %v4114, %v4162
  %4164 = vmatmul.bf16.gmra.mxu0 %v1757
  %v4165 = vpop.f32.mrf.mxu0
  %v4166 = vadd.f32 %v4117, %v4165
  %v4167 = vpop.f32.mrf.mxu0
  %v4168 = vadd.f32 %v4119, %v4167
  %4169 = vmatmul.bf16.gmra.mxu0 %v1789
  %v4170 = vpop.f32.mrf.mxu0
  %v4171 = vadd.f32 %v4122, %v4170
  %v4172 = vpop.f32.mrf.mxu0
  %v4173 = vadd.f32 %v4124, %v4172
  %4174 = vmatmul.bf16.gmra.mxu0 %v1821
  %v4175 = vpop.f32.mrf.mxu0
  %v4176 = vadd.f32 %v4127, %v4175
  %v4177 = vpop.f32.mrf.mxu0
  %v4178 = vadd.f32 %v4129, %v4177
  %4179 = vmatmul.bf16.gmra.mxu0 %v1853
  %v4180 = vpop.f32.mrf.mxu0
  %v4181 = vadd.f32 %v4132, %v4180
  %v4182 = vpop.f32.mrf.mxu0
  %v4183 = vadd.f32 %v4134, %v4182
  %4184 = vmatmul.bf16.gmra.mxu0 %v1885
  %v4185 = vpop.f32.mrf.mxu0
  %v4186 = vadd.f32 %v4137, %v4185
  %v4187 = vpop.f32.mrf.mxu0
  %v4188 = vadd.f32 %v4139, %v4187
  %4189 = vdwg.mxu0
  %4190 = vmatpush.bf16.msra.mxu0 %v3275
  %4191 = vmatpush.bf16.msra.mxu0 %v3274
  %4192 = vmatpush.bf16.msra.mxu0 %v3273
  %4193 = vmatpush.bf16.msra.mxu0 %v3272
  %4194 = vmatpush.bf16.msra.mxu0 %v3271
  %4195 = vmatpush.bf16.msra.mxu0 %v3270
  %4196 = vmatpush.bf16.msra.mxu0 %v3269
  %4197 = vmatpush.bf16.msra.mxu0 %v3268
  %4198 = vmatmul.bf16.gmra.mxu0 %v1662
  %v4199 = vpop.f32.mrf.mxu0
  %v4200 = vadd.f32 %v4151, %v4199
  %v4201 = vpop.f32.mrf.mxu0
  %v4202 = vadd.f32 %v4153, %v4201
  %4203 = vmatmul.bf16.gmra.mxu0 %v1694
  %v4204 = vpop.f32.mrf.mxu0
  %v4205 = vadd.f32 %v4156, %v4204
  %v4206 = vpop.f32.mrf.mxu0
  %v4207 = vadd.f32 %v4158, %v4206
  %4208 = vmatmul.bf16.gmra.mxu0 %v1726
  %v4209 = vpop.f32.mrf.mxu0
  %v4210 = vadd.f32 %v4161, %v4209
  %v4211 = vpop.f32.mrf.mxu0
  %v4212 = vadd.f32 %v4163, %v4211
  %4213 = vmatmul.bf16.gmra.mxu0 %v1758
  %v4214 = vpop.f32.mrf.mxu0
  %v4215 = vadd.f32 %v4166, %v4214
  %v4216 = vpop.f32.mrf.mxu0
  %v4217 = vadd.f32 %v4168, %v4216
  %4218 = vmatmul.bf16.gmra.mxu0 %v1790
  %v4219 = vpop.f32.mrf.mxu0
  %v4220 = vadd.f32 %v4171, %v4219
  %v4221 = vpop.f32.mrf.mxu0
  %v4222 = vadd.f32 %v4173, %v4221
  %4223 = vmatmul.bf16.gmra.mxu0 %v1822
  %v4224 = vpop.f32.mrf.mxu0
  %v4225 = vadd.f32 %v4176, %v4224
  %v4226 = vpop.f32.mrf.mxu0
  %v4227 = vadd.f32 %v4178, %v4226
  %4228 = vmatmul.bf16.gmra.mxu0 %v1854
  %v4229 = vpop.f32.mrf.mxu0
  %v4230 = vadd.f32 %v4181, %v4229
  %v4231 = vpop.f32.mrf.mxu0
  %v4232 = vadd.f32 %v4183, %v4231
  %4233 = vmatmul.bf16.gmra.mxu0 %v1886
  %v4234 = vpop.f32.mrf.mxu0
  %v4235 = vadd.f32 %v4186, %v4234
  %v4236 = vpop.f32.mrf.mxu0
  %v4237 = vadd.f32 %v4188, %v4236
  %4238 = vdwg.mxu0
  %4239 = vmatpush.bf16.msra.mxu0 %v3283
  %4240 = vmatpush.bf16.msra.mxu0 %v3282
  %4241 = vmatpush.bf16.msra.mxu0 %v3281
  %4242 = vmatpush.bf16.msra.mxu0 %v3280
  %4243 = vmatpush.bf16.msra.mxu0 %v3279
  %4244 = vmatpush.bf16.msra.mxu0 %v3278
  %4245 = vmatpush.bf16.msra.mxu0 %v3277
  %4246 = vmatpush.bf16.msra.mxu0 %v3276
  %4247 = vmatmul.bf16.gmra.mxu0 %v1663
  %v4248 = vpop.f32.mrf.mxu0
  %v4249 = vadd.f32 %v4200, %v4248
  %v4250 = vpop.f32.mrf.mxu0
  %v4251 = vadd.f32 %v4202, %v4250
  %4252 = vmatmul.bf16.gmra.mxu0 %v1695
  %v4253 = vpop.f32.mrf.mxu0
  %v4254 = vadd.f32 %v4205, %v4253
  %v4255 = vpop.f32.mrf.mxu0
  %v4256 = vadd.f32 %v4207, %v4255
  %4257 = vmatmul.bf16.gmra.mxu0 %v1727
  %v4258 = vpop.f32.mrf.mxu0
  %v4259 = vadd.f32 %v4210, %v4258
  %v4260 = vpop.f32.mrf.mxu0
  %v4261 = vadd.f32 %v4212, %v4260
  %4262 = vmatmul.bf16.gmra.mxu0 %v1759
  %v4263 = vpop.f32.mrf.mxu0
  %v4264 = vadd.f32 %v4215, %v4263
  %v4265 = vpop.f32.mrf.mxu0
  %v4266 = vadd.f32 %v4217, %v4265
  %4267 = vmatmul.bf16.gmra.mxu0 %v1791
  %v4268 = vpop.f32.mrf.mxu0
  %v4269 = vadd.f32 %v4220, %v4268
  %v4270 = vpop.f32.mrf.mxu0
  %v4271 = vadd.f32 %v4222, %v4270
  %4272 = vmatmul.bf16.gmra.mxu0 %v1823
  %v4273 = vpop.f32.mrf.mxu0
  %v4274 = vadd.f32 %v4225, %v4273
  %v4275 = vpop.f32.mrf.mxu0
  %v4276 = vadd.f32 %v4227, %v4275
  %4277 = vmatmul.bf16.gmra.mxu0 %v1855
  %v4278 = vpop.f32.mrf.mxu0
  %v4279 = vadd.f32 %v4230, %v4278
  %v4280 = vpop.f32.mrf.mxu0
  %v4281 = vadd.f32 %v4232, %v4280
  %4282 = vmatmul.bf16.gmra.mxu0 %v1887
  %v4283 = vpop.f32.mrf.mxu0
  %v4284 = vadd.f32 %v4235, %v4283
  %v4285 = vpop.f32.mrf.mxu0
  %v4286 = vadd.f32 %v4237, %v4285
  %4287 = vdwg.mxu0
  %4288 = vmatpush.bf16.msra.mxu0 %v3291
  %4289 = vmatpush.bf16.msra.mxu0 %v3290
  %4290 = vmatpush.bf16.msra.mxu0 %v3289
  %4291 = vmatpush.bf16.msra.mxu0 %v3288
  %4292 = vmatpush.bf16.msra.mxu0 %v3287
  %4293 = vmatpush.bf16.msra.mxu0 %v3286
  %4294 = vmatpush.bf16.msra.mxu0 %v3285
  %4295 = vmatpush.bf16.msra.mxu0 %v3284
  %4296 = vmatmul.bf16.gmra.mxu0 %v1664
  %v4297 = vpop.f32.mrf.mxu0
  %v4298 = vadd.f32 %v4249, %v4297
  %v4299 = vpop.f32.mrf.mxu0
  %v4300 = vadd.f32 %v4251, %v4299
  %4301 = vmatmul.bf16.gmra.mxu0 %v1696
  %v4302 = vpop.f32.mrf.mxu0
  %v4303 = vadd.f32 %v4254, %v4302
  %v4304 = vpop.f32.mrf.mxu0
  %v4305 = vadd.f32 %v4256, %v4304
  %4306 = vmatmul.bf16.gmra.mxu0 %v1728
  %v4307 = vpop.f32.mrf.mxu0
  %v4308 = vadd.f32 %v4259, %v4307
  %v4309 = vpop.f32.mrf.mxu0
  %v4310 = vadd.f32 %v4261, %v4309
  %4311 = vmatmul.bf16.gmra.mxu0 %v1760
  %v4312 = vpop.f32.mrf.mxu0
  %v4313 = vadd.f32 %v4264, %v4312
  %v4314 = vpop.f32.mrf.mxu0
  %v4315 = vadd.f32 %v4266, %v4314
  %4316 = vmatmul.bf16.gmra.mxu0 %v1792
  %v4317 = vpop.f32.mrf.mxu0
  %v4318 = vadd.f32 %v4269, %v4317
  %v4319 = vpop.f32.mrf.mxu0
  %v4320 = vadd.f32 %v4271, %v4319
  %4321 = vmatmul.bf16.gmra.mxu0 %v1824
  %v4322 = vpop.f32.mrf.mxu0
  %v4323 = vadd.f32 %v4274, %v4322
  %v4324 = vpop.f32.mrf.mxu0
  %v4325 = vadd.f32 %v4276, %v4324
  %4326 = vmatmul.bf16.gmra.mxu0 %v1856
  %v4327 = vpop.f32.mrf.mxu0
  %v4328 = vadd.f32 %v4279, %v4327
  %v4329 = vpop.f32.mrf.mxu0
  %v4330 = vadd.f32 %v4281, %v4329
  %4331 = vmatmul.bf16.gmra.mxu0 %v1888
  %v4332 = vpop.f32.mrf.mxu0
  %v4333 = vadd.f32 %v4284, %v4332
  %v4334 = vpop.f32.mrf.mxu0
  %v4335 = vadd.f32 %v4286, %v4334
  %4336 = vdwg.mxu0
  %4337 = vmatpush.bf16.msra.mxu0 %v3299
  %4338 = vmatpush.bf16.msra.mxu0 %v3298
  %4339 = vmatpush.bf16.msra.mxu0 %v3297
  %4340 = vmatpush.bf16.msra.mxu0 %v3296
  %4341 = vmatpush.bf16.msra.mxu0 %v3295
  %4342 = vmatpush.bf16.msra.mxu0 %v3294
  %4343 = vmatpush.bf16.msra.mxu0 %v3293
  %4344 = vmatpush.bf16.msra.mxu0 %v3292
  %4345 = vmatmul.bf16.gmra.mxu0 %v1665
  %v4346 = vpop.f32.mrf.mxu0
  %v4347 = vadd.f32 %v4298, %v4346
  %v4348 = vpop.f32.mrf.mxu0
  %v4349 = vadd.f32 %v4300, %v4348
  %4350 = vmatmul.bf16.gmra.mxu0 %v1697
  %v4351 = vpop.f32.mrf.mxu0
  %v4352 = vadd.f32 %v4303, %v4351
  %v4353 = vpop.f32.mrf.mxu0
  %v4354 = vadd.f32 %v4305, %v4353
  %4355 = vmatmul.bf16.gmra.mxu0 %v1729
  %v4356 = vpop.f32.mrf.mxu0
  %v4357 = vadd.f32 %v4308, %v4356
  %v4358 = vpop.f32.mrf.mxu0
  %v4359 = vadd.f32 %v4310, %v4358
  %4360 = vmatmul.bf16.gmra.mxu0 %v1761
  %v4361 = vpop.f32.mrf.mxu0
  %v4362 = vadd.f32 %v4313, %v4361
  %v4363 = vpop.f32.mrf.mxu0
  %v4364 = vadd.f32 %v4315, %v4363
  %4365 = vmatmul.bf16.gmra.mxu0 %v1793
  %v4366 = vpop.f32.mrf.mxu0
  %v4367 = vadd.f32 %v4318, %v4366
  %v4368 = vpop.f32.mrf.mxu0
  %v4369 = vadd.f32 %v4320, %v4368
  %4370 = vmatmul.bf16.gmra.mxu0 %v1825
  %v4371 = vpop.f32.mrf.mxu0
  %v4372 = vadd.f32 %v4323, %v4371
  %v4373 = vpop.f32.mrf.mxu0
  %v4374 = vadd.f32 %v4325, %v4373
  %4375 = vmatmul.bf16.gmra.mxu0 %v1857
  %v4376 = vpop.f32.mrf.mxu0
  %v4377 = vadd.f32 %v4328, %v4376
  %v4378 = vpop.f32.mrf.mxu0
  %v4379 = vadd.f32 %v4330, %v4378
  %4380 = vmatmul.bf16.gmra.mxu0 %v1889
  %v4381 = vpop.f32.mrf.mxu0
  %v4382 = vadd.f32 %v4333, %v4381
  %v4383 = vpop.f32.mrf.mxu0
  %v4384 = vadd.f32 %v4335, %v4383
  %4385 = vdwg.mxu0
  %4386 = vmatpush.bf16.msra.mxu0 %v3307
  %4387 = vmatpush.bf16.msra.mxu0 %v3306
  %4388 = vmatpush.bf16.msra.mxu0 %v3305
  %4389 = vmatpush.bf16.msra.mxu0 %v3304
  %4390 = vmatpush.bf16.msra.mxu0 %v3303
  %4391 = vmatpush.bf16.msra.mxu0 %v3302
  %4392 = vmatpush.bf16.msra.mxu0 %v3301
  %4393 = vmatpush.bf16.msra.mxu0 %v3300
  %4394 = vmatmul.bf16.gmra.mxu0 %v1666
  %v4395 = vpop.f32.mrf.mxu0
  %v4396 = vadd.f32 %v4347, %v4395
  %v4397 = vpop.f32.mrf.mxu0
  %v4398 = vadd.f32 %v4349, %v4397
  %4399 = vmatmul.bf16.gmra.mxu0 %v1698
  %v4400 = vpop.f32.mrf.mxu0
  %v4401 = vadd.f32 %v4352, %v4400
  %v4402 = vpop.f32.mrf.mxu0
  %v4403 = vadd.f32 %v4354, %v4402
  %4404 = vmatmul.bf16.gmra.mxu0 %v1730
  %v4405 = vpop.f32.mrf.mxu0
  %v4406 = vadd.f32 %v4357, %v4405
  %v4407 = vpop.f32.mrf.mxu0
  %v4408 = vadd.f32 %v4359, %v4407
  %4409 = vmatmul.bf16.gmra.mxu0 %v1762
  %v4410 = vpop.f32.mrf.mxu0
  %v4411 = vadd.f32 %v4362, %v4410
  %v4412 = vpop.f32.mrf.mxu0
  %v4413 = vadd.f32 %v4364, %v4412
  %4414 = vmatmul.bf16.gmra.mxu0 %v1794
  %v4415 = vpop.f32.mrf.mxu0
  %v4416 = vadd.f32 %v4367, %v4415
  %v4417 = vpop.f32.mrf.mxu0
  %v4418 = vadd.f32 %v4369, %v4417
  %4419 = vmatmul.bf16.gmra.mxu0 %v1826
  %v4420 = vpop.f32.mrf.mxu0
  %v4421 = vadd.f32 %v4372, %v4420
  %v4422 = vpop.f32.mrf.mxu0
  %v4423 = vadd.f32 %v4374, %v4422
  %4424 = vmatmul.bf16.gmra.mxu0 %v1858
  %v4425 = vpop.f32.mrf.mxu0
  %v4426 = vadd.f32 %v4377, %v4425
  %v4427 = vpop.f32.mrf.mxu0
  %v4428 = vadd.f32 %v4379, %v4427
  %4429 = vmatmul.bf16.gmra.mxu0 %v1890
  %v4430 = vpop.f32.mrf.mxu0
  %v4431 = vadd.f32 %v4382, %v4430
  %v4432 = vpop.f32.mrf.mxu0
  %v4433 = vadd.f32 %v4384, %v4432
  %4434 = vdwg.mxu0
  %4435 = vmatpush.bf16.msra.mxu0 %v3315
  %4436 = vmatpush.bf16.msra.mxu0 %v3314
  %4437 = vmatpush.bf16.msra.mxu0 %v3313
  %4438 = vmatpush.bf16.msra.mxu0 %v3312
  %4439 = vmatpush.bf16.msra.mxu0 %v3311
  %4440 = vmatpush.bf16.msra.mxu0 %v3310
  %4441 = vmatpush.bf16.msra.mxu0 %v3309
  %4442 = vmatpush.bf16.msra.mxu0 %v3308
  %4443 = vmatmul.bf16.gmra.mxu0 %v1667
  %v4444 = vpop.f32.mrf.mxu0
  %v4445 = vadd.f32 %v4396, %v4444
  %v4446 = vpop.f32.mrf.mxu0
  %v4447 = vadd.f32 %v4398, %v4446
  %4448 = vmatmul.bf16.gmra.mxu0 %v1699
  %v4449 = vpop.f32.mrf.mxu0
  %v4450 = vadd.f32 %v4401, %v4449
  %v4451 = vpop.f32.mrf.mxu0
  %v4452 = vadd.f32 %v4403, %v4451
  %4453 = vmatmul.bf16.gmra.mxu0 %v1731
  %v4454 = vpop.f32.mrf.mxu0
  %v4455 = vadd.f32 %v4406, %v4454
  %v4456 = vpop.f32.mrf.mxu0
  %v4457 = vadd.f32 %v4408, %v4456
  %4458 = vmatmul.bf16.gmra.mxu0 %v1763
  %v4459 = vpop.f32.mrf.mxu0
  %v4460 = vadd.f32 %v4411, %v4459
  %v4461 = vpop.f32.mrf.mxu0
  %v4462 = vadd.f32 %v4413, %v4461
  %4463 = vmatmul.bf16.gmra.mxu0 %v1795
  %v4464 = vpop.f32.mrf.mxu0
  %v4465 = vadd.f32 %v4416, %v4464
  %v4466 = vpop.f32.mrf.mxu0
  %v4467 = vadd.f32 %v4418, %v4466
  %4468 = vmatmul.bf16.gmra.mxu0 %v1827
  %v4469 = vpop.f32.mrf.mxu0
  %v4470 = vadd.f32 %v4421, %v4469
  %v4471 = vpop.f32.mrf.mxu0
  %v4472 = vadd.f32 %v4423, %v4471
  %4473 = vmatmul.bf16.gmra.mxu0 %v1859
  %v4474 = vpop.f32.mrf.mxu0
  %v4475 = vadd.f32 %v4426, %v4474
  %v4476 = vpop.f32.mrf.mxu0
  %v4477 = vadd.f32 %v4428, %v4476
  %4478 = vmatmul.bf16.gmra.mxu0 %v1891
  %v4479 = vpop.f32.mrf.mxu0
  %v4480 = vadd.f32 %v4431, %v4479
  %v4481 = vpop.f32.mrf.mxu0
  %v4482 = vadd.f32 %v4433, %v4481
  %4483 = vdwg.mxu0
  %4484 = vmatpush.bf16.msra.mxu0 %v3323
  %4485 = vmatpush.bf16.msra.mxu0 %v3322
  %4486 = vmatpush.bf16.msra.mxu0 %v3321
  %4487 = vmatpush.bf16.msra.mxu0 %v3320
  %4488 = vmatpush.bf16.msra.mxu0 %v3319
  %4489 = vmatpush.bf16.msra.mxu0 %v3318
  %4490 = vmatpush.bf16.msra.mxu0 %v3317
  %4491 = vmatpush.bf16.msra.mxu0 %v3316
  %4492 = vmatmul.bf16.gmra.mxu0 %v1668
  %v4493 = vpop.f32.mrf.mxu0
  %v4494 = vadd.f32 %v4445, %v4493
  %v4495 = vpop.f32.mrf.mxu0
  %v4496 = vadd.f32 %v4447, %v4495
  %4497 = vmatmul.bf16.gmra.mxu0 %v1700
  %v4498 = vpop.f32.mrf.mxu0
  %v4499 = vadd.f32 %v4450, %v4498
  %v4500 = vpop.f32.mrf.mxu0
  %v4501 = vadd.f32 %v4452, %v4500
  %4502 = vmatmul.bf16.gmra.mxu0 %v1732
  %v4503 = vpop.f32.mrf.mxu0
  %v4504 = vadd.f32 %v4455, %v4503
  %v4505 = vpop.f32.mrf.mxu0
  %v4506 = vadd.f32 %v4457, %v4505
  %4507 = vmatmul.bf16.gmra.mxu0 %v1764
  %v4508 = vpop.f32.mrf.mxu0
  %v4509 = vadd.f32 %v4460, %v4508
  %v4510 = vpop.f32.mrf.mxu0
  %v4511 = vadd.f32 %v4462, %v4510
  %4512 = vmatmul.bf16.gmra.mxu0 %v1796
  %v4513 = vpop.f32.mrf.mxu0
  %v4514 = vadd.f32 %v4465, %v4513
  %v4515 = vpop.f32.mrf.mxu0
  %v4516 = vadd.f32 %v4467, %v4515
  %4517 = vmatmul.bf16.gmra.mxu0 %v1828
  %v4518 = vpop.f32.mrf.mxu0
  %v4519 = vadd.f32 %v4470, %v4518
  %v4520 = vpop.f32.mrf.mxu0
  %v4521 = vadd.f32 %v4472, %v4520
  %4522 = vmatmul.bf16.gmra.mxu0 %v1860
  %v4523 = vpop.f32.mrf.mxu0
  %v4524 = vadd.f32 %v4475, %v4523
  %v4525 = vpop.f32.mrf.mxu0
  %v4526 = vadd.f32 %v4477, %v4525
  %4527 = vmatmul.bf16.gmra.mxu0 %v1892
  %v4528 = vpop.f32.mrf.mxu0
  %v4529 = vadd.f32 %v4480, %v4528
  %v4530 = vpop.f32.mrf.mxu0
  %v4531 = vadd.f32 %v4482, %v4530
  %4532 = vdwg.mxu0
  %4533 = vmatpush.bf16.msra.mxu0 %v3331
  %4534 = vmatpush.bf16.msra.mxu0 %v3330
  %4535 = vmatpush.bf16.msra.mxu0 %v3329
  %4536 = vmatpush.bf16.msra.mxu0 %v3328
  %4537 = vmatpush.bf16.msra.mxu0 %v3327
  %4538 = vmatpush.bf16.msra.mxu0 %v3326
  %4539 = vmatpush.bf16.msra.mxu0 %v3325
  %4540 = vmatpush.bf16.msra.mxu0 %v3324
  %4541 = vmatmul.bf16.gmra.mxu0 %v1669
  %v4542 = vpop.f32.mrf.mxu0
  %v4543 = vadd.f32 %v4494, %v4542
  %v4544 = vpop.f32.mrf.mxu0
  %v4545 = vadd.f32 %v4496, %v4544
  %4546 = vmatmul.bf16.gmra.mxu0 %v1701
  %v4547 = vpop.f32.mrf.mxu0
  %v4548 = vadd.f32 %v4499, %v4547
  %v4549 = vpop.f32.mrf.mxu0
  %v4550 = vadd.f32 %v4501, %v4549
  %4551 = vmatmul.bf16.gmra.mxu0 %v1733
  %v4552 = vpop.f32.mrf.mxu0
  %v4553 = vadd.f32 %v4504, %v4552
  %v4554 = vpop.f32.mrf.mxu0
  %v4555 = vadd.f32 %v4506, %v4554
  %4556 = vmatmul.bf16.gmra.mxu0 %v1765
  %v4557 = vpop.f32.mrf.mxu0
  %v4558 = vadd.f32 %v4509, %v4557
  %v4559 = vpop.f32.mrf.mxu0
  %v4560 = vadd.f32 %v4511, %v4559
  %4561 = vmatmul.bf16.gmra.mxu0 %v1797
  %v4562 = vpop.f32.mrf.mxu0
  %v4563 = vadd.f32 %v4514, %v4562
  %v4564 = vpop.f32.mrf.mxu0
  %v4565 = vadd.f32 %v4516, %v4564
  %4566 = vmatmul.bf16.gmra.mxu0 %v1829
  %v4567 = vpop.f32.mrf.mxu0
  %v4568 = vadd.f32 %v4519, %v4567
  %v4569 = vpop.f32.mrf.mxu0
  %v4570 = vadd.f32 %v4521, %v4569
  %4571 = vmatmul.bf16.gmra.mxu0 %v1861
  %v4572 = vpop.f32.mrf.mxu0
  %v4573 = vadd.f32 %v4524, %v4572
  %v4574 = vpop.f32.mrf.mxu0
  %v4575 = vadd.f32 %v4526, %v4574
  %4576 = vmatmul.bf16.gmra.mxu0 %v1893
  %v4577 = vpop.f32.mrf.mxu0
  %v4578 = vadd.f32 %v4529, %v4577
  %v4579 = vpop.f32.mrf.mxu0
  %v4580 = vadd.f32 %v4531, %v4579
  %4581 = vdwg.mxu0
  %4582 = vmatpush.bf16.msra.mxu0 %v3339
  %4583 = vmatpush.bf16.msra.mxu0 %v3338
  %4584 = vmatpush.bf16.msra.mxu0 %v3337
  %4585 = vmatpush.bf16.msra.mxu0 %v3336
  %4586 = vmatpush.bf16.msra.mxu0 %v3335
  %4587 = vmatpush.bf16.msra.mxu0 %v3334
  %4588 = vmatpush.bf16.msra.mxu0 %v3333
  %4589 = vmatpush.bf16.msra.mxu0 %v3332
  %4590 = vmatmul.bf16.gmra.mxu0 %v1670
  %v4591 = vpop.f32.mrf.mxu0
  %v4592 = vadd.f32 %v4543, %v4591
  %v4593 = vpop.f32.mrf.mxu0
  %v4594 = vadd.f32 %v4545, %v4593
  %4595 = vmatmul.bf16.gmra.mxu0 %v1702
  %v4596 = vpop.f32.mrf.mxu0
  %v4597 = vadd.f32 %v4548, %v4596
  %v4598 = vpop.f32.mrf.mxu0
  %v4599 = vadd.f32 %v4550, %v4598
  %4600 = vmatmul.bf16.gmra.mxu0 %v1734
  %v4601 = vpop.f32.mrf.mxu0
  %v4602 = vadd.f32 %v4553, %v4601
  %v4603 = vpop.f32.mrf.mxu0
  %v4604 = vadd.f32 %v4555, %v4603
  %4605 = vmatmul.bf16.gmra.mxu0 %v1766
  %v4606 = vpop.f32.mrf.mxu0
  %v4607 = vadd.f32 %v4558, %v4606
  %v4608 = vpop.f32.mrf.mxu0
  %v4609 = vadd.f32 %v4560, %v4608
  %4610 = vmatmul.bf16.gmra.mxu0 %v1798
  %v4611 = vpop.f32.mrf.mxu0
  %v4612 = vadd.f32 %v4563, %v4611
  %v4613 = vpop.f32.mrf.mxu0
  %v4614 = vadd.f32 %v4565, %v4613
  %4615 = vmatmul.bf16.gmra.mxu0 %v1830
  %v4616 = vpop.f32.mrf.mxu0
  %v4617 = vadd.f32 %v4568, %v4616
  %v4618 = vpop.f32.mrf.mxu0
  %v4619 = vadd.f32 %v4570, %v4618
  %4620 = vmatmul.bf16.gmra.mxu0 %v1862
  %v4621 = vpop.f32.mrf.mxu0
  %v4622 = vadd.f32 %v4573, %v4621
  %v4623 = vpop.f32.mrf.mxu0
  %v4624 = vadd.f32 %v4575, %v4623
  %4625 = vmatmul.bf16.gmra.mxu0 %v1894
  %v4626 = vpop.f32.mrf.mxu0
  %v4627 = vadd.f32 %v4578, %v4626
  %v4628 = vpop.f32.mrf.mxu0
  %v4629 = vadd.f32 %v4580, %v4628
  %4630 = vdwg.mxu0
  %4631 = vmatpush.bf16.msra.mxu0 %v3347
  %4632 = vmatpush.bf16.msra.mxu0 %v3346
  %4633 = vmatpush.bf16.msra.mxu0 %v3345
  %4634 = vmatpush.bf16.msra.mxu0 %v3344
  %4635 = vmatpush.bf16.msra.mxu0 %v3343
  %4636 = vmatpush.bf16.msra.mxu0 %v3342
  %4637 = vmatpush.bf16.msra.mxu0 %v3341
  %4638 = vmatpush.bf16.msra.mxu0 %v3340
  %4639 = vmatmul.bf16.gmra.mxu0 %v1671
  %v4640 = vpop.f32.mrf.mxu0
  %v4641 = vadd.f32 %v4592, %v4640
  %v4642 = vpop.f32.mrf.mxu0
  %v4643 = vadd.f32 %v4594, %v4642
  %4644 = vmatmul.bf16.gmra.mxu0 %v1703
  %v4645 = vpop.f32.mrf.mxu0
  %v4646 = vadd.f32 %v4597, %v4645
  %v4647 = vpop.f32.mrf.mxu0
  %v4648 = vadd.f32 %v4599, %v4647
  %4649 = vmatmul.bf16.gmra.mxu0 %v1735
  %v4650 = vpop.f32.mrf.mxu0
  %v4651 = vadd.f32 %v4602, %v4650
  %v4652 = vpop.f32.mrf.mxu0
  %v4653 = vadd.f32 %v4604, %v4652
  %4654 = vmatmul.bf16.gmra.mxu0 %v1767
  %v4655 = vpop.f32.mrf.mxu0
  %v4656 = vadd.f32 %v4607, %v4655
  %v4657 = vpop.f32.mrf.mxu0
  %v4658 = vadd.f32 %v4609, %v4657
  %4659 = vmatmul.bf16.gmra.mxu0 %v1799
  %v4660 = vpop.f32.mrf.mxu0
  %v4661 = vadd.f32 %v4612, %v4660
  %v4662 = vpop.f32.mrf.mxu0
  %v4663 = vadd.f32 %v4614, %v4662
  %4664 = vmatmul.bf16.gmra.mxu0 %v1831
  %v4665 = vpop.f32.mrf.mxu0
  %v4666 = vadd.f32 %v4617, %v4665
  %v4667 = vpop.f32.mrf.mxu0
  %v4668 = vadd.f32 %v4619, %v4667
  %4669 = vmatmul.bf16.gmra.mxu0 %v1863
  %v4670 = vpop.f32.mrf.mxu0
  %v4671 = vadd.f32 %v4622, %v4670
  %v4672 = vpop.f32.mrf.mxu0
  %v4673 = vadd.f32 %v4624, %v4672
  %4674 = vmatmul.bf16.gmra.mxu0 %v1895
  %v4675 = vpop.f32.mrf.mxu0
  %v4676 = vadd.f32 %v4627, %v4675
  %v4677 = vpop.f32.mrf.mxu0
  %v4678 = vadd.f32 %v4629, %v4677
  %4679 = vdwg.mxu0
  %4680 = vmatpush.bf16.msra.mxu0 %v3355
  %4681 = vmatpush.bf16.msra.mxu0 %v3354
  %4682 = vmatpush.bf16.msra.mxu0 %v3353
  %4683 = vmatpush.bf16.msra.mxu0 %v3352
  %4684 = vmatpush.bf16.msra.mxu0 %v3351
  %4685 = vmatpush.bf16.msra.mxu0 %v3350
  %4686 = vmatpush.bf16.msra.mxu0 %v3349
  %4687 = vmatpush.bf16.msra.mxu0 %v3348
  %4688 = vmatmul.bf16.gmra.mxu0 %v1672
  %v4689 = vpop.f32.mrf.mxu0
  %v4690 = vadd.f32 %v4641, %v4689
  %v4691 = vpop.f32.mrf.mxu0
  %v4692 = vadd.f32 %v4643, %v4691
  %4693 = vmatmul.bf16.gmra.mxu0 %v1704
  %v4694 = vpop.f32.mrf.mxu0
  %v4695 = vadd.f32 %v4646, %v4694
  %v4696 = vpop.f32.mrf.mxu0
  %v4697 = vadd.f32 %v4648, %v4696
  %4698 = vmatmul.bf16.gmra.mxu0 %v1736
  %v4699 = vpop.f32.mrf.mxu0
  %v4700 = vadd.f32 %v4651, %v4699
  %v4701 = vpop.f32.mrf.mxu0
  %v4702 = vadd.f32 %v4653, %v4701
  %4703 = vmatmul.bf16.gmra.mxu0 %v1768
  %v4704 = vpop.f32.mrf.mxu0
  %v4705 = vadd.f32 %v4656, %v4704
  %v4706 = vpop.f32.mrf.mxu0
  %v4707 = vadd.f32 %v4658, %v4706
  %4708 = vmatmul.bf16.gmra.mxu0 %v1800
  %v4709 = vpop.f32.mrf.mxu0
  %v4710 = vadd.f32 %v4661, %v4709
  %v4711 = vpop.f32.mrf.mxu0
  %v4712 = vadd.f32 %v4663, %v4711
  %4713 = vmatmul.bf16.gmra.mxu0 %v1832
  %v4714 = vpop.f32.mrf.mxu0
  %v4715 = vadd.f32 %v4666, %v4714
  %v4716 = vpop.f32.mrf.mxu0
  %v4717 = vadd.f32 %v4668, %v4716
  %4718 = vmatmul.bf16.gmra.mxu0 %v1864
  %v4719 = vpop.f32.mrf.mxu0
  %v4720 = vadd.f32 %v4671, %v4719
  %v4721 = vpop.f32.mrf.mxu0
  %v4722 = vadd.f32 %v4673, %v4721
  %4723 = vmatmul.bf16.gmra.mxu0 %v1896
  %v4724 = vpop.f32.mrf.mxu0
  %v4725 = vadd.f32 %v4676, %v4724
  %v4726 = vpop.f32.mrf.mxu0
  %v4727 = vadd.f32 %v4678, %v4726
  %4728 = vdwg.mxu0
  %4729 = vmatpush.bf16.msra.mxu0 %v3363
  %4730 = vmatpush.bf16.msra.mxu0 %v3362
  %4731 = vmatpush.bf16.msra.mxu0 %v3361
  %4732 = vmatpush.bf16.msra.mxu0 %v3360
  %4733 = vmatpush.bf16.msra.mxu0 %v3359
  %4734 = vmatpush.bf16.msra.mxu0 %v3358
  %4735 = vmatpush.bf16.msra.mxu0 %v3357
  %4736 = vmatpush.bf16.msra.mxu0 %v3356
  %4737 = vmatmul.bf16.gmra.mxu0 %v1673
  %v4738 = vpop.f32.mrf.mxu0
  %v4739 = vadd.f32 %v4690, %v4738
  %v4740 = vpop.f32.mrf.mxu0
  %v4741 = vadd.f32 %v4692, %v4740
  %4742 = vmatmul.bf16.gmra.mxu0 %v1705
  %v4743 = vpop.f32.mrf.mxu0
  %v4744 = vadd.f32 %v4695, %v4743
  %v4745 = vpop.f32.mrf.mxu0
  %v4746 = vadd.f32 %v4697, %v4745
  %4747 = vmatmul.bf16.gmra.mxu0 %v1737
  %v4748 = vpop.f32.mrf.mxu0
  %v4749 = vadd.f32 %v4700, %v4748
  %v4750 = vpop.f32.mrf.mxu0
  %v4751 = vadd.f32 %v4702, %v4750
  %4752 = vmatmul.bf16.gmra.mxu0 %v1769
  %v4753 = vpop.f32.mrf.mxu0
  %v4754 = vadd.f32 %v4705, %v4753
  %v4755 = vpop.f32.mrf.mxu0
  %v4756 = vadd.f32 %v4707, %v4755
  %4757 = vmatmul.bf16.gmra.mxu0 %v1801
  %v4758 = vpop.f32.mrf.mxu0
  %v4759 = vadd.f32 %v4710, %v4758
  %v4760 = vpop.f32.mrf.mxu0
  %v4761 = vadd.f32 %v4712, %v4760
  %4762 = vmatmul.bf16.gmra.mxu0 %v1833
  %v4763 = vpop.f32.mrf.mxu0
  %v4764 = vadd.f32 %v4715, %v4763
  %v4765 = vpop.f32.mrf.mxu0
  %v4766 = vadd.f32 %v4717, %v4765
  %4767 = vmatmul.bf16.gmra.mxu0 %v1865
  %v4768 = vpop.f32.mrf.mxu0
  %v4769 = vadd.f32 %v4720, %v4768
  %v4770 = vpop.f32.mrf.mxu0
  %v4771 = vadd.f32 %v4722, %v4770
  %4772 = vmatmul.bf16.gmra.mxu0 %v1897
  %v4773 = vpop.f32.mrf.mxu0
  %v4774 = vadd.f32 %v4725, %v4773
  %v4775 = vpop.f32.mrf.mxu0
  %v4776 = vadd.f32 %v4727, %v4775
  %4777 = vdwg.mxu0
  %4778 = vmatpush.bf16.msra.mxu0 %v3371
  %4779 = vmatpush.bf16.msra.mxu0 %v3370
  %4780 = vmatpush.bf16.msra.mxu0 %v3369
  %4781 = vmatpush.bf16.msra.mxu0 %v3368
  %4782 = vmatpush.bf16.msra.mxu0 %v3367
  %4783 = vmatpush.bf16.msra.mxu0 %v3366
  %4784 = vmatpush.bf16.msra.mxu0 %v3365
  %4785 = vmatpush.bf16.msra.mxu0 %v3364
  %4786 = vmatmul.bf16.gmra.mxu0 %v1674
  %v4787 = vpop.f32.mrf.mxu0
  %v4788 = vadd.f32 %v4739, %v4787
  %v4789 = vpop.f32.mrf.mxu0
  %v4790 = vadd.f32 %v4741, %v4789
  %4791 = vmatmul.bf16.gmra.mxu0 %v1706
  %v4792 = vpop.f32.mrf.mxu0
  %v4793 = vadd.f32 %v4744, %v4792
  %v4794 = vpop.f32.mrf.mxu0
  %v4795 = vadd.f32 %v4746, %v4794
  %4796 = vmatmul.bf16.gmra.mxu0 %v1738
  %v4797 = vpop.f32.mrf.mxu0
  %v4798 = vadd.f32 %v4749, %v4797
  %v4799 = vpop.f32.mrf.mxu0
  %v4800 = vadd.f32 %v4751, %v4799
  %4801 = vmatmul.bf16.gmra.mxu0 %v1770
  %v4802 = vpop.f32.mrf.mxu0
  %v4803 = vadd.f32 %v4754, %v4802
  %v4804 = vpop.f32.mrf.mxu0
  %v4805 = vadd.f32 %v4756, %v4804
  %4806 = vmatmul.bf16.gmra.mxu0 %v1802
  %v4807 = vpop.f32.mrf.mxu0
  %v4808 = vadd.f32 %v4759, %v4807
  %v4809 = vpop.f32.mrf.mxu0
  %v4810 = vadd.f32 %v4761, %v4809
  %4811 = vmatmul.bf16.gmra.mxu0 %v1834
  %v4812 = vpop.f32.mrf.mxu0
  %v4813 = vadd.f32 %v4764, %v4812
  %v4814 = vpop.f32.mrf.mxu0
  %v4815 = vadd.f32 %v4766, %v4814
  %4816 = vmatmul.bf16.gmra.mxu0 %v1866
  %v4817 = vpop.f32.mrf.mxu0
  %v4818 = vadd.f32 %v4769, %v4817
  %v4819 = vpop.f32.mrf.mxu0
  %v4820 = vadd.f32 %v4771, %v4819
  %4821 = vmatmul.bf16.gmra.mxu0 %v1898
  %v4822 = vpop.f32.mrf.mxu0
  %v4823 = vadd.f32 %v4774, %v4822
  %v4824 = vpop.f32.mrf.mxu0
  %v4825 = vadd.f32 %v4776, %v4824
  %4826 = vdwg.mxu0
  %4827 = vmatpush.bf16.msra.mxu0 %v3379
  %4828 = vmatpush.bf16.msra.mxu0 %v3378
  %4829 = vmatpush.bf16.msra.mxu0 %v3377
  %4830 = vmatpush.bf16.msra.mxu0 %v3376
  %4831 = vmatpush.bf16.msra.mxu0 %v3375
  %4832 = vmatpush.bf16.msra.mxu0 %v3374
  %4833 = vmatpush.bf16.msra.mxu0 %v3373
  %4834 = vmatpush.bf16.msra.mxu0 %v3372
  %4835 = vmatmul.bf16.gmra.mxu0 %v1675
  %v4836 = vpop.f32.mrf.mxu0
  %v4837 = vadd.f32 %v4788, %v4836
  %v4838 = vpop.f32.mrf.mxu0
  %v4839 = vadd.f32 %v4790, %v4838
  %4840 = vmatmul.bf16.gmra.mxu0 %v1707
  %v4841 = vpop.f32.mrf.mxu0
  %v4842 = vadd.f32 %v4793, %v4841
  %v4843 = vpop.f32.mrf.mxu0
  %v4844 = vadd.f32 %v4795, %v4843
  %4845 = vmatmul.bf16.gmra.mxu0 %v1739
  %v4846 = vpop.f32.mrf.mxu0
  %v4847 = vadd.f32 %v4798, %v4846
  %v4848 = vpop.f32.mrf.mxu0
  %v4849 = vadd.f32 %v4800, %v4848
  %4850 = vmatmul.bf16.gmra.mxu0 %v1771
  %v4851 = vpop.f32.mrf.mxu0
  %v4852 = vadd.f32 %v4803, %v4851
  %v4853 = vpop.f32.mrf.mxu0
  %v4854 = vadd.f32 %v4805, %v4853
  %4855 = vmatmul.bf16.gmra.mxu0 %v1803
  %v4856 = vpop.f32.mrf.mxu0
  %v4857 = vadd.f32 %v4808, %v4856
  %v4858 = vpop.f32.mrf.mxu0
  %v4859 = vadd.f32 %v4810, %v4858
  %4860 = vmatmul.bf16.gmra.mxu0 %v1835
  %v4861 = vpop.f32.mrf.mxu0
  %v4862 = vadd.f32 %v4813, %v4861
  %v4863 = vpop.f32.mrf.mxu0
  %v4864 = vadd.f32 %v4815, %v4863
  %4865 = vmatmul.bf16.gmra.mxu0 %v1867
  %v4866 = vpop.f32.mrf.mxu0
  %v4867 = vadd.f32 %v4818, %v4866
  %v4868 = vpop.f32.mrf.mxu0
  %v4869 = vadd.f32 %v4820, %v4868
  %4870 = vmatmul.bf16.gmra.mxu0 %v1899
  %v4871 = vpop.f32.mrf.mxu0
  %v4872 = vadd.f32 %v4823, %v4871
  %v4873 = vpop.f32.mrf.mxu0
  %v4874 = vadd.f32 %v4825, %v4873
  %4875 = vdwg.mxu0
  %4876 = vmatpush.bf16.msra.mxu0 %v3387
  %4877 = vmatpush.bf16.msra.mxu0 %v3386
  %4878 = vmatpush.bf16.msra.mxu0 %v3385
  %4879 = vmatpush.bf16.msra.mxu0 %v3384
  %4880 = vmatpush.bf16.msra.mxu0 %v3383
  %4881 = vmatpush.bf16.msra.mxu0 %v3382
  %4882 = vmatpush.bf16.msra.mxu0 %v3381
  %4883 = vmatpush.bf16.msra.mxu0 %v3380
  %4884 = vmatmul.bf16.gmra.mxu0 %v1676
  %v4885 = vpop.f32.mrf.mxu0
  %v4886 = vadd.f32 %v4837, %v4885
  %v4887 = vpop.f32.mrf.mxu0
  %v4888 = vadd.f32 %v4839, %v4887
  %4889 = vmatmul.bf16.gmra.mxu0 %v1708
  %v4890 = vpop.f32.mrf.mxu0
  %v4891 = vadd.f32 %v4842, %v4890
  %v4892 = vpop.f32.mrf.mxu0
  %v4893 = vadd.f32 %v4844, %v4892
  %4894 = vmatmul.bf16.gmra.mxu0 %v1740
  %v4895 = vpop.f32.mrf.mxu0
  %v4896 = vadd.f32 %v4847, %v4895
  %v4897 = vpop.f32.mrf.mxu0
  %v4898 = vadd.f32 %v4849, %v4897
  %4899 = vmatmul.bf16.gmra.mxu0 %v1772
  %v4900 = vpop.f32.mrf.mxu0
  %v4901 = vadd.f32 %v4852, %v4900
  %v4902 = vpop.f32.mrf.mxu0
  %v4903 = vadd.f32 %v4854, %v4902
  %4904 = vmatmul.bf16.gmra.mxu0 %v1804
  %v4905 = vpop.f32.mrf.mxu0
  %v4906 = vadd.f32 %v4857, %v4905
  %v4907 = vpop.f32.mrf.mxu0
  %v4908 = vadd.f32 %v4859, %v4907
  %4909 = vmatmul.bf16.gmra.mxu0 %v1836
  %v4910 = vpop.f32.mrf.mxu0
  %v4911 = vadd.f32 %v4862, %v4910
  %v4912 = vpop.f32.mrf.mxu0
  %v4913 = vadd.f32 %v4864, %v4912
  %4914 = vmatmul.bf16.gmra.mxu0 %v1868
  %v4915 = vpop.f32.mrf.mxu0
  %v4916 = vadd.f32 %v4867, %v4915
  %v4917 = vpop.f32.mrf.mxu0
  %v4918 = vadd.f32 %v4869, %v4917
  %4919 = vmatmul.bf16.gmra.mxu0 %v1900
  %v4920 = vpop.f32.mrf.mxu0
  %v4921 = vadd.f32 %v4872, %v4920
  %v4922 = vpop.f32.mrf.mxu0
  %v4923 = vadd.f32 %v4874, %v4922
  %4924 = vdwg.mxu0
  %4925 = vmatpush.bf16.msra.mxu0 %v3395
  %4926 = vmatpush.bf16.msra.mxu0 %v3394
  %4927 = vmatpush.bf16.msra.mxu0 %v3393
  %4928 = vmatpush.bf16.msra.mxu0 %v3392
  %4929 = vmatpush.bf16.msra.mxu0 %v3391
  %4930 = vmatpush.bf16.msra.mxu0 %v3390
  %4931 = vmatpush.bf16.msra.mxu0 %v3389
  %4932 = vmatpush.bf16.msra.mxu0 %v3388
  %4933 = vmatmul.bf16.gmra.mxu0 %v1677
  %v4934 = vpop.f32.mrf.mxu0
  %v4935 = vadd.f32 %v4886, %v4934
  %v4936 = vpop.f32.mrf.mxu0
  %v4937 = vadd.f32 %v4888, %v4936
  %4938 = vmatmul.bf16.gmra.mxu0 %v1709
  %v4939 = vpop.f32.mrf.mxu0
  %v4940 = vadd.f32 %v4891, %v4939
  %v4941 = vpop.f32.mrf.mxu0
  %v4942 = vadd.f32 %v4893, %v4941
  %4943 = vmatmul.bf16.gmra.mxu0 %v1741
  %v4944 = vpop.f32.mrf.mxu0
  %v4945 = vadd.f32 %v4896, %v4944
  %v4946 = vpop.f32.mrf.mxu0
  %v4947 = vadd.f32 %v4898, %v4946
  %4948 = vmatmul.bf16.gmra.mxu0 %v1773
  %v4949 = vpop.f32.mrf.mxu0
  %v4950 = vadd.f32 %v4901, %v4949
  %v4951 = vpop.f32.mrf.mxu0
  %v4952 = vadd.f32 %v4903, %v4951
  %4953 = vmatmul.bf16.gmra.mxu0 %v1805
  %v4954 = vpop.f32.mrf.mxu0
  %v4955 = vadd.f32 %v4906, %v4954
  %v4956 = vpop.f32.mrf.mxu0
  %v4957 = vadd.f32 %v4908, %v4956
  %4958 = vmatmul.bf16.gmra.mxu0 %v1837
  %v4959 = vpop.f32.mrf.mxu0
  %v4960 = vadd.f32 %v4911, %v4959
  %v4961 = vpop.f32.mrf.mxu0
  %v4962 = vadd.f32 %v4913, %v4961
  %4963 = vmatmul.bf16.gmra.mxu0 %v1869
  %v4964 = vpop.f32.mrf.mxu0
  %v4965 = vadd.f32 %v4916, %v4964
  %v4966 = vpop.f32.mrf.mxu0
  %v4967 = vadd.f32 %v4918, %v4966
  %4968 = vmatmul.bf16.gmra.mxu0 %v1901
  %v4969 = vpop.f32.mrf.mxu0
  %v4970 = vadd.f32 %v4921, %v4969
  %v4971 = vpop.f32.mrf.mxu0
  %v4972 = vadd.f32 %v4923, %v4971
  %4973 = vdwg.mxu0
  %4974 = vmatpush.bf16.msra.mxu0 %v3403
  %4975 = vmatpush.bf16.msra.mxu0 %v3402
  %4976 = vmatpush.bf16.msra.mxu0 %v3401
  %4977 = vmatpush.bf16.msra.mxu0 %v3400
  %4978 = vmatpush.bf16.msra.mxu0 %v3399
  %4979 = vmatpush.bf16.msra.mxu0 %v3398
  %4980 = vmatpush.bf16.msra.mxu0 %v3397
  %4981 = vmatpush.bf16.msra.mxu0 %v3396
  %4982 = vmatmul.bf16.gmra.mxu0 %v1678
  %v4983 = vpop.f32.mrf.mxu0
  %v4984 = vadd.f32 %v4935, %v4983
  %v4985 = vpop.f32.mrf.mxu0
  %v4986 = vadd.f32 %v4937, %v4985
  %4987 = vmatmul.bf16.gmra.mxu0 %v1710
  %v4988 = vpop.f32.mrf.mxu0
  %v4989 = vadd.f32 %v4940, %v4988
  %v4990 = vpop.f32.mrf.mxu0
  %v4991 = vadd.f32 %v4942, %v4990
  %4992 = vmatmul.bf16.gmra.mxu0 %v1742
  %v4993 = vpop.f32.mrf.mxu0
  %v4994 = vadd.f32 %v4945, %v4993
  %v4995 = vpop.f32.mrf.mxu0
  %v4996 = vadd.f32 %v4947, %v4995
  %4997 = vmatmul.bf16.gmra.mxu0 %v1774
  %v4998 = vpop.f32.mrf.mxu0
  %v4999 = vadd.f32 %v4950, %v4998
  %v5000 = vpop.f32.mrf.mxu0
  %v5001 = vadd.f32 %v4952, %v5000
  %5002 = vmatmul.bf16.gmra.mxu0 %v1806
  %v5003 = vpop.f32.mrf.mxu0
  %v5004 = vadd.f32 %v4955, %v5003
  %v5005 = vpop.f32.mrf.mxu0
  %v5006 = vadd.f32 %v4957, %v5005
  %5007 = vmatmul.bf16.gmra.mxu0 %v1838
  %v5008 = vpop.f32.mrf.mxu0
  %v5009 = vadd.f32 %v4960, %v5008
  %v5010 = vpop.f32.mrf.mxu0
  %v5011 = vadd.f32 %v4962, %v5010
  %5012 = vmatmul.bf16.gmra.mxu0 %v1870
  %v5013 = vpop.f32.mrf.mxu0
  %v5014 = vadd.f32 %v4965, %v5013
  %v5015 = vpop.f32.mrf.mxu0
  %v5016 = vadd.f32 %v4967, %v5015
  %5017 = vmatmul.bf16.gmra.mxu0 %v1902
  %v5018 = vpop.f32.mrf.mxu0
  %v5019 = vadd.f32 %v4970, %v5018
  %v5020 = vpop.f32.mrf.mxu0
  %v5021 = vadd.f32 %v4972, %v5020
  %5022 = vdwg.mxu0
  %5023 = vmatpush.bf16.msra.mxu0 %v3411
  %5024 = vmatpush.bf16.msra.mxu0 %v3410
  %5025 = vmatpush.bf16.msra.mxu0 %v3409
  %5026 = vmatpush.bf16.msra.mxu0 %v3408
  %5027 = vmatpush.bf16.msra.mxu0 %v3407
  %5028 = vmatpush.bf16.msra.mxu0 %v3406
  %5029 = vmatpush.bf16.msra.mxu0 %v3405
  %5030 = vmatpush.bf16.msra.mxu0 %v3404
  %5031 = vmatmul.bf16.gmra.mxu0 %v1679
  %v5032 = vpop.f32.mrf.mxu0
  %v5033 = vadd.f32 %v4984, %v5032
  %v5034 = vpop.f32.mrf.mxu0
  %v5035 = vadd.f32 %v4986, %v5034
  %5036 = vmatmul.bf16.gmra.mxu0 %v1711
  %v5037 = vpop.f32.mrf.mxu0
  %v5038 = vadd.f32 %v4989, %v5037
  %v5039 = vpop.f32.mrf.mxu0
  %v5040 = vadd.f32 %v4991, %v5039
  %5041 = vmatmul.bf16.gmra.mxu0 %v1743
  %v5042 = vpop.f32.mrf.mxu0
  %v5043 = vadd.f32 %v4994, %v5042
  %v5044 = vpop.f32.mrf.mxu0
  %v5045 = vadd.f32 %v4996, %v5044
  %5046 = vmatmul.bf16.gmra.mxu0 %v1775
  %v5047 = vpop.f32.mrf.mxu0
  %v5048 = vadd.f32 %v4999, %v5047
  %v5049 = vpop.f32.mrf.mxu0
  %v5050 = vadd.f32 %v5001, %v5049
  %5051 = vmatmul.bf16.gmra.mxu0 %v1807
  %v5052 = vpop.f32.mrf.mxu0
  %v5053 = vadd.f32 %v5004, %v5052
  %v5054 = vpop.f32.mrf.mxu0
  %v5055 = vadd.f32 %v5006, %v5054
  %5056 = vmatmul.bf16.gmra.mxu0 %v1839
  %v5057 = vpop.f32.mrf.mxu0
  %v5058 = vadd.f32 %v5009, %v5057
  %v5059 = vpop.f32.mrf.mxu0
  %v5060 = vadd.f32 %v5011, %v5059
  %5061 = vmatmul.bf16.gmra.mxu0 %v1871
  %v5062 = vpop.f32.mrf.mxu0
  %v5063 = vadd.f32 %v5014, %v5062
  %v5064 = vpop.f32.mrf.mxu0
  %v5065 = vadd.f32 %v5016, %v5064
  %5066 = vmatmul.bf16.gmra.mxu0 %v1903
  %v5067 = vpop.f32.mrf.mxu0
  %v5068 = vadd.f32 %v5019, %v5067
  %v5069 = vpop.f32.mrf.mxu0
  %v5070 = vadd.f32 %v5021, %v5069
  %5071 = vdwg.mxu0
  %5072 = vmatpush.bf16.msra.mxu0 %v3419
  %5073 = vmatpush.bf16.msra.mxu0 %v3418
  %5074 = vmatpush.bf16.msra.mxu0 %v3417
  %5075 = vmatpush.bf16.msra.mxu0 %v3416
  %5076 = vmatpush.bf16.msra.mxu0 %v3415
  %5077 = vmatpush.bf16.msra.mxu0 %v3414
  %5078 = vmatpush.bf16.msra.mxu0 %v3413
  %5079 = vmatpush.bf16.msra.mxu0 %v3412
  %5080 = vmatmul.bf16.gmra.mxu0 %v1680
  %v5081 = vpop.f32.mrf.mxu0
  %v5082 = vadd.f32 %v5033, %v5081
  %v5083 = vpop.f32.mrf.mxu0
  %v5084 = vadd.f32 %v5035, %v5083
  %5085 = vmatmul.bf16.gmra.mxu0 %v1712
  %v5086 = vpop.f32.mrf.mxu0
  %v5087 = vadd.f32 %v5038, %v5086
  %v5088 = vpop.f32.mrf.mxu0
  %v5089 = vadd.f32 %v5040, %v5088
  %5090 = vmatmul.bf16.gmra.mxu0 %v1744
  %v5091 = vpop.f32.mrf.mxu0
  %v5092 = vadd.f32 %v5043, %v5091
  %v5093 = vpop.f32.mrf.mxu0
  %v5094 = vadd.f32 %v5045, %v5093
  %5095 = vmatmul.bf16.gmra.mxu0 %v1776
  %v5096 = vpop.f32.mrf.mxu0
  %v5097 = vadd.f32 %v5048, %v5096
  %v5098 = vpop.f32.mrf.mxu0
  %v5099 = vadd.f32 %v5050, %v5098
  %5100 = vmatmul.bf16.gmra.mxu0 %v1808
  %v5101 = vpop.f32.mrf.mxu0
  %v5102 = vadd.f32 %v5053, %v5101
  %v5103 = vpop.f32.mrf.mxu0
  %v5104 = vadd.f32 %v5055, %v5103
  %5105 = vmatmul.bf16.gmra.mxu0 %v1840
  %v5106 = vpop.f32.mrf.mxu0
  %v5107 = vadd.f32 %v5058, %v5106
  %v5108 = vpop.f32.mrf.mxu0
  %v5109 = vadd.f32 %v5060, %v5108
  %5110 = vmatmul.bf16.gmra.mxu0 %v1872
  %v5111 = vpop.f32.mrf.mxu0
  %v5112 = vadd.f32 %v5063, %v5111
  %v5113 = vpop.f32.mrf.mxu0
  %v5114 = vadd.f32 %v5065, %v5113
  %5115 = vmatmul.bf16.gmra.mxu0 %v1904
  %v5116 = vpop.f32.mrf.mxu0
  %v5117 = vadd.f32 %v5068, %v5116
  %v5118 = vpop.f32.mrf.mxu0
  %v5119 = vadd.f32 %v5070, %v5118
  %5120 = vdwg.mxu0
  %5121 = vmatpush.bf16.msra.mxu0 %v3427
  %5122 = vmatpush.bf16.msra.mxu0 %v3426
  %5123 = vmatpush.bf16.msra.mxu0 %v3425
  %5124 = vmatpush.bf16.msra.mxu0 %v3424
  %5125 = vmatpush.bf16.msra.mxu0 %v3423
  %5126 = vmatpush.bf16.msra.mxu0 %v3422
  %5127 = vmatpush.bf16.msra.mxu0 %v3421
  %5128 = vmatpush.bf16.msra.mxu0 %v3420
  %5129 = vmatmul.bf16.gmra.mxu0 %v1681
  %v5130 = vpop.f32.mrf.mxu0
  %v5131 = vadd.f32 %v5082, %v5130
  %v5132 = vpop.f32.mrf.mxu0
  %v5133 = vadd.f32 %v5084, %v5132
  %5134 = vmatmul.bf16.gmra.mxu0 %v1713
  %v5135 = vpop.f32.mrf.mxu0
  %v5136 = vadd.f32 %v5087, %v5135
  %v5137 = vpop.f32.mrf.mxu0
  %v5138 = vadd.f32 %v5089, %v5137
  %5139 = vmatmul.bf16.gmra.mxu0 %v1745
  %v5140 = vpop.f32.mrf.mxu0
  %v5141 = vadd.f32 %v5092, %v5140
  %v5142 = vpop.f32.mrf.mxu0
  %v5143 = vadd.f32 %v5094, %v5142
  %5144 = vmatmul.bf16.gmra.mxu0 %v1777
  %v5145 = vpop.f32.mrf.mxu0
  %v5146 = vadd.f32 %v5097, %v5145
  %v5147 = vpop.f32.mrf.mxu0
  %v5148 = vadd.f32 %v5099, %v5147
  %5149 = vmatmul.bf16.gmra.mxu0 %v1809
  %v5150 = vpop.f32.mrf.mxu0
  %v5151 = vadd.f32 %v5102, %v5150
  %v5152 = vpop.f32.mrf.mxu0
  %v5153 = vadd.f32 %v5104, %v5152
  %5154 = vmatmul.bf16.gmra.mxu0 %v1841
  %v5155 = vpop.f32.mrf.mxu0
  %v5156 = vadd.f32 %v5107, %v5155
  %v5157 = vpop.f32.mrf.mxu0
  %v5158 = vadd.f32 %v5109, %v5157
  %5159 = vmatmul.bf16.gmra.mxu0 %v1873
  %v5160 = vpop.f32.mrf.mxu0
  %v5161 = vadd.f32 %v5112, %v5160
  %v5162 = vpop.f32.mrf.mxu0
  %v5163 = vadd.f32 %v5114, %v5162
  %5164 = vmatmul.bf16.gmra.mxu0 %v1905
  %v5165 = vpop.f32.mrf.mxu0
  %v5166 = vadd.f32 %v5117, %v5165
  %v5167 = vpop.f32.mrf.mxu0
  %v5168 = vadd.f32 %v5119, %v5167
  %5169 = vdwg.mxu0
  %5170 = vmatpush.bf16.msra.mxu0 %v3435
  %5171 = vmatpush.bf16.msra.mxu0 %v3434
  %5172 = vmatpush.bf16.msra.mxu0 %v3433
  %5173 = vmatpush.bf16.msra.mxu0 %v3432
  %5174 = vmatpush.bf16.msra.mxu0 %v3431
  %5175 = vmatpush.bf16.msra.mxu0 %v3430
  %5176 = vmatpush.bf16.msra.mxu0 %v3429
  %5177 = vmatpush.bf16.msra.mxu0 %v3428
  %5178 = vmatmul.bf16.gmra.mxu0 %v1682
  %v5179 = vpop.f32.mrf.mxu0
  %v5180 = vadd.f32 %v5131, %v5179
  %v5181 = vpop.f32.mrf.mxu0
  %v5182 = vadd.f32 %v5133, %v5181
  %5183 = vmatmul.bf16.gmra.mxu0 %v1714
  %v5184 = vpop.f32.mrf.mxu0
  %v5185 = vadd.f32 %v5136, %v5184
  %v5186 = vpop.f32.mrf.mxu0
  %v5187 = vadd.f32 %v5138, %v5186
  %5188 = vmatmul.bf16.gmra.mxu0 %v1746
  %v5189 = vpop.f32.mrf.mxu0
  %v5190 = vadd.f32 %v5141, %v5189
  %v5191 = vpop.f32.mrf.mxu0
  %v5192 = vadd.f32 %v5143, %v5191
  %5193 = vmatmul.bf16.gmra.mxu0 %v1778
  %v5194 = vpop.f32.mrf.mxu0
  %v5195 = vadd.f32 %v5146, %v5194
  %v5196 = vpop.f32.mrf.mxu0
  %v5197 = vadd.f32 %v5148, %v5196
  %5198 = vmatmul.bf16.gmra.mxu0 %v1810
  %v5199 = vpop.f32.mrf.mxu0
  %v5200 = vadd.f32 %v5151, %v5199
  %v5201 = vpop.f32.mrf.mxu0
  %v5202 = vadd.f32 %v5153, %v5201
  %5203 = vmatmul.bf16.gmra.mxu0 %v1842
  %v5204 = vpop.f32.mrf.mxu0
  %v5205 = vadd.f32 %v5156, %v5204
  %v5206 = vpop.f32.mrf.mxu0
  %v5207 = vadd.f32 %v5158, %v5206
  %5208 = vmatmul.bf16.gmra.mxu0 %v1874
  %v5209 = vpop.f32.mrf.mxu0
  %v5210 = vadd.f32 %v5161, %v5209
  %v5211 = vpop.f32.mrf.mxu0
  %v5212 = vadd.f32 %v5163, %v5211
  %5213 = vmatmul.bf16.gmra.mxu0 %v1906
  %v5214 = vpop.f32.mrf.mxu0
  %v5215 = vadd.f32 %v5166, %v5214
  %v5216 = vpop.f32.mrf.mxu0
  %v5217 = vadd.f32 %v5168, %v5216
  %5218 = vdwg.mxu0
  %5219 = vmatpush.bf16.msra.mxu0 %v3443
  %5220 = vmatpush.bf16.msra.mxu0 %v3442
  %5221 = vmatpush.bf16.msra.mxu0 %v3441
  %5222 = vmatpush.bf16.msra.mxu0 %v3440
  %5223 = vmatpush.bf16.msra.mxu0 %v3439
  %5224 = vmatpush.bf16.msra.mxu0 %v3438
  %5225 = vmatpush.bf16.msra.mxu0 %v3437
  %5226 = vmatpush.bf16.msra.mxu0 %v3436
  %5227 = vmatmul.bf16.gmra.mxu0 %v1683
  %v5228 = vpop.f32.mrf.mxu0
  %v5229 = vadd.f32 %v5180, %v5228
  %v5230 = vpop.f32.mrf.mxu0
  %v5231 = vadd.f32 %v5182, %v5230
  %5232 = vmatmul.bf16.gmra.mxu0 %v1715
  %v5233 = vpop.f32.mrf.mxu0
  %v5234 = vadd.f32 %v5185, %v5233
  %v5235 = vpop.f32.mrf.mxu0
  %v5236 = vadd.f32 %v5187, %v5235
  %5237 = vmatmul.bf16.gmra.mxu0 %v1747
  %v5238 = vpop.f32.mrf.mxu0
  %v5239 = vadd.f32 %v5190, %v5238
  %v5240 = vpop.f32.mrf.mxu0
  %v5241 = vadd.f32 %v5192, %v5240
  %5242 = vmatmul.bf16.gmra.mxu0 %v1779
  %v5243 = vpop.f32.mrf.mxu0
  %v5244 = vadd.f32 %v5195, %v5243
  %v5245 = vpop.f32.mrf.mxu0
  %v5246 = vadd.f32 %v5197, %v5245
  %5247 = vmatmul.bf16.gmra.mxu0 %v1811
  %v5248 = vpop.f32.mrf.mxu0
  %v5249 = vadd.f32 %v5200, %v5248
  %v5250 = vpop.f32.mrf.mxu0
  %v5251 = vadd.f32 %v5202, %v5250
  %5252 = vmatmul.bf16.gmra.mxu0 %v1843
  %v5253 = vpop.f32.mrf.mxu0
  %v5254 = vadd.f32 %v5205, %v5253
  %v5255 = vpop.f32.mrf.mxu0
  %v5256 = vadd.f32 %v5207, %v5255
  %5257 = vmatmul.bf16.gmra.mxu0 %v1875
  %v5258 = vpop.f32.mrf.mxu0
  %v5259 = vadd.f32 %v5210, %v5258
  %v5260 = vpop.f32.mrf.mxu0
  %v5261 = vadd.f32 %v5212, %v5260
  %5262 = vmatmul.bf16.gmra.mxu0 %v1907
  %v5263 = vpop.f32.mrf.mxu0
  %v5264 = vadd.f32 %v5215, %v5263
  %v5265 = vpop.f32.mrf.mxu0
  %v5266 = vadd.f32 %v5217, %v5265
  %5267 = vdwg.mxu0
  %v5268 = vmax.f32 %v5229, 0.0
  %v5269 = vmax.f32 %v5231, 0.0
  %v5270 = vmax.f32 %v5234, 0.0
  %v5271 = vmax.f32 %v5236, 0.0
  %v5272 = vmax.f32 %v5239, 0.0
  %v5273 = vmax.f32 %v5241, 0.0
  %v5274 = vmax.f32 %v5244, 0.0
  %v5275 = vmax.f32 %v5246, 0.0
  %v5276 = vmax.f32 %v5249, 0.0
  %v5277 = vmax.f32 %v5251, 0.0
  %v5278 = vmax.f32 %v5254, 0.0
  %v5279 = vmax.f32 %v5256, 0.0
  %v5280 = vmax.f32 %v5259, 0.0
  %v5281 = vmax.f32 %v5261, 0.0
  %v5282 = vmax.f32 %v5264, 0.0
  %v5283 = vmax.f32 %v5266, 0.0
  %v5284 = vpack.c.bf16 %v5269, %v5268
  %v5285 = vpack.c.bf16 %v5271, %v5270
  %v5286 = vpack.c.bf16 %v5273, %v5272
  %v5287 = vpack.c.bf16 %v5275, %v5274
  %v5288 = vpack.c.bf16 %v5277, %v5276
  %v5289 = vpack.c.bf16 %v5279, %v5278
  %v5290 = vpack.c.bf16 %v5281, %v5280
  %v5291 = vpack.c.bf16 %v5283, %v5282
  %v5292 = vld [vmem:[%s3] sm:$0xf]
  %v5293 = vld [vmem:[%s3 + $0x4] sm:$0x1]
  %v5294 = vld [vmem:[%s4] sm:$0xff]
  %v5295 = vld [vmem:[%s4 + $0x8] sm:$0x3]
  %5297 = vset.pattern.permute.xlu0 0
  %5298 = vperm.xlu0 %5297, %v5294
  %v5299 = vpop.permute.xlu0 %5298
  %5302 = vset.pattern.permute.xlu0 0
  %5303 = vperm.xlu0 %5302, %v5295
  %v5304 = vpop.permute.xlu0 %5303
  %v5308 = vunpack.c.l.b16 %v5292
  %v5309 = vunpack.c.l.b16 %v5293
  %v5310 = vpack.c.b16 %v5309, %v5308
  %5312 = vmatpush.bf16.msra.mxu0 %v5291
  %5313 = vmatpush.bf16.msra.mxu0 %v5290
  %5314 = vmatpush.bf16.msra.mxu0 %v5289
  %5315 = vmatpush.bf16.msra.mxu0 %v5288
  %5316 = vmatpush.bf16.msra.mxu0 %v5287
  %5317 = vmatpush.bf16.msra.mxu0 %v5286
  %5318 = vmatpush.bf16.msra.mxu0 %v5285
  %5319 = vmatpush.bf16.msra.mxu0 %v5284
  %5320 = vmatmul.bf16.gmra.mxu0 %v5310
  %v5321 = vpop.f32.mrf.mxu0
  %v5322 = vadd.f32 %v5299, %v5321
  %v5323 = vpop.f32.mrf.mxu0
  %v5324 = vadd.f32 %v5304, %v5323
  %5325 = vdwg.mxu0
  %vm5326 = vcmask 15360
  %5327 = vst.msk [vmem:[%s5] sm:$0xff] %vm5326, %v5322
  %vm5328 = vcmask 9216
  %5329 = vst.msk [vmem:[%s5 + $0x8] sm:$0x3] %vm5328, %v5324
  // Predicated region
  $region22: #{simple_cnn_forward.5} parent=0 // pred_check
    _
  $region23: #{simple_cnn_forward.5} parent=0 // pred_check_branch
    %5331 = sbr.rel (0) target = $region25
  $region24: #{simple_cnn_forward.5} parent=0 // pred_region
    _
  $region25: #{simple_cnn_forward.5} parent=0 // pred_fallthru
    _
  // Predicated region
  $region26: #{simple_cnn_forward.5} parent=0 // pred_check
    _
  $region27: #{simple_cnn_forward.5} parent=0 // pred_check_branch
    %5333 = sbr.rel (0) target = $region29
  $region28: #{simple_cnn_forward.5} parent=0 // pred_region
    _
  $region29: #{simple_cnn_forward.5} parent=0 // pred_fallthru
    _

</llo_original>
